<compile_context>
chip_gen: v5e
topology: v5e:2x2
jax: 0.10.0
libtpu: 0.0.40
codegen_flags: <defaults>
</compile_context>

<pallas_src>
import functools

import jax
import jax.numpy as jnp
from jax import lax
from jax.experimental import pallas as pl
from jax.experimental.pallas import tpu as pltpu

_LANES = 128


def _round_up(x, m):
    return -(-x // m) * m


def _vmem_capacity_bytes():
    try:
        cap = int(pltpu.get_tpu_info().vmem_capacity_bytes)
        if cap > 0:
            return cap
    except Exception:
        pass
    return 64 * 1024 * 1024  # conservative default (v7x per-core VMEM)


# ---------------------------------------------------------------------------
# Fused kernel: 1x1 conv (bias folded in) + merge + SiLU -> VMEM window scratch
# -> 3x3 conv (padding=1) over one row band.
# ---------------------------------------------------------------------------
def _topdown_fused_kernel(*refs, use_act, use_merge, th, wpa, guard, sub):
    if use_merge:
        (x1m_ref, x1t_ref, x1b_ref, x2m_ref, x2t_ref, x2b_ref,
         w1_ref, w3_ref, b3_ref, o_ref, win_ref, acc_ref) = refs
    else:
        (x1m_ref, x1t_ref, x1b_ref,
         w1_ref, w3_ref, b3_ref, o_ref, win_ref, acc_ref) = refs
        x2t_ref = x2b_ref = None

    rows = th * wpa
    cout = o_ref.shape[-1]
    j = pl.program_id(1)
    nb = pl.num_programs(1)
    w1 = w1_ref[...]

    def premerge_rows(x1_flat, x2_flat):
        # x1_flat: (n, cin_p) compute dtype (last real channel is the constant 1
        # that carries the bias, zero in the padded border columns -> the 1x1
        # conv output is exactly zero there).  x2_flat: (n, cout_p) or None.
        y = jnp.dot(x1_flat, w1, preferred_element_type=jnp.float32)
        if x2_flat is not None:
            y = y + x2_flat.astype(jnp.float32)
        if use_act:
            y = y * jax.nn.sigmoid(y)
        return y  # (n, cout_p) f32

    # ---- main band: 1x1 conv + top-down merge (2x row upsample in-register,
    #      the width upsample was folded into the XLA layout pass) + SiLU.
    if use_merge:
        y = jnp.dot(x1m_ref[0], w1, preferred_element_type=jnp.float32)
        x2m = x2m_ref[0].astype(jnp.float32)                 # ((th//2)*wpa, cout)
        y = (y.reshape(th // 2, 2, wpa, cout)
             + x2m.reshape(th // 2, 1, wpa, cout)).reshape(rows, cout)
        if use_act:
            y = y * jax.nn.sigmoid(y)
    else:
        y = premerge_rows(x1m_ref[0], None)
    win_ref[guard + wpa:guard + (th + 1) * wpa, :] = y.astype(win_ref.dtype)

    # ---- halo rows (cheap recompute of the 1x1 conv; zeroed at the image
    #      top/bottom so the 3x3 conv's implicit zero row padding is exact).
    y_top = premerge_rows(x1t_ref[0], x2t_ref[0] if use_merge else None)
    y_top = y_top * (j > 0).astype(jnp.float32)
    win_ref[guard:guard + wpa, :] = y_top.astype(win_ref.dtype)

    y_bot = premerge_rows(x1b_ref[0], x2b_ref[0] if use_merge else None)
    y_bot = y_bot * (j < nb - 1).astype(jnp.float32)
    win_ref[guard + (th + 1) * wpa:guard + (th + 2) * wpa, :] = \
        y_bot.astype(win_ref.dtype)

    # ---- 3x3 conv from the window scratch.  For each ky: one aligned load of
    #      th*wpa + 2*sub window rows; the +-1 column shifts are value slices of
    #      that load (the guard rows they touch only feed discarded padding
    #      columns).  The 3 kx contributions are summed in registers, so the
    #      f32 accumulator sees 3 passes instead of 9; bias + output store are
    #      fused into the last pass.
    for ky in range(3):
        start = guard + ky * wpa - sub  # multiple of `sub` -> aligned load
        blk = win_ref[start:start + rows + 2 * sub, :]
        c = jnp.dot(blk[sub - 1:sub - 1 + rows], w3_ref[ky, 0],
                    preferred_element_type=jnp.float32)
        c = c + jnp.dot(blk[sub:sub + rows], w3_ref[ky, 1],
                        preferred_element_type=jnp.float32)
        c = c + jnp.dot(blk[sub + 1:sub + 1 + rows], w3_ref[ky, 2],
                        preferred_element_type=jnp.float32)
        if ky == 0:
            acc_ref[...] = c
        elif ky == 1:
            acc_ref[...] += c
        else:
            out = acc_ref[...] + c + b3_ref[...].astype(jnp.float32)
            o_ref[0] = out.astype(o_ref.dtype)


# ---------------------------------------------------------------------------
# Wrapper (accepts/returns NCHW for PyTorch-module parity; internally NHWC,
# channel-padded, width-padded+aligned and flattened to (B, H*Wp, C)).
# ---------------------------------------------------------------------------
@functools.partial(jax.jit, static_argnames=("use_act", "use_merge", "compute_dtype"))
def top_down_block(x1, x2, params, *, use_act=True, use_merge=True,
                   compute_dtype=jnp.bfloat16):
    """x1: (B, Cin, H, W) bottom-up; x2: (B, Cout, H//2, W//2) top-down or None."""
    w1, b1 = params["w1"], params["b1"]            # (Cin, Cout), (Cout,)
    w3, b3 = params["w3"], params["b3"]            # (3, 3, Cout, Cout), (Cout,)
    B, Cin, H, W = x1.shape
    Cout = w1.shape[1]
    out_dtype = x1.dtype

    cdt = jnp.dtype(compute_dtype)
    sub = {4: 8, 2: 16, 1: 32}.get(cdt.itemsize, 8)  # sublane tile of compute dtype
    guard = sub
    cin_p = _round_up(Cin + 1, _LANES)             # +1: bias carried by a ones channel
    cout_p = _round_up(Cout, _LANES)
    wpa = _round_up(W + 2, sub)                    # zero-padded, sublane-aligned width

    in_b = cdt.itemsize
    inter_b = cdt.itemsize
    out_b = jnp.dtype(out_dtype).itemsize

    def band_bytes(t):
        r = t * wpa
        total = 2 * r * cin_p * in_b                      # x1 band (double-buffered)
        total += 2 * 2 * wpa * cin_p * in_b               # x1 halo rows
        if use_merge:
            total += 2 * (r // 2) * cout_p * in_b         # x2 band
            total += 2 * 2 * wpa * cout_p * in_b          # x2 halo rows
        total += 2 * r * cout_p * out_b                   # output (double-buffered)
        total += ((t + 2) * wpa + 2 * guard) * cout_p * inter_b   # window scratch
        total += r * cout_p * 4                           # f32 accumulator
        total += 2 * (cin_p + 9 * cout_p + 1) * cout_p * in_b     # weights / bias
        total += 3 * r * cout_p * inter_b                 # relayout / tap temporaries
        return total

    cap = _vmem_capacity_bytes()
    budget = int(0.45 * cap)

    step = 2 if use_merge else 1
    cands = [t for t in range(step, H + 1, step) if H % t == 0] or [H]
    fits = [t for t in cands if band_bytes(t) <= budget]
    if not fits:
        th = min(cands)
    else:
        pipel = [t for t in fits if H // t >= 2]          # keep >=2 bands for pipelining
        th = max(pipel) if pipel else max(fits)
    nb = H // th
    need = band_bytes(th)
    vmem_limit = int(min(max(2 * need, 32 * 1024 * 1024), 0.72 * cap))

    # ---- layout glue (done once in XLA, already in the compute dtype) --------
    x1n = jnp.transpose(x1, (0, 2, 3, 1)).astype(compute_dtype)        # (B,H,W,Cin)
    ones = jnp.ones((B, H, W, 1), compute_dtype)                       # bias channel
    x1n = jnp.concatenate([x1n, ones], axis=-1)
    x1n = jnp.pad(x1n, ((0, 0), (0, 0), (1, wpa - W - 1), (0, cin_p - Cin - 1)))
    x1f = x1n.reshape(B, H * wpa, cin_p)

    w1a = jnp.concatenate([w1, b1[None, :]], axis=0)                   # (Cin+1, Cout)
    w1p = jnp.pad(w1a, ((0, cin_p - Cin - 1), (0, cout_p - Cout))).astype(compute_dtype)
    w3p = jnp.pad(w3, ((0, 0), (0, 0), (0, cout_p - Cout),
                       (0, cout_p - Cout))).astype(compute_dtype)
    b3p = jnp.pad(b3, (0, cout_p - Cout)).reshape(1, cout_p).astype(jnp.float32)

    args = [x1f, x1f, x1f]
    in_specs = [
        pl.BlockSpec((1, th * wpa, cin_p), lambda b, j: (b, j, 0)),
        pl.BlockSpec((1, wpa, cin_p),
                     lambda b, j: (b, jnp.maximum(j * th - 1, 0), 0)),
        pl.BlockSpec((1, wpa, cin_p),
                     lambda b, j: (b, jnp.minimum((j + 1) * th, H - 1), 0)),
    ]
    if use_merge:
        assert x2 is not None and H % 2 == 0 and W % 2 == 0
        th2 = th // 2
        # TODO(synk): the width 2x nearest upsample stays as an XLA prepass (it is
        # fused with the transpose/pad/cast); the row 2x upsample is in-kernel.
        x2n = jnp.transpose(x2, (0, 2, 3, 1)).astype(compute_dtype)    # (B,H/2,W/2,Cout)
        x2n = jnp.repeat(x2n, 2, axis=2)                               # (B,H/2,W,Cout)
        x2n = jnp.pad(x2n, ((0, 0), (0, 0), (1, wpa - W - 1), (0, cout_p - Cout)))
        x2f = x2n.reshape(B, (H // 2) * wpa, cout_p)
        args += [x2f, x2f, x2f]
        in_specs += [
            pl.BlockSpec((1, th2 * wpa, cout_p), lambda b, j: (b, j, 0)),
            pl.BlockSpec((1, wpa, cout_p),
                         lambda b, j: (b, jnp.maximum(j * th2 - 1, 0), 0)),
            pl.BlockSpec((1, wpa, cout_p),
                         lambda b, j: (b, jnp.minimum((j + 1) * th2, H // 2 - 1), 0)),
        ]
    args += [w1p, w3p, b3p]
    in_specs += [
        pl.BlockSpec((cin_p, cout_p), lambda b, j: (0, 0)),
        pl.BlockSpec((3, 3, cout_p, cout_p), lambda b, j: (0, 0, 0, 0)),
        pl.BlockSpec((1, cout_p), lambda b, j: (0, 0)),
    ]

    kernel = functools.partial(_topdown_fused_kernel, use_act=use_act,
                               use_merge=use_merge, th=th, wpa=wpa,
                               guard=guard, sub=sub)
    out_flat = pl.pallas_call(
        kernel,
        out_shape=jax.ShapeDtypeStruct((B, H * wpa, cout_p), out_dtype),
        grid=(B, nb),
        in_specs=in_specs,
        out_specs=pl.BlockSpec((1, th * wpa, cout_p), lambda b, j: (b, j, 0)),
        scratch_shapes=[
            pltpu.VMEM((2 * guard + (th + 2) * wpa, cout_p), compute_dtype),
            pltpu.VMEM((th * wpa, cout_p), jnp.float32),
        ],
        compiler_params=pltpu.CompilerParams(
            dimension_semantics=("parallel", "parallel"),
            vmem_limit_bytes=vmem_limit),
    )(*args)

    out = out_flat.reshape(B, H, wpa, cout_p)[:, :, 1:W + 1, :Cout]
    return jnp.transpose(out, (0, 3, 1, 2))   # back to NCHW


# ---------------------------------------------------------------------------
# Pure-JAX reference (mirrors the PyTorch forward) for correctness checking
# ---------------------------------------------------------------------------
def _reference(x1, x2, w1_oihw, b1, w3_oihw, b3, use_act=True, use_merge=True):
    dn = ("NCHW", "OIHW", "NCHW")
    y = lax.conv_general_dilated(x1, w1_oihw, (1, 1), "VALID", dimension_numbers=dn)
    y = y + b1[None, :, None, None]
    if use_merge:
        y = y + jnp.repeat(jnp.repeat(x2, 2, axis=2), 2, axis=3)
    if use_act:
        y = y * jax.nn.sigmoid(y)
    out = lax.conv_general_dilated(y, w3_oihw, (1, 1), "SAME", dimension_numbers=dn)
    return out + b3[None, :, None, None]


if __name__ == "__main__":
    key = jax.random.PRNGKey(0)
    B, Cin, Cout, H, W = 2, 4, 8, 16, 16
    k1, k2, k3, k4, k5, k6 = jax.random.split(key, 6)

    x1 = jax.random.normal(k1, (B, Cin, H, W), jnp.float32)
    x2 = jax.random.normal(k2, (B, Cout, H // 2, W // 2), jnp.float32)

    # Synthetic parameters in PyTorch shapes, then re-laid-out for the kernels.
    w1_pt = jax.random.normal(k3, (Cout, Cin, 1, 1), jnp.float32) * 0.1   # pre_merge.weight
    b1 = jax.random.normal(k4, (Cout,), jnp.float32) * 0.1                # pre_merge.bias
    w3_pt = jax.random.normal(k5, (Cout, Cout, 3, 3), jnp.float32) * 0.1  # conv.weight
    b3 = jax.random.normal(k6, (Cout,), jnp.float32) * 0.1                # conv.bias

    params = {
        "w1": jnp.transpose(w1_pt[:, :, 0, 0], (1, 0)),    # (Cin, Cout)
        "b1": b1,
        "w3": jnp.transpose(w3_pt, (2, 3, 1, 0)),          # (kh, kw, Cin, Cout)
        "b3": b3,
    }

    ref = _reference(x1, x2, w1_pt, b1, w3_pt, b3)

    # f32-compute path: tight check against the reference.
    out_f32 = top_down_block(x1, x2, params, compute_dtype=jnp.float32)
    jax.block_until_ready(out_f32)
    assert out_f32.shape == (B, Cout, H, W)
    assert jnp.allclose(out_f32, ref, atol=1e-3, rtol=1e-3), "f32 path mismatch"

    # default bf16-MXU path: loose check (bf16 matmuls / bf16 window scratch).
    out_bf16 = top_down_block(x1, x2, params)
    jax.block_until_ready(out_bf16)
    assert out_bf16.shape == (B, Cout, H, W)
    assert jnp.allclose(out_bf16, ref, atol=5e-2, rtol=5e-2), "bf16 path mismatch"

    # use_merge=False / use_act=False variant (exercises the dropped-operand path).
    ref_nm = _reference(x1, None, w1_pt, b1, w3_pt, b3, use_act=False, use_merge=False)
    out_nm = top_down_block(x1, None, params, use_act=False, use_merge=False,
                            compute_dtype=jnp.float32)
    jax.block_until_ready(out_nm)
    assert jnp.allclose(out_nm, ref_nm, atol=1e-3, rtol=1e-3), "no-merge path mismatch"

    print("KERNEL_OK")
</pallas_src>

<mosaic_0001>
module attributes {stable_mosaic.version = 11 : i64} {
  func.func @_topdown_fused_kernel(%arg0: i32, %arg1: i32, %arg2: memref<1x192x128xf32, #tpu.memory_space<vmem>>, %arg3: memref<1x24x128xf32, #tpu.memory_space<vmem>>, %arg4: memref<1x24x128xf32, #tpu.memory_space<vmem>>, %arg5: memref<1x96x128xf32, #tpu.memory_space<vmem>>, %arg6: memref<1x24x128xf32, #tpu.memory_space<vmem>>, %arg7: memref<1x24x128xf32, #tpu.memory_space<vmem>>, %arg8: memref<128x128xf32, #tpu.memory_space<vmem>>, %arg9: memref<3x3x128x128xf32, #tpu.memory_space<vmem>>, %arg10: memref<1x128xf32, #tpu.memory_space<vmem>>, %arg11: memref<1x192x128xf32, #tpu.memory_space<vmem>>, %arg12: memref<256x128xf32, #tpu.memory_space<vmem>>, %arg13: memref<192x128xf32, #tpu.memory_space<vmem>>) attributes {dimension_semantics = [#tpu.dimension_semantics<parallel>, #tpu.dimension_semantics<parallel>], iteration_bounds = array<i64: 2, 2>, scalar_prefetch = 0 : i64, scratch_operands = 2 : i64, tpu.core_type = #tpu.core_type<tc>, window_params = [{transform_indices = @transform_0, window_bounds = array<i64: 1, 192, 128>}, {transform_indices = @transform_1, window_bounds = array<i64: 1, 24, 128>}, {transform_indices = @transform_2, window_bounds = array<i64: 1, 24, 128>}, {transform_indices = @transform_3, window_bounds = array<i64: 1, 96, 128>}, {transform_indices = @transform_4, window_bounds = array<i64: 1, 24, 128>}, {transform_indices = @transform_5, window_bounds = array<i64: 1, 24, 128>}, {pipeline_mode = #tpu.pipeline_mode<synchronous>, transform_indices = @transform_6, window_bounds = array<i64: 128, 128>}, {pipeline_mode = #tpu.pipeline_mode<synchronous>, transform_indices = @transform_7, window_bounds = array<i64: 3, 3, 128, 128>}, {pipeline_mode = #tpu.pipeline_mode<synchronous>, transform_indices = @transform_8, window_bounds = array<i64: 1, 128>}, {transform_indices = @transform_9, window_bounds = array<i64: 1, 192, 128>}]} {
    %c0 = arith.constant 0 : index
    %c0_0 = arith.constant 0 : index
    %0 = vector.load %arg8[%c0, %c0_0] : memref<128x128xf32, #tpu.memory_space<vmem>>, vector<128x128xf32>
    %c0_1 = arith.constant 0 : index
    %c0_2 = arith.constant 0 : index
    %c0_3 = arith.constant 0 : index
    %1 = vector.load %arg2[%c0_1, %c0_2, %c0_3] : memref<1x192x128xf32, #tpu.memory_space<vmem>>, vector<1x192x128xf32>
    %2 = vector.shape_cast %1 : vector<1x192x128xf32> to vector<192x128xf32>
    %cst = arith.constant dense<0.000000e+00> : vector<192x128xf32>
    %3 = tpu.matmul %2, %0, %cst {dimension_numbers = #tpu.dot_dimension_numbers<[1], [0], [0], [1], [0, 0, 1, 1], [], []>} : vector<192x128xf32>, vector<128x128xf32>, vector<192x128xf32> -> vector<192x128xf32>
    %c0_4 = arith.constant 0 : index
    %c0_5 = arith.constant 0 : index
    %c0_6 = arith.constant 0 : index
    %4 = vector.load %arg5[%c0_4, %c0_5, %c0_6] : memref<1x96x128xf32, #tpu.memory_space<vmem>>, vector<1x96x128xf32>
    %5 = vector.shape_cast %4 : vector<1x96x128xf32> to vector<96x128xf32>
    %6 = vector.shape_cast %3 : vector<192x128xf32> to vector<4x2x24x128xf32>
    %7 = vector.shape_cast %5 : vector<96x128xf32> to vector<4x1x24x128xf32>
    %8 = vector.broadcast %7 : vector<4x1x24x128xf32> to vector<4x2x24x128xf32>
    %9 = arith.addf %6, %8 : vector<4x2x24x128xf32>
    %10 = vector.shape_cast %9 : vector<4x2x24x128xf32> to vector<192x128xf32>
    %11 = arith.negf %10 : vector<192x128xf32>
    %12 = math.exp %11 : vector<192x128xf32>
    %cst_7 = arith.constant 1.000000e+00 : f32
    %13 = vector.broadcast %cst_7 : f32 to vector<192x128xf32>
    %14 = arith.addf %13, %12 : vector<192x128xf32>
    %15 = arith.divf %13, %14 : vector<192x128xf32>
    %16 = arith.mulf %10, %15 : vector<192x128xf32>
    %c32 = arith.constant 32 : index
    %c0_8 = arith.constant 0 : index
    %17 = vector.load %arg12[%c32, %c0_8] : memref<256x128xf32, #tpu.memory_space<vmem>>, vector<192x128xf32>
    tpu.vector_store %arg12[%c32, %c0_8], %16 {strides = array<i32>} : memref<256x128xf32, #tpu.memory_space<vmem>>, vector<192x128xf32>,
    %c0_9 = arith.constant 0 : index
    %c0_10 = arith.constant 0 : index
    %c0_11 = arith.constant 0 : index
    %18 = vector.load %arg3[%c0_9, %c0_10, %c0_11] : memref<1x24x128xf32, #tpu.memory_space<vmem>>, vector<1x24x128xf32>
    %19 = vector.shape_cast %18 : vector<1x24x128xf32> to vector<24x128xf32>
    %c0_12 = arith.constant 0 : index
    %c0_13 = arith.constant 0 : index
    %c0_14 = arith.constant 0 : index
    %20 = vector.load %arg6[%c0_12, %c0_13, %c0_14] : memref<1x24x128xf32, #tpu.memory_space<vmem>>, vector<1x24x128xf32>
    %21 = vector.shape_cast %20 : vector<1x24x128xf32> to vector<24x128xf32>
    %cst_15 = arith.constant dense<0.000000e+00> : vector<24x128xf32>
    %22 = tpu.matmul %19, %0, %cst_15 {dimension_numbers = #tpu.dot_dimension_numbers<[1], [0], [0], [1], [0, 0, 1, 1], [], []>} : vector<24x128xf32>, vector<128x128xf32>, vector<24x128xf32> -> vector<24x128xf32>
    %23 = arith.addf %22, %21 : vector<24x128xf32>
    %24 = arith.negf %23 : vector<24x128xf32>
    %25 = math.exp %24 : vector<24x128xf32>
    %cst_16 = arith.constant 1.000000e+00 : f32
    %26 = vector.broadcast %cst_16 : f32 to vector<24x128xf32>
    %27 = arith.addf %26, %25 : vector<24x128xf32>
    %28 = arith.divf %26, %27 : vector<24x128xf32>
    %29 = arith.mulf %23, %28 : vector<24x128xf32>
    %c0_i32 = arith.constant 0 : i32
    %30 = arith.cmpi sgt, %arg1, %c0_i32 : i32
    %31 = arith.extui %30 : i1 to i32
    %32 = arith.sitofp %31 : i32 to f32
    %33 = vector.broadcast %32 : f32 to vector<24x128xf32>
    %34 = arith.mulf %29, %33 : vector<24x128xf32>
    %c8 = arith.constant 8 : index
    %c0_17 = arith.constant 0 : index
    %35 = vector.load %arg12[%c8, %c0_17] : memref<256x128xf32, #tpu.memory_space<vmem>>, vector<24x128xf32>
    tpu.vector_store %arg12[%c8, %c0_17], %34 {strides = array<i32>} : memref<256x128xf32, #tpu.memory_space<vmem>>, vector<24x128xf32>,
    %c0_18 = arith.constant 0 : index
    %c0_19 = arith.constant 0 : index
    %c0_20 = arith.constant 0 : index
    %36 = vector.load %arg4[%c0_18, %c0_19, %c0_20] : memref<1x24x128xf32, #tpu.memory_space<vmem>>, vector<1x24x128xf32>
    %37 = vector.shape_cast %36 : vector<1x24x128xf32> to vector<24x128xf32>
    %c0_21 = arith.constant 0 : index
    %c0_22 = arith.constant 0 : index
    %c0_23 = arith.constant 0 : index
    %38 = vector.load %arg7[%c0_21, %c0_22, %c0_23] : memref<1x24x128xf32, #tpu.memory_space<vmem>>, vector<1x24x128xf32>
    %39 = vector.shape_cast %38 : vector<1x24x128xf32> to vector<24x128xf32>
    %cst_24 = arith.constant dense<0.000000e+00> : vector<24x128xf32>
    %40 = tpu.matmul %37, %0, %cst_24 {dimension_numbers = #tpu.dot_dimension_numbers<[1], [0], [0], [1], [0, 0, 1, 1], [], []>} : vector<24x128xf32>, vector<128x128xf32>, vector<24x128xf32> -> vector<24x128xf32>
    %41 = arith.addf %40, %39 : vector<24x128xf32>
    %42 = arith.negf %41 : vector<24x128xf32>
    %43 = math.exp %42 : vector<24x128xf32>
    %cst_25 = arith.constant 1.000000e+00 : f32
    %44 = vector.broadcast %cst_25 : f32 to vector<24x128xf32>
    %45 = arith.addf %44, %43 : vector<24x128xf32>
    %46 = arith.divf %44, %45 : vector<24x128xf32>
    %47 = arith.mulf %41, %46 : vector<24x128xf32>
    %c1_i32 = arith.constant 1 : i32
    %48 = arith.cmpi slt, %arg1, %c1_i32 : i32
    %49 = arith.extui %48 : i1 to i32
    %50 = arith.sitofp %49 : i32 to f32
    %51 = vector.broadcast %50 : f32 to vector<24x128xf32>
    %52 = arith.mulf %47, %51 : vector<24x128xf32>
    %c224 = arith.constant 224 : index
    %c0_26 = arith.constant 0 : index
    %53 = vector.load %arg12[%c224, %c0_26] : memref<256x128xf32, #tpu.memory_space<vmem>>, vector<24x128xf32>
    tpu.vector_store %arg12[%c224, %c0_26], %52 {strides = array<i32>} : memref<256x128xf32, #tpu.memory_space<vmem>>, vector<24x128xf32>,
    %c0_27 = arith.constant 0 : index
    %c0_28 = arith.constant 0 : index
    %54 = vector.load %arg12[%c0_27, %c0_28] : memref<256x128xf32, #tpu.memory_space<vmem>>, vector<208x128xf32>
    %55 = vector.extract_strided_slice %54 {offsets = [7, 0], sizes = [192, 128], strides = [1, 1]} : vector<208x128xf32> to vector<192x128xf32>
    %c0_29 = arith.constant 0 : index
    %c0_30 = arith.constant 0 : index
    %c0_31 = arith.constant 0 : index
    %c0_32 = arith.constant 0 : index
    %56 = vector.load %arg9[%c0_29, %c0_30, %c0_31, %c0_32] : memref<3x3x128x128xf32, #tpu.memory_space<vmem>>, vector<1x1x128x128xf32>
    %57 = vector.shape_cast %56 : vector<1x1x128x128xf32> to vector<128x128xf32>
    %cst_33 = arith.constant dense<0.000000e+00> : vector<192x128xf32>
    %58 = tpu.matmul %55, %57, %cst_33 {dimension_numbers = #tpu.dot_dimension_numbers<[1], [0], [0], [1], [0, 0, 1, 1], [], []>} : vector<192x128xf32>, vector<128x128xf32>, vector<192x128xf32> -> vector<192x128xf32>
    %59 = vector.extract_strided_slice %54 {offsets = [8, 0], sizes = [192, 128], strides = [1, 1]} : vector<208x128xf32> to vector<192x128xf32>
    %c0_34 = arith.constant 0 : index
    %c1 = arith.constant 1 : index
    %c0_35 = arith.constant 0 : index
    %c0_36 = arith.constant 0 : index
    %60 = vector.load %arg9[%c0_34, %c1, %c0_35, %c0_36] : memref<3x3x128x128xf32, #tpu.memory_space<vmem>>, vector<1x1x128x128xf32>
    %61 = vector.shape_cast %60 : vector<1x1x128x128xf32> to vector<128x128xf32>
    %cst_37 = arith.constant dense<0.000000e+00> : vector<192x128xf32>
    %62 = tpu.matmul %59, %61, %cst_37 {dimension_numbers = #tpu.dot_dimension_numbers<[1], [0], [0], [1], [0, 0, 1, 1], [], []>} : vector<192x128xf32>, vector<128x128xf32>, vector<192x128xf32> -> vector<192x128xf32>
    %63 = arith.addf %58, %62 : vector<192x128xf32>
    %64 = vector.extract_strided_slice %54 {offsets = [9, 0], sizes = [192, 128], strides = [1, 1]} : vector<208x128xf32> to vector<192x128xf32>
    %c0_38 = arith.constant 0 : index
    %c2 = arith.constant 2 : index
    %c0_39 = arith.constant 0 : index
    %c0_40 = arith.constant 0 : index
    %65 = vector.load %arg9[%c0_38, %c2, %c0_39, %c0_40] : memref<3x3x128x128xf32, #tpu.memory_space<vmem>>, vector<1x1x128x128xf32>
    %66 = vector.shape_cast %65 : vector<1x1x128x128xf32> to vector<128x128xf32>
    %cst_41 = arith.constant dense<0.000000e+00> : vector<192x128xf32>
    %67 = tpu.matmul %64, %66, %cst_41 {dimension_numbers = #tpu.dot_dimension_numbers<[1], [0], [0], [1], [0, 0, 1, 1], [], []>} : vector<192x128xf32>, vector<128x128xf32>, vector<192x128xf32> -> vector<192x128xf32>
    %68 = arith.addf %63, %67 : vector<192x128xf32>
    %c0_42 = arith.constant 0 : index
    %c0_43 = arith.constant 0 : index
    %69 = vector.load %arg13[%c0_42, %c0_43] : memref<192x128xf32, #tpu.memory_space<vmem>>, vector<192x128xf32>
    tpu.vector_store %arg13[%c0_42, %c0_43], %68 {strides = array<i32>} : memref<192x128xf32, #tpu.memory_space<vmem>>, vector<192x128xf32>,
    %c24 = arith.constant 24 : index
    %c0_44 = arith.constant 0 : index
    %70 = vector.load %arg12[%c24, %c0_44] : memref<256x128xf32, #tpu.memory_space<vmem>>, vector<208x128xf32>
    %71 = vector.extract_strided_slice %70 {offsets = [7, 0], sizes = [192, 128], strides = [1, 1]} : vector<208x128xf32> to vector<192x128xf32>
    %c1_45 = arith.constant 1 : index
    %c0_46 = arith.constant 0 : index
    %c0_47 = arith.constant 0 : index
    %c0_48 = arith.constant 0 : index
    %72 = vector.load %arg9[%c1_45, %c0_46, %c0_47, %c0_48] : memref<3x3x128x128xf32, #tpu.memory_space<vmem>>, vector<1x1x128x128xf32>
    %73 = vector.shape_cast %72 : vector<1x1x128x128xf32> to vector<128x128xf32>
    %cst_49 = arith.constant dense<0.000000e+00> : vector<192x128xf32>
    %74 = tpu.matmul %71, %73, %cst_49 {dimension_numbers = #tpu.dot_dimension_numbers<[1], [0], [0], [1], [0, 0, 1, 1], [], []>} : vector<192x128xf32>, vector<128x128xf32>, vector<192x128xf32> -> vector<192x128xf32>
    %75 = vector.extract_strided_slice %70 {offsets = [8, 0], sizes = [192, 128], strides = [1, 1]} : vector<208x128xf32> to vector<192x128xf32>
    %c1_50 = arith.constant 1 : index
    %c1_51 = arith.constant 1 : index
    %c0_52 = arith.constant 0 : index
    %c0_53 = arith.constant 0 : index
    %76 = vector.load %arg9[%c1_50, %c1_51, %c0_52, %c0_53] : memref<3x3x128x128xf32, #tpu.memory_space<vmem>>, vector<1x1x128x128xf32>
    %77 = vector.shape_cast %76 : vector<1x1x128x128xf32> to vector<128x128xf32>
    %cst_54 = arith.constant dense<0.000000e+00> : vector<192x128xf32>
    %78 = tpu.matmul %75, %77, %cst_54 {dimension_numbers = #tpu.dot_dimension_numbers<[1], [0], [0], [1], [0, 0, 1, 1], [], []>} : vector<192x128xf32>, vector<128x128xf32>, vector<192x128xf32> -> vector<192x128xf32>
    %79 = arith.addf %74, %78 : vector<192x128xf32>
    %80 = vector.extract_strided_slice %70 {offsets = [9, 0], sizes = [192, 128], strides = [1, 1]} : vector<208x128xf32> to vector<192x128xf32>
    %c1_55 = arith.constant 1 : index
    %c2_56 = arith.constant 2 : index
    %c0_57 = arith.constant 0 : index
    %c0_58 = arith.constant 0 : index
    %81 = vector.load %arg9[%c1_55, %c2_56, %c0_57, %c0_58] : memref<3x3x128x128xf32, #tpu.memory_space<vmem>>, vector<1x1x128x128xf32>
    %82 = vector.shape_cast %81 : vector<1x1x128x128xf32> to vector<128x128xf32>
    %cst_59 = arith.constant dense<0.000000e+00> : vector<192x128xf32>
    %83 = tpu.matmul %80, %82, %cst_59 {dimension_numbers = #tpu.dot_dimension_numbers<[1], [0], [0], [1], [0, 0, 1, 1], [], []>} : vector<192x128xf32>, vector<128x128xf32>, vector<192x128xf32> -> vector<192x128xf32>
    %84 = arith.addf %79, %83 : vector<192x128xf32>
    %c0_60 = arith.constant 0 : index
    %c0_61 = arith.constant 0 : index
    %85 = vector.load %arg13[%c0_60, %c0_61] : memref<192x128xf32, #tpu.memory_space<vmem>>, vector<192x128xf32>
    %86 = arith.addf %85, %84 : vector<192x128xf32>
    %c0_62 = arith.constant 0 : index
    %c0_63 = arith.constant 0 : index
    %87 = vector.load %arg13[%c0_62, %c0_63] : memref<192x128xf32, #tpu.memory_space<vmem>>, vector<192x128xf32>
    tpu.vector_store %arg13[%c0_62, %c0_63], %86 {strides = array<i32>} : memref<192x128xf32, #tpu.memory_space<vmem>>, vector<192x128xf32>,
    %c48 = arith.constant 48 : index
    %c0_64 = arith.constant 0 : index
    %88 = vector.load %arg12[%c48, %c0_64] : memref<256x128xf32, #tpu.memory_space<vmem>>, vector<208x128xf32>
    %89 = vector.extract_strided_slice %88 {offsets = [7, 0], sizes = [192, 128], strides = [1, 1]} : vector<208x128xf32> to vector<192x128xf32>
    %c2_65 = arith.constant 2 : index
    %c0_66 = arith.constant 0 : index
    %c0_67 = arith.constant 0 : index
    %c0_68 = arith.constant 0 : index
    %90 = vector.load %arg9[%c2_65, %c0_66, %c0_67, %c0_68] : memref<3x3x128x128xf32, #tpu.memory_space<vmem>>, vector<1x1x128x128xf32>
    %91 = vector.shape_cast %90 : vector<1x1x128x128xf32> to vector<128x128xf32>
    %cst_69 = arith.constant dense<0.000000e+00> : vector<192x128xf32>
    %92 = tpu.matmul %89, %91, %cst_69 {dimension_numbers = #tpu.dot_dimension_numbers<[1], [0], [0], [1], [0, 0, 1, 1], [], []>} : vector<192x128xf32>, vector<128x128xf32>, vector<192x128xf32> -> vector<192x128xf32>
    %93 = vector.extract_strided_slice %88 {offsets = [8, 0], sizes = [192, 128], strides = [1, 1]} : vector<208x128xf32> to vector<192x128xf32>
    %c2_70 = arith.constant 2 : index
    %c1_71 = arith.constant 1 : index
    %c0_72 = arith.constant 0 : index
    %c0_73 = arith.constant 0 : index
    %94 = vector.load %arg9[%c2_70, %c1_71, %c0_72, %c0_73] : memref<3x3x128x128xf32, #tpu.memory_space<vmem>>, vector<1x1x128x128xf32>
    %95 = vector.shape_cast %94 : vector<1x1x128x128xf32> to vector<128x128xf32>
    %cst_74 = arith.constant dense<0.000000e+00> : vector<192x128xf32>
    %96 = tpu.matmul %93, %95, %cst_74 {dimension_numbers = #tpu.dot_dimension_numbers<[1], [0], [0], [1], [0, 0, 1, 1], [], []>} : vector<192x128xf32>, vector<128x128xf32>, vector<192x128xf32> -> vector<192x128xf32>
    %97 = arith.addf %92, %96 : vector<192x128xf32>
    %98 = vector.extract_strided_slice %88 {offsets = [9, 0], sizes = [192, 128], strides = [1, 1]} : vector<208x128xf32> to vector<192x128xf32>
    %c2_75 = arith.constant 2 : index
    %c2_76 = arith.constant 2 : index
    %c0_77 = arith.constant 0 : index
    %c0_78 = arith.constant 0 : index
    %99 = vector.load %arg9[%c2_75, %c2_76, %c0_77, %c0_78] : memref<3x3x128x128xf32, #tpu.memory_space<vmem>>, vector<1x1x128x128xf32>
    %100 = vector.shape_cast %99 : vector<1x1x128x128xf32> to vector<128x128xf32>
    %cst_79 = arith.constant dense<0.000000e+00> : vector<192x128xf32>
    %101 = tpu.matmul %98, %100, %cst_79 {dimension_numbers = #tpu.dot_dimension_numbers<[1], [0], [0], [1], [0, 0, 1, 1], [], []>} : vector<192x128xf32>, vector<128x128xf32>, vector<192x128xf32> -> vector<192x128xf32>
    %102 = arith.addf %97, %101 : vector<192x128xf32>
    %c0_80 = arith.constant 0 : index
    %c0_81 = arith.constant 0 : index
    %103 = vector.load %arg13[%c0_80, %c0_81] : memref<192x128xf32, #tpu.memory_space<vmem>>, vector<192x128xf32>
    %104 = arith.addf %103, %102 : vector<192x128xf32>
    %c0_82 = arith.constant 0 : index
    %c0_83 = arith.constant 0 : index
    %105 = vector.load %arg10[%c0_82, %c0_83] : memref<1x128xf32, #tpu.memory_space<vmem>>, vector<1x128xf32>
    %106 = vector.broadcast %105 : vector<1x128xf32> to vector<192x128xf32>
    %107 = arith.addf %104, %106 : vector<192x128xf32>
    %c0_84 = arith.constant 0 : index
    %c0_85 = arith.constant 0 : index
    %c0_86 = arith.constant 0 : index
    %108 = vector.load %arg11[%c0_84, %c0_85, %c0_86] : memref<1x192x128xf32, #tpu.memory_space<vmem>>, vector<1x192x128xf32>
    %109 = vector.shape_cast %108 : vector<1x192x128xf32> to vector<192x128xf32>
    %110 = vector.shape_cast %107 : vector<192x128xf32> to vector<1x192x128xf32>
    tpu.vector_store %arg11[%c0_84, %c0_85, %c0_86], %110 {strides = array<i32>} : memref<1x192x128xf32, #tpu.memory_space<vmem>>, vector<1x192x128xf32>,
    return
  }
  func.func @transform_0(%arg0: i32, %arg1: i32) -> (i32, i32, i32) {
    %c0_i32 = arith.constant 0 : i32
    %c0_i32_0 = arith.constant 0 : i32
    return %arg0, %arg1, %c0_i32 : i32, i32, i32
  }
  func.func @transform_1(%arg0: i32, %arg1: i32) -> (i32, i32, i32) {
    %c8_i32 = arith.constant 8 : i32
    %0 = arith.muli %arg1, %c8_i32 : i32
    %c1_i32 = arith.constant 1 : i32
    %1 = arith.subi %0, %c1_i32 : i32
    %c0_i32 = arith.constant 0 : i32
    %2 = arith.maxsi %1, %c0_i32 : i32
    %c0_i32_0 = arith.constant 0 : i32
    %c0_i32_1 = arith.constant 0 : i32
    return %arg0, %2, %c0_i32_0 : i32, i32, i32
  }
  func.func @transform_2(%arg0: i32, %arg1: i32) -> (i32, i32, i32) {
    %c1_i32 = arith.constant 1 : i32
    %0 = arith.addi %arg1, %c1_i32 : i32
    %c8_i32 = arith.constant 8 : i32
    %1 = arith.muli %0, %c8_i32 : i32
    %c15_i32 = arith.constant 15 : i32
    %2 = arith.minsi %1, %c15_i32 : i32
    %c0_i32 = arith.constant 0 : i32
    %c0_i32_0 = arith.constant 0 : i32
    return %arg0, %2, %c0_i32 : i32, i32, i32
  }
  func.func @transform_3(%arg0: i32, %arg1: i32) -> (i32, i32, i32) {
    %c0_i32 = arith.constant 0 : i32
    %c0_i32_0 = arith.constant 0 : i32
    return %arg0, %arg1, %c0_i32 : i32, i32, i32
  }
  func.func @transform_4(%arg0: i32, %arg1: i32) -> (i32, i32, i32) {
    %c4_i32 = arith.constant 4 : i32
    %0 = arith.muli %arg1, %c4_i32 : i32
    %c1_i32 = arith.constant 1 : i32
    %1 = arith.subi %0, %c1_i32 : i32
    %c0_i32 = arith.constant 0 : i32
    %2 = arith.maxsi %1, %c0_i32 : i32
    %c0_i32_0 = arith.constant 0 : i32
    %c0_i32_1 = arith.constant 0 : i32
    return %arg0, %2, %c0_i32_0 : i32, i32, i32
  }
  func.func @transform_5(%arg0: i32, %arg1: i32) -> (i32, i32, i32) {
    %c1_i32 = arith.constant 1 : i32
    %0 = arith.addi %arg1, %c1_i32 : i32
    %c4_i32 = arith.constant 4 : i32
    %1 = arith.muli %0, %c4_i32 : i32
    %c7_i32 = arith.constant 7 : i32
    %2 = arith.minsi %1, %c7_i32 : i32
    %c0_i32 = arith.constant 0 : i32
    %c0_i32_0 = arith.constant 0 : i32
    return %arg0, %2, %c0_i32 : i32, i32, i32
  }
  func.func @transform_6(%arg0: i32, %arg1: i32) -> (i32, i32) {
    %c0_i32 = arith.constant 0 : i32
    %c0_i32_0 = arith.constant 0 : i32
    %c0_i32_1 = arith.constant 0 : i32
    return %c0_i32, %c0_i32_0 : i32, i32
  }
  func.func @transform_7(%arg0: i32, %arg1: i32) -> (i32, i32, i32, i32) {
    %c0_i32 = arith.constant 0 : i32
    %c0_i32_0 = arith.constant 0 : i32
    %c0_i32_1 = arith.constant 0 : i32
    %c0_i32_2 = arith.constant 0 : i32
    %c0_i32_3 = arith.constant 0 : i32
    return %c0_i32, %c0_i32_0, %c0_i32_1, %c0_i32_2 : i32, i32, i32, i32
  }
  func.func @transform_8(%arg0: i32, %arg1: i32) -> (i32, i32) {
    %c0_i32 = arith.constant 0 : i32
    %c0_i32_0 = arith.constant 0 : i32
    %c0_i32_1 = arith.constant 0 : i32
    return %c0_i32, %c0_i32_0 : i32, i32
  }
  func.func @transform_9(%arg0: i32, %arg1: i32) -> (i32, i32, i32) {
    %c0_i32 = arith.constant 0 : i32
    %c0_i32_0 = arith.constant 0 : i32
    return %arg0, %arg1, %c0_i32 : i32, i32, i32
  }
}

</mosaic_0001>

<llo_original>
// kernel: top_down_block.1
$region0: #{top_down_block.1}
  #allocation0 [shape = 'u32[]', space=smem, size = 0x4, offset = 0x4, fixed_abs, tag = 'smem constant byte address 0x4 - core index']
  #allocation1 [shape = 'u32[72,128]{1,0:T(1,128)}', space=vmem, size = 0x9000, scoped, tag = 'internal scratch']
  #allocation2 [shape = 'f32[256,128]{1,0:T(8,128)}', space=vmem, size = 0x20000, scoped, tag = 'scratch operand']
  #allocation3 [shape = 'f32[192,128]{1,0:T(8,128)}', space=vmem, size = 0x18000, scoped, tag = 'scratch operand']
  %s0 = inlined_call_operand.vmem [shape: f32[2,384,128], index: 0, kind: input, shape index: {}, may-alias: {0,1,2}]
  %s1 = inlined_call_operand.vmem [shape: f32[2,384,128], index: 1, kind: input, shape index: {}, may-alias: {0,1,2}]
  %s2 = inlined_call_operand.vmem [shape: f32[2,384,128], index: 2, kind: input, shape index: {}, may-alias: {0,1,2}]
  %s3 = inlined_call_operand.vmem [shape: f32[2,192,128], index: 3, kind: input, shape index: {}, may-alias: {3,4,5}]
  %s4 = inlined_call_operand.vmem [shape: f32[2,192,128], index: 4, kind: input, shape index: {}, may-alias: {3,4,5}]
  %s5 = inlined_call_operand.vmem [shape: f32[2,192,128], index: 5, kind: input, shape index: {}, may-alias: {3,4,5}]
  %s6 = inlined_call_operand.vmem [shape: f32[128,128], index: 6, kind: input, shape index: {}]
  %s7 = inlined_call_operand.vmem [shape: f32[3,3,128,128], index: 7, kind: input, shape index: {}]
  %s8 = inlined_call_operand.vmem [shape: f32[1,128], index: 8, kind: input, shape index: {}]
  %s9 = inlined_call_operand.vmem [shape: f32[2,384,128], index: 9, kind: output, shape index: {}]
  %s10 = sld [smem:[#allocation0]]
  $region69: #{top_down_block.1} parent=0
    _
  %s12 = ssub.s32 1, %s10
  %s13 = scalar_select 0, %s12, %s10
  loop: start=0, step=1, limit=6
  $region2: #{top_down_block.1} parent=0 // loop_pre_header
    _
  $region3: #{top_down_block.1} parent=0 // loop_header
    %s15 = sphi 0, %s19
    %p16 = scmp.ge.s32.totalorder %s15, 6
    %s22 = sphi 0, %s34
    %s23 = sphi 0, %s30
    %s24 = sphi 0, %s22
    %s25 = sphi 0, %s23
    %s26 = sphi 0, %s24
    %s27 = sphi 0, %s25
    %s39 = sphi 0, %s41
    %s42 = sphi 0, %s39
    %s43 = sphi 0, %s42
    %s59 = sphi 0, %s43
    %s75 = sphi 0, %s77
    %s78 = sphi 0, %s75
    %s79 = sphi 0, %s78
    %s95 = sphi 0, %s79
    %s111 = sphi 0, %s113
    %s114 = sphi 0, %s111
    %s115 = sphi 0, %s114
    %s131 = sphi 0, %s115
    %s139 = sphi 0, %s141
    %s142 = sphi 0, %s139
    %s143 = sphi 0, %s142
    %s159 = sphi 0, %s143
    %s175 = sphi 0, %s177
    %s178 = sphi 0, %s175
    %s179 = sphi 0, %s178
    %s195 = sphi 0, %s179
    %s211 = sphi 0, %s213
    %s214 = sphi 0, %s211
    %s215 = sphi 0, %s214
    %s231 = sphi 0, %s215
    %s235 = sphi 0, %s235
    %s237 = sphi 0, %s235
    %s238 = sphi 0, %s237
    %s252 = sphi 0, %s238
    %s256 = sphi 0, %s256
    %s258 = sphi 0, %s256
    %s259 = sphi 0, %s258
    %s273 = sphi 0, %s259
    %s277 = sphi 0, %s277
    %s279 = sphi 0, %s277
    %s280 = sphi 0, %s279
    %s294 = sphi 0, %s280
    %s302 = sphi 0, %s304
    %s305 = sphi 0, %s302
    %s306 = sphi 0, %s305
    %s322 = sphi 0, %s306
  $region4: #{top_down_block.1} parent=0 // loop_header_branch
    %18 = sbr.rel (%p16) target = $region8
  $region5: #{top_down_block.1} parent=0 // loop_body
    %s20 = ssub.s32 %s15, 1
    %s21 = ssub.s32 %s15, 2
    %s28 = sadd.s32 1, %s23
    %p29 = scmp.ge.s32.totalorder %s28, 2
    %s30 = scalar_select %p29, 0, %s28
    %s31 = sadd.s32 1, %s22
    %s32 = scalar_select %p29, %s31, %s22
    %p33 = scmp.ge.s32.totalorder %s32, 2
    %s34 = scalar_select %p33, 0, %s32
    %s35 = ssub.s32 %s22, %s34
    %s36 = ssub.s32 %s23, %s30
    %s37 = sor.u32 %s35, %s36
    %p38 = scmp.eq.s32.totalorder %s37, 0
    %s40 = sadd.s32 %s39, 1
    %s41 = scalar_select %p38, %s39, %s40
    %p44 = pneg %p38
    %p45 = scmp.eq.s32.totalorder %s15, 3
    %p46 = por %p44, %p45
    %p47 = scmp.ne.s32.totalorder %s39, %s42
    %p48 = scmp.eq.s32.totalorder %s15, 0
    %p49 = por %p47, %p48
    %p50 = scmp.ne.s32.totalorder %s39, %s42
    %p51 = scmp.eq.s32.totalorder %s20, 3
    %p52 = por %p50, %p51
    %p53 = scmp.ne.s32.totalorder %s42, %s43
    %p54 = scmp.eq.s32.totalorder %s20, 0
    %p55 = por %p53, %p54
    %p56 = scmp.ne.s32.totalorder %s42, %s43
    %p57 = scmp.eq.s32.totalorder %s21, 3
    %p58 = por %p56, %p57
    %p60 = scmp.ne.s32.totalorder %s43, %s59
    %p61 = scmp.eq.s32.totalorder %s21, 0
    %p62 = por %p60, %p61
    %s63 = smul.u32 %s23, 8
    %s64 = ssub.s32 %s63, 1
    %p65 = scmp.gt.s32.totalorder %s64, 0
    %s66 = scalar_select %p65, %s64, 0
    %s67 = smul.u32 %s30, 8
    %s68 = ssub.s32 %s67, 1
    %p69 = scmp.gt.s32.totalorder %s68, 0
    %s70 = scalar_select %p69, %s68, 0
    %s71 = ssub.s32 %s22, %s34
    %s72 = ssub.s32 %s66, %s70
    %s73 = sor.u32 %s71, %s72
    %p74 = scmp.eq.s32.totalorder %s73, 0
    %s76 = sadd.s32 %s75, 1
    %s77 = scalar_select %p74, %s75, %s76
    %p80 = pneg %p74
    %p81 = scmp.eq.s32.totalorder %s15, 3
    %p82 = por %p80, %p81
    %p83 = scmp.ne.s32.totalorder %s75, %s78
    %p84 = scmp.eq.s32.totalorder %s15, 0
    %p85 = por %p83, %p84
    %p86 = scmp.ne.s32.totalorder %s75, %s78
    %p87 = scmp.eq.s32.totalorder %s20, 3
    %p88 = por %p86, %p87
    %p89 = scmp.ne.s32.totalorder %s78, %s79
    %p90 = scmp.eq.s32.totalorder %s20, 0
    %p91 = por %p89, %p90
    %p92 = scmp.ne.s32.totalorder %s78, %s79
    %p93 = scmp.eq.s32.totalorder %s21, 3
    %p94 = por %p92, %p93
    %p96 = scmp.ne.s32.totalorder %s79, %s95
    %p97 = scmp.eq.s32.totalorder %s21, 0
    %p98 = por %p96, %p97
    %s99 = sadd.s32 %s23, 1
    %s100 = smul.u32 %s99, 8
    %p101 = scmp.lt.s32.totalorder %s100, 15
    %s102 = scalar_select %p101, %s100, 15
    %s103 = sadd.s32 %s30, 1
    %s104 = smul.u32 %s103, 8
    %p105 = scmp.lt.s32.totalorder %s104, 15
    %s106 = scalar_select %p105, %s104, 15
    %s107 = ssub.s32 %s22, %s34
    %s108 = ssub.s32 %s102, %s106
    %s109 = sor.u32 %s107, %s108
    %p110 = scmp.eq.s32.totalorder %s109, 0
    %s112 = sadd.s32 %s111, 1
    %s113 = scalar_select %p110, %s111, %s112
    %p116 = pneg %p110
    %p117 = scmp.eq.s32.totalorder %s15, 3
    %p118 = por %p116, %p117
    %p119 = scmp.ne.s32.totalorder %s111, %s114
    %p120 = scmp.eq.s32.totalorder %s15, 0
    %p121 = por %p119, %p120
    %p122 = scmp.ne.s32.totalorder %s111, %s114
    %p123 = scmp.eq.s32.totalorder %s20, 3
    %p124 = por %p122, %p123
    %p125 = scmp.ne.s32.totalorder %s114, %s115
    %p126 = scmp.eq.s32.totalorder %s20, 0
    %p127 = por %p125, %p126
    %p128 = scmp.ne.s32.totalorder %s114, %s115
    %p129 = scmp.eq.s32.totalorder %s21, 3
    %p130 = por %p128, %p129
    %p132 = scmp.ne.s32.totalorder %s115, %s131
    %p133 = scmp.eq.s32.totalorder %s21, 0
    %p134 = por %p132, %p133
    %s135 = ssub.s32 %s22, %s34
    %s136 = ssub.s32 %s23, %s30
    %s137 = sor.u32 %s135, %s136
    %p138 = scmp.eq.s32.totalorder %s137, 0
    %s140 = sadd.s32 %s139, 1
    %s141 = scalar_select %p138, %s139, %s140
    %p144 = pneg %p138
    %p145 = scmp.eq.s32.totalorder %s15, 3
    %p146 = por %p144, %p145
    %p147 = scmp.ne.s32.totalorder %s139, %s142
    %p148 = scmp.eq.s32.totalorder %s15, 0
    %p149 = por %p147, %p148
    %p150 = scmp.ne.s32.totalorder %s139, %s142
    %p151 = scmp.eq.s32.totalorder %s20, 3
    %p152 = por %p150, %p151
    %p153 = scmp.ne.s32.totalorder %s142, %s143
    %p154 = scmp.eq.s32.totalorder %s20, 0
    %p155 = por %p153, %p154
    %p156 = scmp.ne.s32.totalorder %s142, %s143
    %p157 = scmp.eq.s32.totalorder %s21, 3
    %p158 = por %p156, %p157
    %p160 = scmp.ne.s32.totalorder %s143, %s159
    %p161 = scmp.eq.s32.totalorder %s21, 0
    %p162 = por %p160, %p161
    %s163 = smul.u32 %s23, 4
    %s164 = ssub.s32 %s163, 1
    %p165 = scmp.gt.s32.totalorder %s164, 0
    %s166 = scalar_select %p165, %s164, 0
    %s167 = smul.u32 %s30, 4
    %s168 = ssub.s32 %s167, 1
    %p169 = scmp.gt.s32.totalorder %s168, 0
    %s170 = scalar_select %p169, %s168, 0
    %s171 = ssub.s32 %s22, %s34
    %s172 = ssub.s32 %s166, %s170
    %s173 = sor.u32 %s171, %s172
    %p174 = scmp.eq.s32.totalorder %s173, 0
    %s176 = sadd.s32 %s175, 1
    %s177 = scalar_select %p174, %s175, %s176
    %p180 = pneg %p174
    %p181 = scmp.eq.s32.totalorder %s15, 3
    %p182 = por %p180, %p181
    %p183 = scmp.ne.s32.totalorder %s175, %s178
    %p184 = scmp.eq.s32.totalorder %s15, 0
    %p185 = por %p183, %p184
    %p186 = scmp.ne.s32.totalorder %s175, %s178
    %p187 = scmp.eq.s32.totalorder %s20, 3
    %p188 = por %p186, %p187
    %p189 = scmp.ne.s32.totalorder %s178, %s179
    %p190 = scmp.eq.s32.totalorder %s20, 0
    %p191 = por %p189, %p190
    %p192 = scmp.ne.s32.totalorder %s178, %s179
    %p193 = scmp.eq.s32.totalorder %s21, 3
    %p194 = por %p192, %p193
    %p196 = scmp.ne.s32.totalorder %s179, %s195
    %p197 = scmp.eq.s32.totalorder %s21, 0
    %p198 = por %p196, %p197
    %s199 = sadd.s32 %s23, 1
    %s200 = smul.u32 %s199, 4
    %p201 = scmp.lt.s32.totalorder %s200, 7
    %s202 = scalar_select %p201, %s200, 7
    %s203 = sadd.s32 %s30, 1
    %s204 = smul.u32 %s203, 4
    %p205 = scmp.lt.s32.totalorder %s204, 7
    %s206 = scalar_select %p205, %s204, 7
    %s207 = ssub.s32 %s22, %s34
    %s208 = ssub.s32 %s202, %s206
    %s209 = sor.u32 %s207, %s208
    %p210 = scmp.eq.s32.totalorder %s209, 0
    %s212 = sadd.s32 %s211, 1
    %s213 = scalar_select %p210, %s211, %s212
    %p216 = pneg %p210
    %p217 = scmp.eq.s32.totalorder %s15, 3
    %p218 = por %p216, %p217
    %p219 = scmp.ne.s32.totalorder %s211, %s214
    %p220 = scmp.eq.s32.totalorder %s15, 0
    %p221 = por %p219, %p220
    %p222 = scmp.ne.s32.totalorder %s211, %s214
    %p223 = scmp.eq.s32.totalorder %s20, 3
    %p224 = por %p222, %p223
    %p225 = scmp.ne.s32.totalorder %s214, %s215
    %p226 = scmp.eq.s32.totalorder %s20, 0
    %p227 = por %p225, %p226
    %p228 = scmp.ne.s32.totalorder %s214, %s215
    %p229 = scmp.eq.s32.totalorder %s21, 3
    %p230 = por %p228, %p229
    %p232 = scmp.ne.s32.totalorder %s215, %s231
    %p233 = scmp.eq.s32.totalorder %s21, 0
    %p234 = por %p232, %p233
    %s236 = sadd.s32 %s235, 1
    %p239 = scmp.eq.s32.totalorder %s15, 3
    %p240 = scmp.ne.s32.totalorder %s235, %s237
    %p241 = scmp.eq.s32.totalorder %s15, 0
    %p242 = por %p240, %p241
    %p243 = scmp.ne.s32.totalorder %s235, %s237
    %p244 = scmp.eq.s32.totalorder %s20, 3
    %p245 = por %p243, %p244
    %p246 = scmp.ne.s32.totalorder %s237, %s238
    %p247 = scmp.eq.s32.totalorder %s20, 0
    %p248 = por %p246, %p247
    %p249 = scmp.ne.s32.totalorder %s237, %s238
    %p250 = scmp.eq.s32.totalorder %s21, 3
    %p251 = por %p249, %p250
    %p253 = scmp.ne.s32.totalorder %s238, %s252
    %p254 = scmp.eq.s32.totalorder %s21, 0
    %p255 = por %p253, %p254
    %s257 = sadd.s32 %s256, 1
    %p260 = scmp.eq.s32.totalorder %s15, 3
    %p261 = scmp.ne.s32.totalorder %s256, %s258
    %p262 = scmp.eq.s32.totalorder %s15, 0
    %p263 = por %p261, %p262
    %p264 = scmp.ne.s32.totalorder %s256, %s258
    %p265 = scmp.eq.s32.totalorder %s20, 3
    %p266 = por %p264, %p265
    %p267 = scmp.ne.s32.totalorder %s258, %s259
    %p268 = scmp.eq.s32.totalorder %s20, 0
    %p269 = por %p267, %p268
    %p270 = scmp.ne.s32.totalorder %s258, %s259
    %p271 = scmp.eq.s32.totalorder %s21, 3
    %p272 = por %p270, %p271
    %p274 = scmp.ne.s32.totalorder %s259, %s273
    %p275 = scmp.eq.s32.totalorder %s21, 0
    %p276 = por %p274, %p275
    %s278 = sadd.s32 %s277, 1
    %p281 = scmp.eq.s32.totalorder %s15, 3
    %p282 = scmp.ne.s32.totalorder %s277, %s279
    %p283 = scmp.eq.s32.totalorder %s15, 0
    %p284 = por %p282, %p283
    %p285 = scmp.ne.s32.totalorder %s277, %s279
    %p286 = scmp.eq.s32.totalorder %s20, 3
    %p287 = por %p285, %p286
    %p288 = scmp.ne.s32.totalorder %s279, %s280
    %p289 = scmp.eq.s32.totalorder %s20, 0
    %p290 = por %p288, %p289
    %p291 = scmp.ne.s32.totalorder %s279, %s280
    %p292 = scmp.eq.s32.totalorder %s21, 3
    %p293 = por %p291, %p292
    %p295 = scmp.ne.s32.totalorder %s280, %s294
    %p296 = scmp.eq.s32.totalorder %s21, 0
    %p297 = por %p295, %p296
    %s298 = ssub.s32 %s22, %s34
    %s299 = ssub.s32 %s23, %s30
    %s300 = sor.u32 %s298, %s299
    %p301 = scmp.eq.s32.totalorder %s300, 0
    %s303 = sadd.s32 %s302, 1
    %s304 = scalar_select %p301, %s302, %s303
    %p307 = pneg %p301
    %p308 = scmp.eq.s32.totalorder %s15, 3
    %p309 = por %p307, %p308
    %p310 = scmp.ne.s32.totalorder %s302, %s305
    %p311 = scmp.eq.s32.totalorder %s15, 0
    %p312 = por %p310, %p311
    %p313 = scmp.ne.s32.totalorder %s302, %s305
    %p314 = scmp.eq.s32.totalorder %s20, 3
    %p315 = por %p313, %p314
    %p316 = scmp.ne.s32.totalorder %s305, %s306
    %p317 = scmp.eq.s32.totalorder %s20, 0
    %p318 = por %p316, %p317
    %p319 = scmp.ne.s32.totalorder %s305, %s306
    %p320 = scmp.eq.s32.totalorder %s21, 3
    %p321 = por %p319, %p320
    %p323 = scmp.ne.s32.totalorder %s306, %s322
    %p324 = scmp.eq.s32.totalorder %s21, 0
    %p325 = por %p323, %p324
    %p326 = scmp.le.s32.totalorder 1, %s15
    %p327 = scmp.lt.s32.totalorder %s15, 5
    %p328 = pnand %p326, %p327
    %p329 = pneg %p328
    // Predicated region
    $region9: #{top_down_block.1} parent=5 // pred_check
      _
    $region10: #{top_down_block.1} parent=5 // pred_check_branch
      %331 = sbr.rel (%p328) target = $region12
    $region11: #{top_down_block.1} parent=5 // pred_region
      %s332 = ssub.s32 %s15, 1
      // Predicated region
      $region13: #{top_down_block.1} parent=11 // pred_check
        %p333 = pneg %p248
      $region14: #{top_down_block.1} parent=11 // pred_check_branch
        %335 = sbr.rel (%p333) target = $region16
      $region15: #{top_down_block.1} parent=11 // pred_region
        _
      $region16: #{top_down_block.1} parent=11 // pred_fallthru
        _
      // Predicated region
      $region17: #{top_down_block.1} parent=11 // pred_check
        %p336 = pneg %p269
      $region18: #{top_down_block.1} parent=11 // pred_check_branch
        %338 = sbr.rel (%p336) target = $region20
      $region19: #{top_down_block.1} parent=11 // pred_region
        _
      $region20: #{top_down_block.1} parent=11 // pred_fallthru
        _
      // Predicated region
      $region21: #{top_down_block.1} parent=11 // pred_check
        %p339 = pneg %p290
      $region22: #{top_down_block.1} parent=11 // pred_check_branch
        %341 = sbr.rel (%p339) target = $region24
      $region23: #{top_down_block.1} parent=11 // pred_region
        _
      $region24: #{top_down_block.1} parent=11 // pred_fallthru
        _
    $region12: #{top_down_block.1} parent=5 // pred_fallthru
      _
    %p342 = scmp.lt.s32.totalorder %s15, 4
    // Predicated region
    $region25: #{top_down_block.1} parent=5 // pred_check
      %p343 = pneg %p342
    $region26: #{top_down_block.1} parent=5 // pred_check_branch
      %345 = sbr.rel (%p343) target = $region28
    $region27: #{top_down_block.1} parent=5 // pred_region
      // Predicated region
      $region29: #{top_down_block.1} parent=27 // pred_check
        %p346 = pneg %p49
      $region30: #{top_down_block.1} parent=27 // pred_check_branch
        %348 = sbr.rel (%p346) target = $region32
      $region31: #{top_down_block.1} parent=27 // pred_region
        %s349 = smul.u32 24, %s23
        %p350 = scmp.lt.s32.totalorder %s22, 1
        %s351 = scalar_select %p350, %s22, 1
        %p352 = scmp.lt.s32.totalorder %s349, 47
        %s353 = scalar_select %p352, %s349, 47
        %s354 = smul.addr %s351, 48
        %s355 = sadd.s32 %s353, %s354
        %s356 = smul.addr %s355, 8
        %s357 = scalar_lea.vmem %s0, %s356
        %s358 = smul.u32 24, %s23
      $region32: #{top_down_block.1} parent=27 // pred_fallthru
        _
      // Predicated region
      $region33: #{top_down_block.1} parent=27 // pred_check
        %p359 = pneg %p85
      $region34: #{top_down_block.1} parent=27 // pred_check_branch
        %361 = sbr.rel (%p359) target = $region36
      $region35: #{top_down_block.1} parent=27 // pred_region
        %s362 = smul.u32 %s23, 8
        %s363 = ssub.s32 %s362, 1
        %p364 = scmp.gt.s32.totalorder %s363, 0
        %s365 = scalar_select %p364, %s363, 0
        %s366 = smul.u32 3, %s365
        %p367 = scmp.lt.s32.totalorder %s22, 1
        %s368 = scalar_select %p367, %s22, 1
        %p369 = scmp.lt.s32.totalorder %s366, 47
        %s370 = scalar_select %p369, %s366, 47
        %s371 = smul.addr %s368, 48
        %s372 = sadd.s32 %s370, %s371
        %s373 = smul.addr %s372, 8
        %s374 = scalar_lea.vmem %s1, %s373
        %s375 = smul.u32 %s23, 8
        %s376 = ssub.s32 %s375, 1
        %p377 = scmp.gt.s32.totalorder %s376, 0
        %s378 = scalar_select %p377, %s376, 0
        %s379 = smul.u32 3, %s378
      $region36: #{top_down_block.1} parent=27 // pred_fallthru
        _
      // Predicated region
      $region37: #{top_down_block.1} parent=27 // pred_check
        %p380 = pneg %p121
      $region38: #{top_down_block.1} parent=27 // pred_check_branch
        %382 = sbr.rel (%p380) target = $region40
      $region39: #{top_down_block.1} parent=27 // pred_region
        %s383 = sadd.s32 %s23, 1
        %s384 = smul.u32 %s383, 8
        %p385 = scmp.lt.s32.totalorder %s384, 15
        %s386 = scalar_select %p385, %s384, 15
        %s387 = smul.u32 3, %s386
        %p388 = scmp.lt.s32.totalorder %s22, 1
        %s389 = scalar_select %p388, %s22, 1
        %p390 = scmp.lt.s32.totalorder %s387, 47
        %s391 = scalar_select %p390, %s387, 47
        %s392 = smul.addr %s389, 48
        %s393 = sadd.s32 %s391, %s392
        %s394 = smul.addr %s393, 8
        %s395 = scalar_lea.vmem %s2, %s394
        %s396 = sadd.s32 %s23, 1
        %s397 = smul.u32 %s396, 8
        %p398 = scmp.lt.s32.totalorder %s397, 15
        %s399 = scalar_select %p398, %s397, 15
        %s400 = smul.u32 3, %s399
      $region40: #{top_down_block.1} parent=27 // pred_fallthru
        _
      // Predicated region
      $region41: #{top_down_block.1} parent=27 // pred_check
        %p401 = pneg %p149
      $region42: #{top_down_block.1} parent=27 // pred_check_branch
        %403 = sbr.rel (%p401) target = $region44
      $region43: #{top_down_block.1} parent=27 // pred_region
        %s404 = smul.u32 12, %s23
        %p405 = scmp.lt.s32.totalorder %s22, 1
        %s406 = scalar_select %p405, %s22, 1
        %p407 = scmp.lt.s32.totalorder %s404, 23
        %s408 = scalar_select %p407, %s404, 23
        %s409 = smul.addr %s406, 24
        %s410 = sadd.s32 %s408, %s409
        %s411 = smul.addr %s410, 8
        %s412 = scalar_lea.vmem %s3, %s411
        %s413 = smul.u32 12, %s23
      $region44: #{top_down_block.1} parent=27 // pred_fallthru
        _
      // Predicated region
      $region45: #{top_down_block.1} parent=27 // pred_check
        %p414 = pneg %p185
      $region46: #{top_down_block.1} parent=27 // pred_check_branch
        %416 = sbr.rel (%p414) target = $region48
      $region47: #{top_down_block.1} parent=27 // pred_region
        %s417 = smul.u32 %s23, 4
        %s418 = ssub.s32 %s417, 1
        %p419 = scmp.gt.s32.totalorder %s418, 0
        %s420 = scalar_select %p419, %s418, 0
        %s421 = smul.u32 3, %s420
        %p422 = scmp.lt.s32.totalorder %s22, 1
        %s423 = scalar_select %p422, %s22, 1
        %p424 = scmp.lt.s32.totalorder %s421, 23
        %s425 = scalar_select %p424, %s421, 23
        %s426 = smul.addr %s423, 24
        %s427 = sadd.s32 %s425, %s426
        %s428 = smul.addr %s427, 8
        %s429 = scalar_lea.vmem %s4, %s428
        %s430 = smul.u32 %s23, 4
        %s431 = ssub.s32 %s430, 1
        %p432 = scmp.gt.s32.totalorder %s431, 0
        %s433 = scalar_select %p432, %s431, 0
        %s434 = smul.u32 3, %s433
      $region48: #{top_down_block.1} parent=27 // pred_fallthru
        _
      // Predicated region
      $region49: #{top_down_block.1} parent=27 // pred_check
        %p435 = pneg %p221
      $region50: #{top_down_block.1} parent=27 // pred_check_branch
        %437 = sbr.rel (%p435) target = $region52
      $region51: #{top_down_block.1} parent=27 // pred_region
        %s438 = sadd.s32 %s23, 1
        %s439 = smul.u32 %s438, 4
        %p440 = scmp.lt.s32.totalorder %s439, 7
        %s441 = scalar_select %p440, %s439, 7
        %s442 = smul.u32 3, %s441
        %p443 = scmp.lt.s32.totalorder %s22, 1
        %s444 = scalar_select %p443, %s22, 1
        %p445 = scmp.lt.s32.totalorder %s442, 23
        %s446 = scalar_select %p445, %s442, 23
        %s447 = smul.addr %s444, 24
        %s448 = sadd.s32 %s446, %s447
        %s449 = smul.addr %s448, 8
        %s450 = scalar_lea.vmem %s5, %s449
        %s451 = sadd.s32 %s23, 1
        %s452 = smul.u32 %s451, 4
        %p453 = scmp.lt.s32.totalorder %s452, 7
        %s454 = scalar_select %p453, %s452, 7
        %s455 = smul.u32 3, %s454
      $region52: #{top_down_block.1} parent=27 // pred_fallthru
        _
    $region28: #{top_down_block.1} parent=5 // pred_fallthru
      _
    %p456 = scmp.le.s32.totalorder 1, %s15
    %p457 = scmp.lt.s32.totalorder %s15, 5
    %p458 = pnand %p456, %p457
    %p459 = pneg %p458
    // Predicated region
    $region53: #{top_down_block.1} parent=5 // pred_check
      _
    $region54: #{top_down_block.1} parent=5 // pred_check_branch
      %461 = sbr.rel (%p458) target = $region56
    $region55: #{top_down_block.1} parent=5 // pred_region
      %s462 = ssub.s32 %s15, 1
      %s463 = smul.u32 24, %s25
      %p464 = scmp.lt.s32.totalorder %s24, 1
      %s465 = scalar_select %p464, %s24, 1
      %p466 = scmp.lt.s32.totalorder %s463, 47
      %s467 = scalar_select %p466, %s463, 47
      %s468 = smul.addr %s465, 48
      %s469 = sadd.s32 %s467, %s468
      %s470 = smul.addr %s469, 8
      %s471 = scalar_lea.vmem %s0, %s470
      %p472 = pneg %p55
      %p473 = pneg %p52
      %s474 = smul.u32 %s25, 8
      %s475 = ssub.s32 %s474, 1
      %p476 = scmp.gt.s32.totalorder %s475, 0
      %s477 = scalar_select %p476, %s475, 0
      %s478 = smul.u32 3, %s477
      %p479 = scmp.lt.s32.totalorder %s24, 1
      %s480 = scalar_select %p479, %s24, 1
      %p481 = scmp.lt.s32.totalorder %s478, 47
      %s482 = scalar_select %p481, %s478, 47
      %s483 = smul.addr %s480, 48
      %s484 = sadd.s32 %s482, %s483
      %s485 = smul.addr %s484, 8
      %s486 = scalar_lea.vmem %s1, %s485
      %p487 = pneg %p91
      %p488 = pneg %p88
      %s489 = sadd.s32 %s25, 1
      %s490 = smul.u32 %s489, 8
      %p491 = scmp.lt.s32.totalorder %s490, 15
      %s492 = scalar_select %p491, %s490, 15
      %s493 = smul.u32 3, %s492
      %p494 = scmp.lt.s32.totalorder %s24, 1
      %s495 = scalar_select %p494, %s24, 1
      %p496 = scmp.lt.s32.totalorder %s493, 47
      %s497 = scalar_select %p496, %s493, 47
      %s498 = smul.addr %s495, 48
      %s499 = sadd.s32 %s497, %s498
      %s500 = smul.addr %s499, 8
      %s501 = scalar_lea.vmem %s2, %s500
      %p502 = pneg %p127
      %p503 = pneg %p124
      %s504 = smul.u32 12, %s25
      %p505 = scmp.lt.s32.totalorder %s24, 1
      %s506 = scalar_select %p505, %s24, 1
      %p507 = scmp.lt.s32.totalorder %s504, 23
      %s508 = scalar_select %p507, %s504, 23
      %s509 = smul.addr %s506, 24
      %s510 = sadd.s32 %s508, %s509
      %s511 = smul.addr %s510, 8
      %s512 = scalar_lea.vmem %s3, %s511
      %p513 = pneg %p155
      %p514 = pneg %p152
      %s515 = smul.u32 %s25, 4
      %s516 = ssub.s32 %s515, 1
      %p517 = scmp.gt.s32.totalorder %s516, 0
      %s518 = scalar_select %p517, %s516, 0
      %s519 = smul.u32 3, %s518
      %p520 = scmp.lt.s32.totalorder %s24, 1
      %s521 = scalar_select %p520, %s24, 1
      %p522 = scmp.lt.s32.totalorder %s519, 23
      %s523 = scalar_select %p522, %s519, 23
      %s524 = smul.addr %s521, 24
      %s525 = sadd.s32 %s523, %s524
      %s526 = smul.addr %s525, 8
      %s527 = scalar_lea.vmem %s4, %s526
      %p528 = pneg %p191
      %p529 = pneg %p188
      %s530 = sadd.s32 %s25, 1
      %s531 = smul.u32 %s530, 4
      %p532 = scmp.lt.s32.totalorder %s531, 7
      %s533 = scalar_select %p532, %s531, 7
      %s534 = smul.u32 3, %s533
      %p535 = scmp.lt.s32.totalorder %s24, 1
      %s536 = scalar_select %p535, %s24, 1
      %p537 = scmp.lt.s32.totalorder %s534, 23
      %s538 = scalar_select %p537, %s534, 23
      %s539 = smul.addr %s536, 24
      %s540 = sadd.s32 %s538, %s539
      %s541 = smul.addr %s540, 8
      %s542 = scalar_lea.vmem %s5, %s541
      %p543 = pneg %p227
      %p544 = pneg %p224
      %p545 = pneg %p248
      %p546 = pneg %p245
      %p547 = pneg %p269
      %p548 = pneg %p266
      %p549 = pneg %p290
      %p550 = pneg %p287
      %p551 = pneg %p318
      %p552 = pneg %p315
      %s553 = smul.u32 24, %s25
      %p554 = scmp.lt.s32.totalorder %s24, 1
      %s555 = scalar_select %p554, %s24, 1
      %p556 = scmp.lt.s32.totalorder %s553, 47
      %s557 = scalar_select %p556, %s553, 47
      %s558 = smul.addr %s555, 48
      %s559 = sadd.s32 %s557, %s558
      %s560 = smul.addr %s559, 8
      %s561 = scalar_lea.vmem %s9, %s560
      %s562 = smul.u32 24, %s25
      %p563 = scmp.lt.s32.totalorder %s24, 1
      %s564 = scalar_select %p563, %s24, 1
      %p565 = scmp.lt.s32.totalorder %s562, 47
      %s566 = scalar_select %p565, %s562, 47
      %s567 = smul.addr %s564, 48
      %s568 = sadd.s32 %s566, %s567
      %s569 = smul.addr %s568, 8
      %s570 = scalar_lea.vmem %s0, %s569
      %s571 = smul.u32 24, %s25
      %s572 = smul.u32 %s25, 8
      %s573 = ssub.s32 %s572, 1
      %p574 = scmp.gt.s32.totalorder %s573, 0
      %s575 = scalar_select %p574, %s573, 0
      %s576 = smul.u32 3, %s575
      %p577 = scmp.lt.s32.totalorder %s24, 1
      %s578 = scalar_select %p577, %s24, 1
      %p579 = scmp.lt.s32.totalorder %s576, 47
      %s580 = scalar_select %p579, %s576, 47
      %s581 = smul.addr %s578, 48
      %s582 = sadd.s32 %s580, %s581
      %s583 = smul.addr %s582, 8
      %s584 = scalar_lea.vmem %s1, %s583
      %s585 = smul.u32 %s25, 8
      %s586 = ssub.s32 %s585, 1
      %p587 = scmp.gt.s32.totalorder %s586, 0
      %s588 = scalar_select %p587, %s586, 0
      %s589 = smul.u32 3, %s588
      %s590 = sadd.s32 %s25, 1
      %s591 = smul.u32 %s590, 8
      %p592 = scmp.lt.s32.totalorder %s591, 15
      %s593 = scalar_select %p592, %s591, 15
      %s594 = smul.u32 3, %s593
      %p595 = scmp.lt.s32.totalorder %s24, 1
      %s596 = scalar_select %p595, %s24, 1
      %p597 = scmp.lt.s32.totalorder %s594, 47
      %s598 = scalar_select %p597, %s594, 47
      %s599 = smul.addr %s596, 48
      %s600 = sadd.s32 %s598, %s599
      %s601 = smul.addr %s600, 8
      %s602 = scalar_lea.vmem %s2, %s601
      %s603 = sadd.s32 %s25, 1
      %s604 = smul.u32 %s603, 8
      %p605 = scmp.lt.s32.totalorder %s604, 15
      %s606 = scalar_select %p605, %s604, 15
      %s607 = smul.u32 3, %s606
      %s608 = smul.u32 12, %s25
      %p609 = scmp.lt.s32.totalorder %s24, 1
      %s610 = scalar_select %p609, %s24, 1
      %p611 = scmp.lt.s32.totalorder %s608, 23
      %s612 = scalar_select %p611, %s608, 23
      %s613 = smul.addr %s610, 24
      %s614 = sadd.s32 %s612, %s613
      %s615 = smul.addr %s614, 8
      %s616 = scalar_lea.vmem %s3, %s615
      %s617 = smul.u32 12, %s25
      %s618 = smul.u32 %s25, 4
      %s619 = ssub.s32 %s618, 1
      %p620 = scmp.gt.s32.totalorder %s619, 0
      %s621 = scalar_select %p620, %s619, 0
      %s622 = smul.u32 3, %s621
      %p623 = scmp.lt.s32.totalorder %s24, 1
      %s624 = scalar_select %p623, %s24, 1
      %p625 = scmp.lt.s32.totalorder %s622, 23
      %s626 = scalar_select %p625, %s622, 23
      %s627 = smul.addr %s624, 24
      %s628 = sadd.s32 %s626, %s627
      %s629 = smul.addr %s628, 8
      %s630 = scalar_lea.vmem %s4, %s629
      %s631 = smul.u32 %s25, 4
      %s632 = ssub.s32 %s631, 1
      %p633 = scmp.gt.s32.totalorder %s632, 0
      %s634 = scalar_select %p633, %s632, 0
      %s635 = smul.u32 3, %s634
      %s636 = sadd.s32 %s25, 1
      %s637 = smul.u32 %s636, 4
      %p638 = scmp.lt.s32.totalorder %s637, 7
      %s639 = scalar_select %p638, %s637, 7
      %s640 = smul.u32 3, %s639
      %p641 = scmp.lt.s32.totalorder %s24, 1
      %s642 = scalar_select %p641, %s24, 1
      %p643 = scmp.lt.s32.totalorder %s640, 23
      %s644 = scalar_select %p643, %s640, 23
      %s645 = smul.addr %s642, 24
      %s646 = sadd.s32 %s644, %s645
      %s647 = smul.addr %s646, 8
      %s648 = scalar_lea.vmem %s5, %s647
      %s649 = sadd.s32 %s25, 1
      %s650 = smul.u32 %s649, 4
      %p651 = scmp.lt.s32.totalorder %s650, 7
      %s652 = scalar_select %p651, %s650, 7
      %s653 = smul.u32 3, %s652
      %s654 = smul.u32 24, %s25
      %p655 = scmp.lt.s32.totalorder %s24, 1
      %s656 = scalar_select %p655, %s24, 1
      %p657 = scmp.lt.s32.totalorder %s654, 47
      %s658 = scalar_select %p657, %s654, 47
      %s659 = smul.addr %s656, 48
      %s660 = sadd.s32 %s658, %s659
      %s661 = smul.addr %s660, 8
      %s662 = scalar_lea.vmem %s9, %s661
      %s663 = smul.u32 24, %s25
      %v664 = vld [vmem:[%s6] sm:$0xff]
      %v665 = vld [vmem:[%s6 + $0x8] sm:$0xff]
      %v666 = vld [vmem:[%s6 + $0x10] sm:$0xff]
      %v667 = vld [vmem:[%s6 + $0x18] sm:$0xff]
      %v668 = vld [vmem:[%s6 + $0x20] sm:$0xff]
      %v669 = vld [vmem:[%s6 + $0x28] sm:$0xff]
      %v670 = vld [vmem:[%s6 + $0x30] sm:$0xff]
      %v671 = vld [vmem:[%s6 + $0x38] sm:$0xff]
      %v672 = vld [vmem:[%s6 + $0x40] sm:$0xff]
      %v673 = vld [vmem:[%s6 + $0x48] sm:$0xff]
      %v674 = vld [vmem:[%s6 + $0x50] sm:$0xff]
      %v675 = vld [vmem:[%s6 + $0x58] sm:$0xff]
      %v676 = vld [vmem:[%s6 + $0x60] sm:$0xff]
      %v677 = vld [vmem:[%s6 + $0x68] sm:$0xff]
      %v678 = vld [vmem:[%s6 + $0x70] sm:$0xff]
      %v679 = vld [vmem:[%s6 + $0x78] sm:$0xff]
      %v680 = vld [vmem:[%s570] sm:$0xff]
      %v681 = vld [vmem:[%s570 + $0x8] sm:$0xff]
      %v682 = vld [vmem:[%s570 + $0x10] sm:$0xff]
      %v683 = vld [vmem:[%s570 + $0x18] sm:$0xff]
      %v684 = vld [vmem:[%s570 + $0x20] sm:$0xff]
      %v685 = vld [vmem:[%s570 + $0x28] sm:$0xff]
      %v686 = vld [vmem:[%s570 + $0x30] sm:$0xff]
      %v687 = vld [vmem:[%s570 + $0x38] sm:$0xff]
      %v688 = vld [vmem:[%s570 + $0x40] sm:$0xff]
      %v689 = vld [vmem:[%s570 + $0x48] sm:$0xff]
      %v690 = vld [vmem:[%s570 + $0x50] sm:$0xff]
      %v691 = vld [vmem:[%s570 + $0x58] sm:$0xff]
      %v692 = vld [vmem:[%s570 + $0x60] sm:$0xff]
      %v693 = vld [vmem:[%s570 + $0x68] sm:$0xff]
      %v694 = vld [vmem:[%s570 + $0x70] sm:$0xff]
      %v695 = vld [vmem:[%s570 + $0x78] sm:$0xff]
      %v696 = vld [vmem:[%s570 + $0x80] sm:$0xff]
      %v697 = vld [vmem:[%s570 + $0x88] sm:$0xff]
      %v698 = vld [vmem:[%s570 + $0x90] sm:$0xff]
      %v699 = vld [vmem:[%s570 + $0x98] sm:$0xff]
      %v700 = vld [vmem:[%s570 + $0xa0] sm:$0xff]
      %v701 = vld [vmem:[%s570 + $0xa8] sm:$0xff]
      %v702 = vld [vmem:[%s570 + $0xb0] sm:$0xff]
      %v703 = vld [vmem:[%s570 + $0xb8] sm:$0xff]
      %704 = vmatpush.msra.mxu0 %v679
      %705 = vmatpush.msra.mxu0 %v678
      %706 = vmatpush.msra.mxu0 %v677
      %707 = vmatpush.msra.mxu0 %v676
      %708 = vmatpush.msra.mxu0 %v675
      %709 = vmatpush.msra.mxu0 %v674
      %710 = vmatpush.msra.mxu0 %v673
      %711 = vmatpush.msra.mxu0 %v672
      %712 = vmatpush.msra.mxu0 %v671
      %713 = vmatpush.msra.mxu0 %v670
      %714 = vmatpush.msra.mxu0 %v669
      %715 = vmatpush.msra.mxu0 %v668
      %716 = vmatpush.msra.mxu0 %v667
      %717 = vmatpush.msra.mxu0 %v666
      %718 = vmatpush.msra.mxu0 %v665
      %719 = vmatpush.msra.mxu0 %v664
      %720 = vmatmul.f32.gmra.mxu0 %v680
      %v721 = vpop.f32.mrf.mxu0
      %v722 = vadd.f32 0.0, %v721
      %723 = vmatmul.f32.gmra.mxu0 %v681
      %v724 = vpop.f32.mrf.mxu0
      %v725 = vadd.f32 0.0, %v724
      %726 = vmatmul.f32.gmra.mxu0 %v682
      %v727 = vpop.f32.mrf.mxu0
      %v728 = vadd.f32 0.0, %v727
      %729 = vmatmul.f32.gmra.mxu0 %v683
      %v730 = vpop.f32.mrf.mxu0
      %v731 = vadd.f32 0.0, %v730
      %732 = vmatmul.f32.gmra.mxu0 %v684
      %v733 = vpop.f32.mrf.mxu0
      %v734 = vadd.f32 0.0, %v733
      %735 = vmatmul.f32.gmra.mxu0 %v685
      %v736 = vpop.f32.mrf.mxu0
      %v737 = vadd.f32 0.0, %v736
      %738 = vmatmul.f32.gmra.mxu0 %v686
      %v739 = vpop.f32.mrf.mxu0
      %v740 = vadd.f32 0.0, %v739
      %741 = vmatmul.f32.gmra.mxu0 %v687
      %v742 = vpop.f32.mrf.mxu0
      %v743 = vadd.f32 0.0, %v742
      %744 = vmatmul.f32.gmra.mxu0 %v688
      %v745 = vpop.f32.mrf.mxu0
      %v746 = vadd.f32 0.0, %v745
      %747 = vmatmul.f32.gmra.mxu0 %v689
      %v748 = vpop.f32.mrf.mxu0
      %v749 = vadd.f32 0.0, %v748
      %750 = vmatmul.f32.gmra.mxu0 %v690
      %v751 = vpop.f32.mrf.mxu0
      %v752 = vadd.f32 0.0, %v751
      %753 = vmatmul.f32.gmra.mxu0 %v691
      %v754 = vpop.f32.mrf.mxu0
      %v755 = vadd.f32 0.0, %v754
      %756 = vmatmul.f32.gmra.mxu0 %v692
      %v757 = vpop.f32.mrf.mxu0
      %v758 = vadd.f32 0.0, %v757
      %759 = vmatmul.f32.gmra.mxu0 %v693
      %v760 = vpop.f32.mrf.mxu0
      %v761 = vadd.f32 0.0, %v760
      %762 = vmatmul.f32.gmra.mxu0 %v694
      %v763 = vpop.f32.mrf.mxu0
      %v764 = vadd.f32 0.0, %v763
      %765 = vmatmul.f32.gmra.mxu0 %v695
      %v766 = vpop.f32.mrf.mxu0
      %v767 = vadd.f32 0.0, %v766
      %768 = vmatmul.f32.gmra.mxu0 %v696
      %v769 = vpop.f32.mrf.mxu0
      %v770 = vadd.f32 0.0, %v769
      %771 = vmatmul.f32.gmra.mxu0 %v697
      %v772 = vpop.f32.mrf.mxu0
      %v773 = vadd.f32 0.0, %v772
      %774 = vmatmul.f32.gmra.mxu0 %v698
      %v775 = vpop.f32.mrf.mxu0
      %v776 = vadd.f32 0.0, %v775
      %777 = vmatmul.f32.gmra.mxu0 %v699
      %v778 = vpop.f32.mrf.mxu0
      %v779 = vadd.f32 0.0, %v778
      %780 = vmatmul.f32.gmra.mxu0 %v700
      %v781 = vpop.f32.mrf.mxu0
      %v782 = vadd.f32 0.0, %v781
      %783 = vmatmul.f32.gmra.mxu0 %v701
      %v784 = vpop.f32.mrf.mxu0
      %v785 = vadd.f32 0.0, %v784
      %786 = vmatmul.f32.gmra.mxu0 %v702
      %v787 = vpop.f32.mrf.mxu0
      %v788 = vadd.f32 0.0, %v787
      %789 = vmatmul.f32.gmra.mxu0 %v703
      %v790 = vpop.f32.mrf.mxu0
      %v791 = vadd.f32 0.0, %v790
      %792 = vdwg.mxu0
      %v793 = vld [vmem:[%s616] sm:$0xff]
      %v794 = vld [vmem:[%s616 + $0x8] sm:$0xff]
      %v795 = vld [vmem:[%s616 + $0x10] sm:$0xff]
      %v796 = vld [vmem:[%s616 + $0x18] sm:$0xff]
      %v797 = vld [vmem:[%s616 + $0x20] sm:$0xff]
      %v798 = vld [vmem:[%s616 + $0x28] sm:$0xff]
      %v799 = vld [vmem:[%s616 + $0x30] sm:$0xff]
      %v800 = vld [vmem:[%s616 + $0x38] sm:$0xff]
      %v801 = vld [vmem:[%s616 + $0x40] sm:$0xff]
      %v802 = vld [vmem:[%s616 + $0x48] sm:$0xff]
      %v803 = vld [vmem:[%s616 + $0x50] sm:$0xff]
      %v804 = vld [vmem:[%s616 + $0x58] sm:$0xff]
      %v805 = vadd.f32 %v722, %v793
      %v806 = vadd.f32 %v725, %v794
      %v807 = vadd.f32 %v728, %v795
      %v808 = vadd.f32 %v731, %v793
      %v809 = vadd.f32 %v734, %v794
      %v810 = vadd.f32 %v737, %v795
      %v811 = vadd.f32 %v740, %v796
      %v812 = vadd.f32 %v743, %v797
      %v813 = vadd.f32 %v746, %v798
      %v814 = vadd.f32 %v749, %v796
      %v815 = vadd.f32 %v752, %v797
      %v816 = vadd.f32 %v755, %v798
      %v817 = vadd.f32 %v758, %v799
      %v818 = vadd.f32 %v761, %v800
      %v819 = vadd.f32 %v764, %v801
      %v820 = vadd.f32 %v767, %v799
      %v821 = vadd.f32 %v770, %v800
      %v822 = vadd.f32 %v773, %v801
      %v823 = vadd.f32 %v776, %v802
      %v824 = vadd.f32 %v779, %v803
      %v825 = vadd.f32 %v782, %v804
      %v826 = vadd.f32 %v785, %v802
      %v827 = vadd.f32 %v788, %v803
      %v828 = vadd.f32 %v791, %v804
      %v829 = vxor.u32 %v805, 2147483648
      %v830 = vxor.u32 %v806, 2147483648
      %v831 = vxor.u32 %v807, 2147483648
      %v832 = vxor.u32 %v808, 2147483648
      %v833 = vxor.u32 %v809, 2147483648
      %v834 = vxor.u32 %v810, 2147483648
      %v835 = vxor.u32 %v811, 2147483648
      %v836 = vxor.u32 %v812, 2147483648
      %v837 = vxor.u32 %v813, 2147483648
      %v838 = vxor.u32 %v814, 2147483648
      %v839 = vxor.u32 %v815, 2147483648
      %v840 = vxor.u32 %v816, 2147483648
      %v841 = vxor.u32 %v817, 2147483648
      %v842 = vxor.u32 %v818, 2147483648
      %v843 = vxor.u32 %v819, 2147483648
      %v844 = vxor.u32 %v820, 2147483648
      %v845 = vxor.u32 %v821, 2147483648
      %v846 = vxor.u32 %v822, 2147483648
      %v847 = vxor.u32 %v823, 2147483648
      %v848 = vxor.u32 %v824, 2147483648
      %v849 = vxor.u32 %v825, 2147483648
      %v850 = vxor.u32 %v826, 2147483648
      %v851 = vxor.u32 %v827, 2147483648
      %v852 = vxor.u32 %v828, 2147483648
      %v853 = vmul.f32 %v829, 1.442695
      %v854 = vpow.pop %v853
      %v855 = vmul.f32 %v830, 1.442695
      %v856 = vpow.pop %v855
      %v857 = vmul.f32 %v831, 1.442695
      %v858 = vpow.pop %v857
      %v859 = vmul.f32 %v832, 1.442695
      %v860 = vpow.pop %v859
      %v861 = vmul.f32 %v833, 1.442695
      %v862 = vpow.pop %v861
      %v863 = vmul.f32 %v834, 1.442695
      %v864 = vpow.pop %v863
      %v865 = vmul.f32 %v835, 1.442695
      %v866 = vpow.pop %v865
      %v867 = vmul.f32 %v836, 1.442695
      %v868 = vpow.pop %v867
      %v869 = vmul.f32 %v837, 1.442695
      %v870 = vpow.pop %v869
      %v871 = vmul.f32 %v838, 1.442695
      %v872 = vpow.pop %v871
      %v873 = vmul.f32 %v839, 1.442695
      %v874 = vpow.pop %v873
      %v875 = vmul.f32 %v840, 1.442695
      %v876 = vpow.pop %v875
      %v877 = vmul.f32 %v841, 1.442695
      %v878 = vpow.pop %v877
      %v879 = vmul.f32 %v842, 1.442695
      %v880 = vpow.pop %v879
      %v881 = vmul.f32 %v843, 1.442695
      %v882 = vpow.pop %v881
      %v883 = vmul.f32 %v844, 1.442695
      %v884 = vpow.pop %v883
      %v885 = vmul.f32 %v845, 1.442695
      %v886 = vpow.pop %v885
      %v887 = vmul.f32 %v846, 1.442695
      %v888 = vpow.pop %v887
      %v889 = vmul.f32 %v847, 1.442695
      %v890 = vpow.pop %v889
      %v891 = vmul.f32 %v848, 1.442695
      %v892 = vpow.pop %v891
      %v893 = vmul.f32 %v849, 1.442695
      %v894 = vpow.pop %v893
      %v895 = vmul.f32 %v850, 1.442695
      %v896 = vpow.pop %v895
      %v897 = vmul.f32 %v851, 1.442695
      %v898 = vpow.pop %v897
      %v899 = vmul.f32 %v852, 1.442695
      %v900 = vpow.pop %v899
      %v901 = vadd.f32 %v854, 1.0
      %v902 = vadd.f32 %v856, 1.0
      %v903 = vadd.f32 %v858, 1.0
      %v904 = vadd.f32 %v860, 1.0
      %v905 = vadd.f32 %v862, 1.0
      %v906 = vadd.f32 %v864, 1.0
      %v907 = vadd.f32 %v866, 1.0
      %v908 = vadd.f32 %v868, 1.0
      %v909 = vadd.f32 %v870, 1.0
      %v910 = vadd.f32 %v872, 1.0
      %v911 = vadd.f32 %v874, 1.0
      %v912 = vadd.f32 %v876, 1.0
      %v913 = vadd.f32 %v878, 1.0
      %v914 = vadd.f32 %v880, 1.0
      %v915 = vadd.f32 %v882, 1.0
      %v916 = vadd.f32 %v884, 1.0
      %v917 = vadd.f32 %v886, 1.0
      %v918 = vadd.f32 %v888, 1.0
      %v919 = vadd.f32 %v890, 1.0
      %v920 = vadd.f32 %v892, 1.0
      %v921 = vadd.f32 %v894, 1.0
      %v922 = vadd.f32 %v896, 1.0
      %v923 = vadd.f32 %v898, 1.0
      %v924 = vadd.f32 %v900, 1.0
      %v925 = vrcp.pop %v901
      %v926 = vmul.f32 %v901, %v925
      %v927 = vsub.f32 1.0, %v926
      %v928 = vmul.f32 %v925, %v927
      %v929 = vadd.f32 %v925, %v928
      %vm930 = vweird.f32 %v901
      %vm931 = vweird.f32 %v925
      %vm932 = vmor %vm930, %vm931
      %v933 = vsel %vm932, %v925, %v929
      %v934 = vand.u32 2147483647, %v901
      %vm935 = vcmp.eq.f32.partialorder %v934, 8.507059e+37
      %v936 = vand.u32 %v901, 2147483648
      %v937 = vor.u32 1.1754944e-38, %v936
      %v938 = vsel %vm935, %v937, %v933
      %v939 = vmul.f32 1.0, %v938
      %v940 = vrcp.pop %v902
      %v941 = vmul.f32 %v902, %v940
      %v942 = vsub.f32 1.0, %v941
      %v943 = vmul.f32 %v940, %v942
      %v944 = vadd.f32 %v940, %v943
      %vm945 = vweird.f32 %v902
      %vm946 = vweird.f32 %v940
      %vm947 = vmor %vm945, %vm946
      %v948 = vsel %vm947, %v940, %v944
      %v949 = vand.u32 2147483647, %v902
      %vm950 = vcmp.eq.f32.partialorder %v949, 8.507059e+37
      %v951 = vand.u32 %v902, 2147483648
      %v952 = vor.u32 1.1754944e-38, %v951
      %v953 = vsel %vm950, %v952, %v948
      %v954 = vmul.f32 1.0, %v953
      %v955 = vrcp.pop %v903
      %v956 = vmul.f32 %v903, %v955
      %v957 = vsub.f32 1.0, %v956
      %v958 = vmul.f32 %v955, %v957
      %v959 = vadd.f32 %v955, %v958
      %vm960 = vweird.f32 %v903
      %vm961 = vweird.f32 %v955
      %vm962 = vmor %vm960, %vm961
      %v963 = vsel %vm962, %v955, %v959
      %v964 = vand.u32 2147483647, %v903
      %vm965 = vcmp.eq.f32.partialorder %v964, 8.507059e+37
      %v966 = vand.u32 %v903, 2147483648
      %v967 = vor.u32 1.1754944e-38, %v966
      %v968 = vsel %vm965, %v967, %v963
      %v969 = vmul.f32 1.0, %v968
      %v970 = vrcp.pop %v904
      %v971 = vmul.f32 %v904, %v970
      %v972 = vsub.f32 1.0, %v971
      %v973 = vmul.f32 %v970, %v972
      %v974 = vadd.f32 %v970, %v973
      %vm975 = vweird.f32 %v904
      %vm976 = vweird.f32 %v970
      %vm977 = vmor %vm975, %vm976
      %v978 = vsel %vm977, %v970, %v974
      %v979 = vand.u32 2147483647, %v904
      %vm980 = vcmp.eq.f32.partialorder %v979, 8.507059e+37
      %v981 = vand.u32 %v904, 2147483648
      %v982 = vor.u32 1.1754944e-38, %v981
      %v983 = vsel %vm980, %v982, %v978
      %v984 = vmul.f32 1.0, %v983
      %v985 = vrcp.pop %v905
      %v986 = vmul.f32 %v905, %v985
      %v987 = vsub.f32 1.0, %v986
      %v988 = vmul.f32 %v985, %v987
      %v989 = vadd.f32 %v985, %v988
      %vm990 = vweird.f32 %v905
      %vm991 = vweird.f32 %v985
      %vm992 = vmor %vm990, %vm991
      %v993 = vsel %vm992, %v985, %v989
      %v994 = vand.u32 2147483647, %v905
      %vm995 = vcmp.eq.f32.partialorder %v994, 8.507059e+37
      %v996 = vand.u32 %v905, 2147483648
      %v997 = vor.u32 1.1754944e-38, %v996
      %v998 = vsel %vm995, %v997, %v993
      %v999 = vmul.f32 1.0, %v998
      %v1000 = vrcp.pop %v906
      %v1001 = vmul.f32 %v906, %v1000
      %v1002 = vsub.f32 1.0, %v1001
      %v1003 = vmul.f32 %v1000, %v1002
      %v1004 = vadd.f32 %v1000, %v1003
      %vm1005 = vweird.f32 %v906
      %vm1006 = vweird.f32 %v1000
      %vm1007 = vmor %vm1005, %vm1006
      %v1008 = vsel %vm1007, %v1000, %v1004
      %v1009 = vand.u32 2147483647, %v906
      %vm1010 = vcmp.eq.f32.partialorder %v1009, 8.507059e+37
      %v1011 = vand.u32 %v906, 2147483648
      %v1012 = vor.u32 1.1754944e-38, %v1011
      %v1013 = vsel %vm1010, %v1012, %v1008
      %v1014 = vmul.f32 1.0, %v1013
      %v1015 = vrcp.pop %v907
      %v1016 = vmul.f32 %v907, %v1015
      %v1017 = vsub.f32 1.0, %v1016
      %v1018 = vmul.f32 %v1015, %v1017
      %v1019 = vadd.f32 %v1015, %v1018
      %vm1020 = vweird.f32 %v907
      %vm1021 = vweird.f32 %v1015
      %vm1022 = vmor %vm1020, %vm1021
      %v1023 = vsel %vm1022, %v1015, %v1019
      %v1024 = vand.u32 2147483647, %v907
      %vm1025 = vcmp.eq.f32.partialorder %v1024, 8.507059e+37
      %v1026 = vand.u32 %v907, 2147483648
      %v1027 = vor.u32 1.1754944e-38, %v1026
      %v1028 = vsel %vm1025, %v1027, %v1023
      %v1029 = vmul.f32 1.0, %v1028
      %v1030 = vrcp.pop %v908
      %v1031 = vmul.f32 %v908, %v1030
      %v1032 = vsub.f32 1.0, %v1031
      %v1033 = vmul.f32 %v1030, %v1032
      %v1034 = vadd.f32 %v1030, %v1033
      %vm1035 = vweird.f32 %v908
      %vm1036 = vweird.f32 %v1030
      %vm1037 = vmor %vm1035, %vm1036
      %v1038 = vsel %vm1037, %v1030, %v1034
      %v1039 = vand.u32 2147483647, %v908
      %vm1040 = vcmp.eq.f32.partialorder %v1039, 8.507059e+37
      %v1041 = vand.u32 %v908, 2147483648
      %v1042 = vor.u32 1.1754944e-38, %v1041
      %v1043 = vsel %vm1040, %v1042, %v1038
      %v1044 = vmul.f32 1.0, %v1043
      %v1045 = vrcp.pop %v909
      %v1046 = vmul.f32 %v909, %v1045
      %v1047 = vsub.f32 1.0, %v1046
      %v1048 = vmul.f32 %v1045, %v1047
      %v1049 = vadd.f32 %v1045, %v1048
      %vm1050 = vweird.f32 %v909
      %vm1051 = vweird.f32 %v1045
      %vm1052 = vmor %vm1050, %vm1051
      %v1053 = vsel %vm1052, %v1045, %v1049
      %v1054 = vand.u32 2147483647, %v909
      %vm1055 = vcmp.eq.f32.partialorder %v1054, 8.507059e+37
      %v1056 = vand.u32 %v909, 2147483648
      %v1057 = vor.u32 1.1754944e-38, %v1056
      %v1058 = vsel %vm1055, %v1057, %v1053
      %v1059 = vmul.f32 1.0, %v1058
      %v1060 = vrcp.pop %v910
      %v1061 = vmul.f32 %v910, %v1060
      %v1062 = vsub.f32 1.0, %v1061
      %v1063 = vmul.f32 %v1060, %v1062
      %v1064 = vadd.f32 %v1060, %v1063
      %vm1065 = vweird.f32 %v910
      %vm1066 = vweird.f32 %v1060
      %vm1067 = vmor %vm1065, %vm1066
      %v1068 = vsel %vm1067, %v1060, %v1064
      %v1069 = vand.u32 2147483647, %v910
      %vm1070 = vcmp.eq.f32.partialorder %v1069, 8.507059e+37
      %v1071 = vand.u32 %v910, 2147483648
      %v1072 = vor.u32 1.1754944e-38, %v1071
      %v1073 = vsel %vm1070, %v1072, %v1068
      %v1074 = vmul.f32 1.0, %v1073
      %v1075 = vrcp.pop %v911
      %v1076 = vmul.f32 %v911, %v1075
      %v1077 = vsub.f32 1.0, %v1076
      %v1078 = vmul.f32 %v1075, %v1077
      %v1079 = vadd.f32 %v1075, %v1078
      %vm1080 = vweird.f32 %v911
      %vm1081 = vweird.f32 %v1075
      %vm1082 = vmor %vm1080, %vm1081
      %v1083 = vsel %vm1082, %v1075, %v1079
      %v1084 = vand.u32 2147483647, %v911
      %vm1085 = vcmp.eq.f32.partialorder %v1084, 8.507059e+37
      %v1086 = vand.u32 %v911, 2147483648
      %v1087 = vor.u32 1.1754944e-38, %v1086
      %v1088 = vsel %vm1085, %v1087, %v1083
      %v1089 = vmul.f32 1.0, %v1088
      %v1090 = vrcp.pop %v912
      %v1091 = vmul.f32 %v912, %v1090
      %v1092 = vsub.f32 1.0, %v1091
      %v1093 = vmul.f32 %v1090, %v1092
      %v1094 = vadd.f32 %v1090, %v1093
      %vm1095 = vweird.f32 %v912
      %vm1096 = vweird.f32 %v1090
      %vm1097 = vmor %vm1095, %vm1096
      %v1098 = vsel %vm1097, %v1090, %v1094
      %v1099 = vand.u32 2147483647, %v912
      %vm1100 = vcmp.eq.f32.partialorder %v1099, 8.507059e+37
      %v1101 = vand.u32 %v912, 2147483648
      %v1102 = vor.u32 1.1754944e-38, %v1101
      %v1103 = vsel %vm1100, %v1102, %v1098
      %v1104 = vmul.f32 1.0, %v1103
      %v1105 = vrcp.pop %v913
      %v1106 = vmul.f32 %v913, %v1105
      %v1107 = vsub.f32 1.0, %v1106
      %v1108 = vmul.f32 %v1105, %v1107
      %v1109 = vadd.f32 %v1105, %v1108
      %vm1110 = vweird.f32 %v913
      %vm1111 = vweird.f32 %v1105
      %vm1112 = vmor %vm1110, %vm1111
      %v1113 = vsel %vm1112, %v1105, %v1109
      %v1114 = vand.u32 2147483647, %v913
      %vm1115 = vcmp.eq.f32.partialorder %v1114, 8.507059e+37
      %v1116 = vand.u32 %v913, 2147483648
      %v1117 = vor.u32 1.1754944e-38, %v1116
      %v1118 = vsel %vm1115, %v1117, %v1113
      %v1119 = vmul.f32 1.0, %v1118
      %v1120 = vrcp.pop %v914
      %v1121 = vmul.f32 %v914, %v1120
      %v1122 = vsub.f32 1.0, %v1121
      %v1123 = vmul.f32 %v1120, %v1122
      %v1124 = vadd.f32 %v1120, %v1123
      %vm1125 = vweird.f32 %v914
      %vm1126 = vweird.f32 %v1120
      %vm1127 = vmor %vm1125, %vm1126
      %v1128 = vsel %vm1127, %v1120, %v1124
      %v1129 = vand.u32 2147483647, %v914
      %vm1130 = vcmp.eq.f32.partialorder %v1129, 8.507059e+37
      %v1131 = vand.u32 %v914, 2147483648
      %v1132 = vor.u32 1.1754944e-38, %v1131
      %v1133 = vsel %vm1130, %v1132, %v1128
      %v1134 = vmul.f32 1.0, %v1133
      %v1135 = vrcp.pop %v915
      %v1136 = vmul.f32 %v915, %v1135
      %v1137 = vsub.f32 1.0, %v1136
      %v1138 = vmul.f32 %v1135, %v1137
      %v1139 = vadd.f32 %v1135, %v1138
      %vm1140 = vweird.f32 %v915
      %vm1141 = vweird.f32 %v1135
      %vm1142 = vmor %vm1140, %vm1141
      %v1143 = vsel %vm1142, %v1135, %v1139
      %v1144 = vand.u32 2147483647, %v915
      %vm1145 = vcmp.eq.f32.partialorder %v1144, 8.507059e+37
      %v1146 = vand.u32 %v915, 2147483648
      %v1147 = vor.u32 1.1754944e-38, %v1146
      %v1148 = vsel %vm1145, %v1147, %v1143
      %v1149 = vmul.f32 1.0, %v1148
      %v1150 = vrcp.pop %v916
      %v1151 = vmul.f32 %v916, %v1150
      %v1152 = vsub.f32 1.0, %v1151
      %v1153 = vmul.f32 %v1150, %v1152
      %v1154 = vadd.f32 %v1150, %v1153
      %vm1155 = vweird.f32 %v916
      %vm1156 = vweird.f32 %v1150
      %vm1157 = vmor %vm1155, %vm1156
      %v1158 = vsel %vm1157, %v1150, %v1154
      %v1159 = vand.u32 2147483647, %v916
      %vm1160 = vcmp.eq.f32.partialorder %v1159, 8.507059e+37
      %v1161 = vand.u32 %v916, 2147483648
      %v1162 = vor.u32 1.1754944e-38, %v1161
      %v1163 = vsel %vm1160, %v1162, %v1158
      %v1164 = vmul.f32 1.0, %v1163
      %v1165 = vrcp.pop %v917
      %v1166 = vmul.f32 %v917, %v1165
      %v1167 = vsub.f32 1.0, %v1166
      %v1168 = vmul.f32 %v1165, %v1167
      %v1169 = vadd.f32 %v1165, %v1168
      %vm1170 = vweird.f32 %v917
      %vm1171 = vweird.f32 %v1165
      %vm1172 = vmor %vm1170, %vm1171
      %v1173 = vsel %vm1172, %v1165, %v1169
      %v1174 = vand.u32 2147483647, %v917
      %vm1175 = vcmp.eq.f32.partialorder %v1174, 8.507059e+37
      %v1176 = vand.u32 %v917, 2147483648
      %v1177 = vor.u32 1.1754944e-38, %v1176
      %v1178 = vsel %vm1175, %v1177, %v1173
      %v1179 = vmul.f32 1.0, %v1178
      %v1180 = vrcp.pop %v918
      %v1181 = vmul.f32 %v918, %v1180
      %v1182 = vsub.f32 1.0, %v1181
      %v1183 = vmul.f32 %v1180, %v1182
      %v1184 = vadd.f32 %v1180, %v1183
      %vm1185 = vweird.f32 %v918
      %vm1186 = vweird.f32 %v1180
      %vm1187 = vmor %vm1185, %vm1186
      %v1188 = vsel %vm1187, %v1180, %v1184
      %v1189 = vand.u32 2147483647, %v918
      %vm1190 = vcmp.eq.f32.partialorder %v1189, 8.507059e+37
      %v1191 = vand.u32 %v918, 2147483648
      %v1192 = vor.u32 1.1754944e-38, %v1191
      %v1193 = vsel %vm1190, %v1192, %v1188
      %v1194 = vmul.f32 1.0, %v1193
      %v1195 = vrcp.pop %v919
      %v1196 = vmul.f32 %v919, %v1195
      %v1197 = vsub.f32 1.0, %v1196
      %v1198 = vmul.f32 %v1195, %v1197
      %v1199 = vadd.f32 %v1195, %v1198
      %vm1200 = vweird.f32 %v919
      %vm1201 = vweird.f32 %v1195
      %vm1202 = vmor %vm1200, %vm1201
      %v1203 = vsel %vm1202, %v1195, %v1199
      %v1204 = vand.u32 2147483647, %v919
      %vm1205 = vcmp.eq.f32.partialorder %v1204, 8.507059e+37
      %v1206 = vand.u32 %v919, 2147483648
      %v1207 = vor.u32 1.1754944e-38, %v1206
      %v1208 = vsel %vm1205, %v1207, %v1203
      %v1209 = vmul.f32 1.0, %v1208
      %v1210 = vrcp.pop %v920
      %v1211 = vmul.f32 %v920, %v1210
      %v1212 = vsub.f32 1.0, %v1211
      %v1213 = vmul.f32 %v1210, %v1212
      %v1214 = vadd.f32 %v1210, %v1213
      %vm1215 = vweird.f32 %v920
      %vm1216 = vweird.f32 %v1210
      %vm1217 = vmor %vm1215, %vm1216
      %v1218 = vsel %vm1217, %v1210, %v1214
      %v1219 = vand.u32 2147483647, %v920
      %vm1220 = vcmp.eq.f32.partialorder %v1219, 8.507059e+37
      %v1221 = vand.u32 %v920, 2147483648
      %v1222 = vor.u32 1.1754944e-38, %v1221
      %v1223 = vsel %vm1220, %v1222, %v1218
      %v1224 = vmul.f32 1.0, %v1223
      %v1225 = vrcp.pop %v921
      %v1226 = vmul.f32 %v921, %v1225
      %v1227 = vsub.f32 1.0, %v1226
      %v1228 = vmul.f32 %v1225, %v1227
      %v1229 = vadd.f32 %v1225, %v1228
      %vm1230 = vweird.f32 %v921
      %vm1231 = vweird.f32 %v1225
      %vm1232 = vmor %vm1230, %vm1231
      %v1233 = vsel %vm1232, %v1225, %v1229
      %v1234 = vand.u32 2147483647, %v921
      %vm1235 = vcmp.eq.f32.partialorder %v1234, 8.507059e+37
      %v1236 = vand.u32 %v921, 2147483648
      %v1237 = vor.u32 1.1754944e-38, %v1236
      %v1238 = vsel %vm1235, %v1237, %v1233
      %v1239 = vmul.f32 1.0, %v1238
      %v1240 = vrcp.pop %v922
      %v1241 = vmul.f32 %v922, %v1240
      %v1242 = vsub.f32 1.0, %v1241
      %v1243 = vmul.f32 %v1240, %v1242
      %v1244 = vadd.f32 %v1240, %v1243
      %vm1245 = vweird.f32 %v922
      %vm1246 = vweird.f32 %v1240
      %vm1247 = vmor %vm1245, %vm1246
      %v1248 = vsel %vm1247, %v1240, %v1244
      %v1249 = vand.u32 2147483647, %v922
      %vm1250 = vcmp.eq.f32.partialorder %v1249, 8.507059e+37
      %v1251 = vand.u32 %v922, 2147483648
      %v1252 = vor.u32 1.1754944e-38, %v1251
      %v1253 = vsel %vm1250, %v1252, %v1248
      %v1254 = vmul.f32 1.0, %v1253
      %v1255 = vrcp.pop %v923
      %v1256 = vmul.f32 %v923, %v1255
      %v1257 = vsub.f32 1.0, %v1256
      %v1258 = vmul.f32 %v1255, %v1257
      %v1259 = vadd.f32 %v1255, %v1258
      %vm1260 = vweird.f32 %v923
      %vm1261 = vweird.f32 %v1255
      %vm1262 = vmor %vm1260, %vm1261
      %v1263 = vsel %vm1262, %v1255, %v1259
      %v1264 = vand.u32 2147483647, %v923
      %vm1265 = vcmp.eq.f32.partialorder %v1264, 8.507059e+37
      %v1266 = vand.u32 %v923, 2147483648
      %v1267 = vor.u32 1.1754944e-38, %v1266
      %v1268 = vsel %vm1265, %v1267, %v1263
      %v1269 = vmul.f32 1.0, %v1268
      %v1270 = vrcp.pop %v924
      %v1271 = vmul.f32 %v924, %v1270
      %v1272 = vsub.f32 1.0, %v1271
      %v1273 = vmul.f32 %v1270, %v1272
      %v1274 = vadd.f32 %v1270, %v1273
      %vm1275 = vweird.f32 %v924
      %vm1276 = vweird.f32 %v1270
      %vm1277 = vmor %vm1275, %vm1276
      %v1278 = vsel %vm1277, %v1270, %v1274
      %v1279 = vand.u32 2147483647, %v924
      %vm1280 = vcmp.eq.f32.partialorder %v1279, 8.507059e+37
      %v1281 = vand.u32 %v924, 2147483648
      %v1282 = vor.u32 1.1754944e-38, %v1281
      %v1283 = vsel %vm1280, %v1282, %v1278
      %v1284 = vmul.f32 1.0, %v1283
      %v1285 = vmul.f32 %v805, %v939
      %v1286 = vmul.f32 %v806, %v954
      %v1287 = vmul.f32 %v807, %v969
      %v1288 = vmul.f32 %v808, %v984
      %v1289 = vmul.f32 %v809, %v999
      %v1290 = vmul.f32 %v810, %v1014
      %v1291 = vmul.f32 %v811, %v1029
      %v1292 = vmul.f32 %v812, %v1044
      %v1293 = vmul.f32 %v813, %v1059
      %v1294 = vmul.f32 %v814, %v1074
      %v1295 = vmul.f32 %v815, %v1089
      %v1296 = vmul.f32 %v816, %v1104
      %v1297 = vmul.f32 %v817, %v1119
      %v1298 = vmul.f32 %v818, %v1134
      %v1299 = vmul.f32 %v819, %v1149
      %v1300 = vmul.f32 %v820, %v1164
      %v1301 = vmul.f32 %v821, %v1179
      %v1302 = vmul.f32 %v822, %v1194
      %v1303 = vmul.f32 %v823, %v1209
      %v1304 = vmul.f32 %v824, %v1224
      %v1305 = vmul.f32 %v825, %v1239
      %v1306 = vmul.f32 %v826, %v1254
      %v1307 = vmul.f32 %v827, %v1269
      %v1308 = vmul.f32 %v828, %v1284
      %1309 = vst [vmem:[#allocation2 + $0x20] sm:$0xff] %v1285
      %1310 = vst [vmem:[#allocation2 + $0x28] sm:$0xff] %v1286
      %1311 = vst [vmem:[#allocation2 + $0x30] sm:$0xff] %v1287
      %1312 = vst [vmem:[#allocation2 + $0x38] sm:$0xff] %v1288
      %1313 = vst [vmem:[#allocation2 + $0x40] sm:$0xff] %v1289
      %1314 = vst [vmem:[#allocation2 + $0x48] sm:$0xff] %v1290
      %1315 = vst [vmem:[#allocation2 + $0x50] sm:$0xff] %v1291
      %1316 = vst [vmem:[#allocation2 + $0x58] sm:$0xff] %v1292
      %1317 = vst [vmem:[#allocation2 + $0x60] sm:$0xff] %v1293
      %1318 = vst [vmem:[#allocation2 + $0x68] sm:$0xff] %v1294
      %1319 = vst [vmem:[#allocation2 + $0x70] sm:$0xff] %v1295
      %1320 = vst [vmem:[#allocation2 + $0x78] sm:$0xff] %v1296
      %1321 = vst [vmem:[#allocation2 + $0x80] sm:$0xff] %v1297
      %1322 = vst [vmem:[#allocation2 + $0x88] sm:$0xff] %v1298
      %1323 = vst [vmem:[#allocation2 + $0x90] sm:$0xff] %v1299
      %1324 = vst [vmem:[#allocation2 + $0x98] sm:$0xff] %v1300
      %1325 = vst [vmem:[#allocation2 + $0xa0] sm:$0xff] %v1301
      %1326 = vst [vmem:[#allocation2 + $0xa8] sm:$0xff] %v1302
      %1327 = vst [vmem:[#allocation2 + $0xb0] sm:$0xff] %v1303
      %1328 = vst [vmem:[#allocation2 + $0xb8] sm:$0xff] %v1304
      %1329 = vst [vmem:[#allocation2 + $0xc0] sm:$0xff] %v1305
      %1330 = vst [vmem:[#allocation2 + $0xc8] sm:$0xff] %v1306
      %1331 = vst [vmem:[#allocation2 + $0xd0] sm:$0xff] %v1307
      %1332 = vst [vmem:[#allocation2 + $0xd8] sm:$0xff] %v1308
      %v1333 = vld [vmem:[%s584] sm:$0xff]
      %v1334 = vld [vmem:[%s584 + $0x8] sm:$0xff]
      %v1335 = vld [vmem:[%s584 + $0x10] sm:$0xff]
      %v1336 = vld [vmem:[%s630] sm:$0xff]
      %v1337 = vld [vmem:[%s630 + $0x8] sm:$0xff]
      %v1338 = vld [vmem:[%s630 + $0x10] sm:$0xff]
      %1339 = vmatpush.msra.mxu0 %v679
      %1340 = vmatpush.msra.mxu0 %v678
      %1341 = vmatpush.msra.mxu0 %v677
      %1342 = vmatpush.msra.mxu0 %v676
      %1343 = vmatpush.msra.mxu0 %v675
      %1344 = vmatpush.msra.mxu0 %v674
      %1345 = vmatpush.msra.mxu0 %v673
      %1346 = vmatpush.msra.mxu0 %v672
      %1347 = vmatpush.msra.mxu0 %v671
      %1348 = vmatpush.msra.mxu0 %v670
      %1349 = vmatpush.msra.mxu0 %v669
      %1350 = vmatpush.msra.mxu0 %v668
      %1351 = vmatpush.msra.mxu0 %v667
      %1352 = vmatpush.msra.mxu0 %v666
      %1353 = vmatpush.msra.mxu0 %v665
      %1354 = vmatpush.msra.mxu0 %v664
      %1355 = vmatmul.f32.gmra.mxu0 %v1333
      %v1356 = vpop.f32.mrf.mxu0
      %v1357 = vadd.f32 %v1336, %v1356
      %1358 = vmatmul.f32.gmra.mxu0 %v1334
      %v1359 = vpop.f32.mrf.mxu0
      %v1360 = vadd.f32 %v1337, %v1359
      %1361 = vmatmul.f32.gmra.mxu0 %v1335
      %v1362 = vpop.f32.mrf.mxu0
      %v1363 = vadd.f32 %v1338, %v1362
      %1364 = vdwg.mxu0
      %v1365 = vxor.u32 %v1357, 2147483648
      %v1366 = vxor.u32 %v1360, 2147483648
      %v1367 = vxor.u32 %v1363, 2147483648
      %v1368 = vmul.f32 %v1365, 1.442695
      %v1369 = vpow.pop %v1368
      %v1370 = vmul.f32 %v1366, 1.442695
      %v1371 = vpow.pop %v1370
      %v1372 = vmul.f32 %v1367, 1.442695
      %v1373 = vpow.pop %v1372
      %v1374 = vadd.f32 %v1369, 1.0
      %v1375 = vadd.f32 %v1371, 1.0
      %v1376 = vadd.f32 %v1373, 1.0
      %v1377 = vrcp.pop %v1374
      %v1378 = vmul.f32 %v1374, %v1377
      %v1379 = vsub.f32 1.0, %v1378
      %v1380 = vmul.f32 %v1377, %v1379
      %v1381 = vadd.f32 %v1377, %v1380
      %vm1382 = vweird.f32 %v1374
      %vm1383 = vweird.f32 %v1377
      %vm1384 = vmor %vm1382, %vm1383
      %v1385 = vsel %vm1384, %v1377, %v1381
      %v1386 = vand.u32 2147483647, %v1374
      %vm1387 = vcmp.eq.f32.partialorder %v1386, 8.507059e+37
      %v1388 = vand.u32 %v1374, 2147483648
      %v1389 = vor.u32 1.1754944e-38, %v1388
      %v1390 = vsel %vm1387, %v1389, %v1385
      %v1391 = vmul.f32 1.0, %v1390
      %v1392 = vrcp.pop %v1375
      %v1393 = vmul.f32 %v1375, %v1392
      %v1394 = vsub.f32 1.0, %v1393
      %v1395 = vmul.f32 %v1392, %v1394
      %v1396 = vadd.f32 %v1392, %v1395
      %vm1397 = vweird.f32 %v1375
      %vm1398 = vweird.f32 %v1392
      %vm1399 = vmor %vm1397, %vm1398
      %v1400 = vsel %vm1399, %v1392, %v1396
      %v1401 = vand.u32 2147483647, %v1375
      %vm1402 = vcmp.eq.f32.partialorder %v1401, 8.507059e+37
      %v1403 = vand.u32 %v1375, 2147483648
      %v1404 = vor.u32 1.1754944e-38, %v1403
      %v1405 = vsel %vm1402, %v1404, %v1400
      %v1406 = vmul.f32 1.0, %v1405
      %v1407 = vrcp.pop %v1376
      %v1408 = vmul.f32 %v1376, %v1407
      %v1409 = vsub.f32 1.0, %v1408
      %v1410 = vmul.f32 %v1407, %v1409
      %v1411 = vadd.f32 %v1407, %v1410
      %vm1412 = vweird.f32 %v1376
      %vm1413 = vweird.f32 %v1407
      %vm1414 = vmor %vm1412, %vm1413
      %v1415 = vsel %vm1414, %v1407, %v1411
      %v1416 = vand.u32 2147483647, %v1376
      %vm1417 = vcmp.eq.f32.partialorder %v1416, 8.507059e+37
      %v1418 = vand.u32 %v1376, 2147483648
      %v1419 = vor.u32 1.1754944e-38, %v1418
      %v1420 = vsel %vm1417, %v1419, %v1415
      %v1421 = vmul.f32 1.0, %v1420
      %v1422 = vmul.f32 %v1357, %v1391
      %v1423 = vmul.f32 %v1360, %v1406
      %v1424 = vmul.f32 %v1363, %v1421
      %p1425 = scmp.gt.s32.totalorder %s25, 0
      %s1426 = scalar_select %p1425, 1, 0
      %s1427 = scvt.s32.f32 %s1426
      %v1428 = vstv %s1427
      %v1429 = vmul.f32 %v1422, %v1428
      %v1430 = vmul.f32 %v1423, %v1428
      %v1431 = vmul.f32 %v1424, %v1428
      %1432 = vst [vmem:[#allocation2 + $0x8] sm:$0xff] %v1429
      %1433 = vst [vmem:[#allocation2 + $0x10] sm:$0xff] %v1430
      %1434 = vst [vmem:[#allocation2 + $0x18] sm:$0xff] %v1431
      %v1435 = vld [vmem:[%s602] sm:$0xff]
      %v1436 = vld [vmem:[%s602 + $0x8] sm:$0xff]
      %v1437 = vld [vmem:[%s602 + $0x10] sm:$0xff]
      %v1438 = vld [vmem:[%s648] sm:$0xff]
      %v1439 = vld [vmem:[%s648 + $0x8] sm:$0xff]
      %v1440 = vld [vmem:[%s648 + $0x10] sm:$0xff]
      %1441 = vmatpush.msra.mxu0 %v679
      %1442 = vmatpush.msra.mxu0 %v678
      %1443 = vmatpush.msra.mxu0 %v677
      %1444 = vmatpush.msra.mxu0 %v676
      %1445 = vmatpush.msra.mxu0 %v675
      %1446 = vmatpush.msra.mxu0 %v674
      %1447 = vmatpush.msra.mxu0 %v673
      %1448 = vmatpush.msra.mxu0 %v672
      %1449 = vmatpush.msra.mxu0 %v671
      %1450 = vmatpush.msra.mxu0 %v670
      %1451 = vmatpush.msra.mxu0 %v669
      %1452 = vmatpush.msra.mxu0 %v668
      %1453 = vmatpush.msra.mxu0 %v667
      %1454 = vmatpush.msra.mxu0 %v666
      %1455 = vmatpush.msra.mxu0 %v665
      %1456 = vmatpush.msra.mxu0 %v664
      %1457 = vmatmul.f32.gmra.mxu0 %v1435
      %v1458 = vpop.f32.mrf.mxu0
      %v1459 = vadd.f32 %v1438, %v1458
      %1460 = vmatmul.f32.gmra.mxu0 %v1436
      %v1461 = vpop.f32.mrf.mxu0
      %v1462 = vadd.f32 %v1439, %v1461
      %1463 = vmatmul.f32.gmra.mxu0 %v1437
      %v1464 = vpop.f32.mrf.mxu0
      %v1465 = vadd.f32 %v1440, %v1464
      %1466 = vdwg.mxu0
      %v1467 = vxor.u32 %v1459, 2147483648
      %v1468 = vxor.u32 %v1462, 2147483648
      %v1469 = vxor.u32 %v1465, 2147483648
      %v1470 = vmul.f32 %v1467, 1.442695
      %v1471 = vpow.pop %v1470
      %v1472 = vmul.f32 %v1468, 1.442695
      %v1473 = vpow.pop %v1472
      %v1474 = vmul.f32 %v1469, 1.442695
      %v1475 = vpow.pop %v1474
      %v1476 = vadd.f32 %v1471, 1.0
      %v1477 = vadd.f32 %v1473, 1.0
      %v1478 = vadd.f32 %v1475, 1.0
      %v1479 = vrcp.pop %v1476
      %v1480 = vmul.f32 %v1476, %v1479
      %v1481 = vsub.f32 1.0, %v1480
      %v1482 = vmul.f32 %v1479, %v1481
      %v1483 = vadd.f32 %v1479, %v1482
      %vm1484 = vweird.f32 %v1476
      %vm1485 = vweird.f32 %v1479
      %vm1486 = vmor %vm1484, %vm1485
      %v1487 = vsel %vm1486, %v1479, %v1483
      %v1488 = vand.u32 2147483647, %v1476
      %vm1489 = vcmp.eq.f32.partialorder %v1488, 8.507059e+37
      %v1490 = vand.u32 %v1476, 2147483648
      %v1491 = vor.u32 1.1754944e-38, %v1490
      %v1492 = vsel %vm1489, %v1491, %v1487
      %v1493 = vmul.f32 1.0, %v1492
      %v1494 = vrcp.pop %v1477
      %v1495 = vmul.f32 %v1477, %v1494
      %v1496 = vsub.f32 1.0, %v1495
      %v1497 = vmul.f32 %v1494, %v1496
      %v1498 = vadd.f32 %v1494, %v1497
      %vm1499 = vweird.f32 %v1477
      %vm1500 = vweird.f32 %v1494
      %vm1501 = vmor %vm1499, %vm1500
      %v1502 = vsel %vm1501, %v1494, %v1498
      %v1503 = vand.u32 2147483647, %v1477
      %vm1504 = vcmp.eq.f32.partialorder %v1503, 8.507059e+37
      %v1505 = vand.u32 %v1477, 2147483648
      %v1506 = vor.u32 1.1754944e-38, %v1505
      %v1507 = vsel %vm1504, %v1506, %v1502
      %v1508 = vmul.f32 1.0, %v1507
      %v1509 = vrcp.pop %v1478
      %v1510 = vmul.f32 %v1478, %v1509
      %v1511 = vsub.f32 1.0, %v1510
      %v1512 = vmul.f32 %v1509, %v1511
      %v1513 = vadd.f32 %v1509, %v1512
      %vm1514 = vweird.f32 %v1478
      %vm1515 = vweird.f32 %v1509
      %vm1516 = vmor %vm1514, %vm1515
      %v1517 = vsel %vm1516, %v1509, %v1513
      %v1518 = vand.u32 2147483647, %v1478
      %vm1519 = vcmp.eq.f32.partialorder %v1518, 8.507059e+37
      %v1520 = vand.u32 %v1478, 2147483648
      %v1521 = vor.u32 1.1754944e-38, %v1520
      %v1522 = vsel %vm1519, %v1521, %v1517
      %v1523 = vmul.f32 1.0, %v1522
      %v1524 = vmul.f32 %v1459, %v1493
      %v1525 = vmul.f32 %v1462, %v1508
      %v1526 = vmul.f32 %v1465, %v1523
      %p1527 = scmp.lt.s32.totalorder %s25, 1
      %s1528 = scalar_select %p1527, 1, 0
      %s1529 = scvt.s32.f32 %s1528
      %v1530 = vstv %s1529
      %v1531 = vmul.f32 %v1524, %v1530
      %v1532 = vmul.f32 %v1525, %v1530
      %v1533 = vmul.f32 %v1526, %v1530
      %1534 = vst [vmem:[#allocation2 + $0xe0] sm:$0xff] %v1531
      %1535 = vst [vmem:[#allocation2 + $0xe8] sm:$0xff] %v1532
      %1536 = vst [vmem:[#allocation2 + $0xf0] sm:$0xff] %v1533
      %v1537 = vld [vmem:[#allocation2] sm:$0xff]
      %v1538 = vld [vmem:[#allocation2 + $0x8] sm:$0xff]
      %v1539 = vld [vmem:[#allocation2 + $0x10] sm:$0xff]
      %v1540 = vld [vmem:[#allocation2 + $0x18] sm:$0xff]
      %v1541 = vld [vmem:[#allocation2 + $0x20] sm:$0xff]
      %v1542 = vld [vmem:[#allocation2 + $0x28] sm:$0xff]
      %v1543 = vld [vmem:[#allocation2 + $0x30] sm:$0xff]
      %v1544 = vld [vmem:[#allocation2 + $0x38] sm:$0xff]
      %v1545 = vld [vmem:[#allocation2 + $0x40] sm:$0xff]
      %v1546 = vld [vmem:[#allocation2 + $0x48] sm:$0xff]
      %v1547 = vld [vmem:[#allocation2 + $0x50] sm:$0xff]
      %v1548 = vld [vmem:[#allocation2 + $0x58] sm:$0xff]
      %v1549 = vld [vmem:[#allocation2 + $0x60] sm:$0xff]
      %v1550 = vld [vmem:[#allocation2 + $0x68] sm:$0xff]
      %v1551 = vld [vmem:[#allocation2 + $0x70] sm:$0xff]
      %v1552 = vld [vmem:[#allocation2 + $0x78] sm:$0xff]
      %v1553 = vld [vmem:[#allocation2 + $0x80] sm:$0xff]
      %v1554 = vld [vmem:[#allocation2 + $0x88] sm:$0xff]
      %v1555 = vld [vmem:[#allocation2 + $0x90] sm:$0xff]
      %v1556 = vld [vmem:[#allocation2 + $0x98] sm:$0xff]
      %v1557 = vld [vmem:[#allocation2 + $0xa0] sm:$0xff]
      %v1558 = vld [vmem:[#allocation2 + $0xa8] sm:$0xff]
      %v1559 = vld [vmem:[#allocation2 + $0xb0] sm:$0xff]
      %v1560 = vld [vmem:[#allocation2 + $0xb8] sm:$0xff]
      %v1561 = vld [vmem:[#allocation2 + $0xc0] sm:$0xff]
      %v1562 = vld [vmem:[#allocation2 + $0xc8] sm:$0xff]
      %v1563 = vld [vmem:[%s7] sm:$0xff]
      %v1564 = vld [vmem:[%s7 + $0x8] sm:$0xff]
      %v1565 = vld [vmem:[%s7 + $0x10] sm:$0xff]
      %v1566 = vld [vmem:[%s7 + $0x18] sm:$0xff]
      %v1567 = vld [vmem:[%s7 + $0x20] sm:$0xff]
      %v1568 = vld [vmem:[%s7 + $0x28] sm:$0xff]
      %v1569 = vld [vmem:[%s7 + $0x30] sm:$0xff]
      %v1570 = vld [vmem:[%s7 + $0x38] sm:$0xff]
      %v1571 = vld [vmem:[%s7 + $0x40] sm:$0xff]
      %v1572 = vld [vmem:[%s7 + $0x48] sm:$0xff]
      %v1573 = vld [vmem:[%s7 + $0x50] sm:$0xff]
      %v1574 = vld [vmem:[%s7 + $0x58] sm:$0xff]
      %v1575 = vld [vmem:[%s7 + $0x60] sm:$0xff]
      %v1576 = vld [vmem:[%s7 + $0x68] sm:$0xff]
      %v1577 = vld [vmem:[%s7 + $0x70] sm:$0xff]
      %v1578 = vld [vmem:[%s7 + $0x78] sm:$0xff]
      %s1579 = scalar_lea.vmem %s7, 128
      %v1580 = vld [vmem:[%s1579] sm:$0xff]
      %v1581 = vld [vmem:[%s1579 + $0x8] sm:$0xff]
      %v1582 = vld [vmem:[%s1579 + $0x10] sm:$0xff]
      %v1583 = vld [vmem:[%s1579 + $0x18] sm:$0xff]
      %v1584 = vld [vmem:[%s1579 + $0x20] sm:$0xff]
      %v1585 = vld [vmem:[%s1579 + $0x28] sm:$0xff]
      %v1586 = vld [vmem:[%s1579 + $0x30] sm:$0xff]
      %v1587 = vld [vmem:[%s1579 + $0x38] sm:$0xff]
      %v1588 = vld [vmem:[%s1579 + $0x40] sm:$0xff]
      %v1589 = vld [vmem:[%s1579 + $0x48] sm:$0xff]
      %v1590 = vld [vmem:[%s1579 + $0x50] sm:$0xff]
      %v1591 = vld [vmem:[%s1579 + $0x58] sm:$0xff]
      %v1592 = vld [vmem:[%s1579 + $0x60] sm:$0xff]
      %v1593 = vld [vmem:[%s1579 + $0x68] sm:$0xff]
      %v1594 = vld [vmem:[%s1579 + $0x70] sm:$0xff]
      %v1595 = vld [vmem:[%s1579 + $0x78] sm:$0xff]
      %1596 = vmatpush.msra.mxu0 %v1595
      %1597 = vmatpush.msra.mxu0 %v1594
      %1598 = vmatpush.msra.mxu0 %v1593
      %1599 = vmatpush.msra.mxu0 %v1592
      %1600 = vmatpush.msra.mxu0 %v1591
      %1601 = vmatpush.msra.mxu0 %v1590
      %1602 = vmatpush.msra.mxu0 %v1589
      %1603 = vmatpush.msra.mxu0 %v1588
      %1604 = vmatpush.msra.mxu0 %v1587
      %1605 = vmatpush.msra.mxu0 %v1586
      %1606 = vmatpush.msra.mxu0 %v1585
      %1607 = vmatpush.msra.mxu0 %v1584
      %1608 = vmatpush.msra.mxu0 %v1583
      %1609 = vmatpush.msra.mxu0 %v1582
      %1610 = vmatpush.msra.mxu0 %v1581
      %1611 = vmatpush.msra.mxu0 %v1580
      %1612 = vmatmul.f32.gmra.mxu0 %v1538
      %v1613 = vpop.f32.mrf.mxu0
      %v1614 = vadd.f32 0.0, %v1613
      %1615 = vmatmul.f32.gmra.mxu0 %v1539
      %v1616 = vpop.f32.mrf.mxu0
      %v1617 = vadd.f32 0.0, %v1616
      %1618 = vmatmul.f32.gmra.mxu0 %v1540
      %v1619 = vpop.f32.mrf.mxu0
      %v1620 = vadd.f32 0.0, %v1619
      %1621 = vmatmul.f32.gmra.mxu0 %v1541
      %v1622 = vpop.f32.mrf.mxu0
      %v1623 = vadd.f32 0.0, %v1622
      %1624 = vmatmul.f32.gmra.mxu0 %v1542
      %v1625 = vpop.f32.mrf.mxu0
      %v1626 = vadd.f32 0.0, %v1625
      %1627 = vmatmul.f32.gmra.mxu0 %v1543
      %v1628 = vpop.f32.mrf.mxu0
      %v1629 = vadd.f32 0.0, %v1628
      %1630 = vmatmul.f32.gmra.mxu0 %v1544
      %v1631 = vpop.f32.mrf.mxu0
      %v1632 = vadd.f32 0.0, %v1631
      %1633 = vmatmul.f32.gmra.mxu0 %v1545
      %v1634 = vpop.f32.mrf.mxu0
      %v1635 = vadd.f32 0.0, %v1634
      %1636 = vmatmul.f32.gmra.mxu0 %v1546
      %v1637 = vpop.f32.mrf.mxu0
      %v1638 = vadd.f32 0.0, %v1637
      %1639 = vmatmul.f32.gmra.mxu0 %v1547
      %v1640 = vpop.f32.mrf.mxu0
      %v1641 = vadd.f32 0.0, %v1640
      %1642 = vmatmul.f32.gmra.mxu0 %v1548
      %v1643 = vpop.f32.mrf.mxu0
      %v1644 = vadd.f32 0.0, %v1643
      %1645 = vmatmul.f32.gmra.mxu0 %v1549
      %v1646 = vpop.f32.mrf.mxu0
      %v1647 = vadd.f32 0.0, %v1646
      %1648 = vmatmul.f32.gmra.mxu0 %v1550
      %v1649 = vpop.f32.mrf.mxu0
      %v1650 = vadd.f32 0.0, %v1649
      %1651 = vmatmul.f32.gmra.mxu0 %v1551
      %v1652 = vpop.f32.mrf.mxu0
      %v1653 = vadd.f32 0.0, %v1652
      %1654 = vmatmul.f32.gmra.mxu0 %v1552
      %v1655 = vpop.f32.mrf.mxu0
      %v1656 = vadd.f32 0.0, %v1655
      %1657 = vmatmul.f32.gmra.mxu0 %v1553
      %v1658 = vpop.f32.mrf.mxu0
      %v1659 = vadd.f32 0.0, %v1658
      %1660 = vmatmul.f32.gmra.mxu0 %v1554
      %v1661 = vpop.f32.mrf.mxu0
      %v1662 = vadd.f32 0.0, %v1661
      %1663 = vmatmul.f32.gmra.mxu0 %v1555
      %v1664 = vpop.f32.mrf.mxu0
      %v1665 = vadd.f32 0.0, %v1664
      %1666 = vmatmul.f32.gmra.mxu0 %v1556
      %v1667 = vpop.f32.mrf.mxu0
      %v1668 = vadd.f32 0.0, %v1667
      %1669 = vmatmul.f32.gmra.mxu0 %v1557
      %v1670 = vpop.f32.mrf.mxu0
      %v1671 = vadd.f32 0.0, %v1670
      %1672 = vmatmul.f32.gmra.mxu0 %v1558
      %v1673 = vpop.f32.mrf.mxu0
      %v1674 = vadd.f32 0.0, %v1673
      %1675 = vmatmul.f32.gmra.mxu0 %v1559
      %v1676 = vpop.f32.mrf.mxu0
      %v1677 = vadd.f32 0.0, %v1676
      %1678 = vmatmul.f32.gmra.mxu0 %v1560
      %v1679 = vpop.f32.mrf.mxu0
      %v1680 = vadd.f32 0.0, %v1679
      %1681 = vmatmul.f32.gmra.mxu0 %v1561
      %v1682 = vpop.f32.mrf.mxu0
      %v1683 = vadd.f32 0.0, %v1682
      %1684 = vdwg.mxu0
      %vm1710 = vcmask 1040384
      %v1711 = vrot.slane %v1537, 7
      %v1712 = vrot.slane %v1538, 7
      %v1713 = vsel %vm1710, %v1711, %v1712
      %v1714 = vrot.slane %v1539, 7
      %v1715 = vsel %vm1710, %v1712, %v1714
      %v1716 = vrot.slane %v1540, 7
      %v1717 = vsel %vm1710, %v1714, %v1716
      %v1718 = vrot.slane %v1541, 7
      %v1719 = vsel %vm1710, %v1716, %v1718
      %v1720 = vrot.slane %v1542, 7
      %v1721 = vsel %vm1710, %v1718, %v1720
      %v1722 = vrot.slane %v1543, 7
      %v1723 = vsel %vm1710, %v1720, %v1722
      %v1724 = vrot.slane %v1544, 7
      %v1725 = vsel %vm1710, %v1722, %v1724
      %v1726 = vrot.slane %v1545, 7
      %v1727 = vsel %vm1710, %v1724, %v1726
      %v1728 = vrot.slane %v1546, 7
      %v1729 = vsel %vm1710, %v1726, %v1728
      %v1730 = vrot.slane %v1547, 7
      %v1731 = vsel %vm1710, %v1728, %v1730
      %v1732 = vrot.slane %v1548, 7
      %v1733 = vsel %vm1710, %v1730, %v1732
      %v1734 = vrot.slane %v1549, 7
      %v1735 = vsel %vm1710, %v1732, %v1734
      %v1736 = vrot.slane %v1550, 7
      %v1737 = vsel %vm1710, %v1734, %v1736
      %v1738 = vrot.slane %v1551, 7
      %v1739 = vsel %vm1710, %v1736, %v1738
      %v1740 = vrot.slane %v1552, 7
      %v1741 = vsel %vm1710, %v1738, %v1740
      %v1742 = vrot.slane %v1553, 7
      %v1743 = vsel %vm1710, %v1740, %v1742
      %v1744 = vrot.slane %v1554, 7
      %v1745 = vsel %vm1710, %v1742, %v1744
      %v1746 = vrot.slane %v1555, 7
      %v1747 = vsel %vm1710, %v1744, %v1746
      %v1748 = vrot.slane %v1556, 7
      %v1749 = vsel %vm1710, %v1746, %v1748
      %v1750 = vrot.slane %v1557, 7
      %v1751 = vsel %vm1710, %v1748, %v1750
      %v1752 = vrot.slane %v1558, 7
      %v1753 = vsel %vm1710, %v1750, %v1752
      %v1754 = vrot.slane %v1559, 7
      %v1755 = vsel %vm1710, %v1752, %v1754
      %v1756 = vrot.slane %v1560, 7
      %v1757 = vsel %vm1710, %v1754, %v1756
      %v1758 = vrot.slane %v1561, 7
      %v1759 = vsel %vm1710, %v1756, %v1758
      %1784 = vmatpush.msra.mxu0 %v1578
      %1785 = vmatpush.msra.mxu0 %v1577
      %1786 = vmatpush.msra.mxu0 %v1576
      %1787 = vmatpush.msra.mxu0 %v1575
      %1788 = vmatpush.msra.mxu0 %v1574
      %1789 = vmatpush.msra.mxu0 %v1573
      %1790 = vmatpush.msra.mxu0 %v1572
      %1791 = vmatpush.msra.mxu0 %v1571
      %1792 = vmatpush.msra.mxu0 %v1570
      %1793 = vmatpush.msra.mxu0 %v1569
      %1794 = vmatpush.msra.mxu0 %v1568
      %1795 = vmatpush.msra.mxu0 %v1567
      %1796 = vmatpush.msra.mxu0 %v1566
      %1797 = vmatpush.msra.mxu0 %v1565
      %1798 = vmatpush.msra.mxu0 %v1564
      %1799 = vmatpush.msra.mxu0 %v1563
      %1800 = vmatmul.f32.gmra.mxu0 %v1713
      %v1801 = vpop.f32.mrf.mxu0
      %v1802 = vadd.f32 %v1614, %v1801
      %1803 = vmatmul.f32.gmra.mxu0 %v1715
      %v1804 = vpop.f32.mrf.mxu0
      %v1805 = vadd.f32 %v1617, %v1804
      %1806 = vmatmul.f32.gmra.mxu0 %v1717
      %v1807 = vpop.f32.mrf.mxu0
      %v1808 = vadd.f32 %v1620, %v1807
      %1809 = vmatmul.f32.gmra.mxu0 %v1719
      %v1810 = vpop.f32.mrf.mxu0
      %v1811 = vadd.f32 %v1623, %v1810
      %1812 = vmatmul.f32.gmra.mxu0 %v1721
      %v1813 = vpop.f32.mrf.mxu0
      %v1814 = vadd.f32 %v1626, %v1813
      %1815 = vmatmul.f32.gmra.mxu0 %v1723
      %v1816 = vpop.f32.mrf.mxu0
      %v1817 = vadd.f32 %v1629, %v1816
      %1818 = vmatmul.f32.gmra.mxu0 %v1725
      %v1819 = vpop.f32.mrf.mxu0
      %v1820 = vadd.f32 %v1632, %v1819
      %1821 = vmatmul.f32.gmra.mxu0 %v1727
      %v1822 = vpop.f32.mrf.mxu0
      %v1823 = vadd.f32 %v1635, %v1822
      %1824 = vmatmul.f32.gmra.mxu0 %v1729
      %v1825 = vpop.f32.mrf.mxu0
      %v1826 = vadd.f32 %v1638, %v1825
      %1827 = vmatmul.f32.gmra.mxu0 %v1731
      %v1828 = vpop.f32.mrf.mxu0
      %v1829 = vadd.f32 %v1641, %v1828
      %1830 = vmatmul.f32.gmra.mxu0 %v1733
      %v1831 = vpop.f32.mrf.mxu0
      %v1832 = vadd.f32 %v1644, %v1831
      %1833 = vmatmul.f32.gmra.mxu0 %v1735
      %v1834 = vpop.f32.mrf.mxu0
      %v1835 = vadd.f32 %v1647, %v1834
      %1836 = vmatmul.f32.gmra.mxu0 %v1737
      %v1837 = vpop.f32.mrf.mxu0
      %v1838 = vadd.f32 %v1650, %v1837
      %1839 = vmatmul.f32.gmra.mxu0 %v1739
      %v1840 = vpop.f32.mrf.mxu0
      %v1841 = vadd.f32 %v1653, %v1840
      %1842 = vmatmul.f32.gmra.mxu0 %v1741
      %v1843 = vpop.f32.mrf.mxu0
      %v1844 = vadd.f32 %v1656, %v1843
      %1845 = vmatmul.f32.gmra.mxu0 %v1743
      %v1846 = vpop.f32.mrf.mxu0
      %v1847 = vadd.f32 %v1659, %v1846
      %1848 = vmatmul.f32.gmra.mxu0 %v1745
      %v1849 = vpop.f32.mrf.mxu0
      %v1850 = vadd.f32 %v1662, %v1849
      %1851 = vmatmul.f32.gmra.mxu0 %v1747
      %v1852 = vpop.f32.mrf.mxu0
      %v1853 = vadd.f32 %v1665, %v1852
      %1854 = vmatmul.f32.gmra.mxu0 %v1749
      %v1855 = vpop.f32.mrf.mxu0
      %v1856 = vadd.f32 %v1668, %v1855
      %1857 = vmatmul.f32.gmra.mxu0 %v1751
      %v1858 = vpop.f32.mrf.mxu0
      %v1859 = vadd.f32 %v1671, %v1858
      %1860 = vmatmul.f32.gmra.mxu0 %v1753
      %v1861 = vpop.f32.mrf.mxu0
      %v1862 = vadd.f32 %v1674, %v1861
      %1863 = vmatmul.f32.gmra.mxu0 %v1755
      %v1864 = vpop.f32.mrf.mxu0
      %v1865 = vadd.f32 %v1677, %v1864
      %1866 = vmatmul.f32.gmra.mxu0 %v1757
      %v1867 = vpop.f32.mrf.mxu0
      %v1868 = vadd.f32 %v1680, %v1867
      %1869 = vmatmul.f32.gmra.mxu0 %v1759
      %v1870 = vpop.f32.mrf.mxu0
      %v1871 = vadd.f32 %v1683, %v1870
      %1872 = vdwg.mxu0
      %s1873 = scalar_lea.vmem %s7, 256
      %v1874 = vld [vmem:[%s1873] sm:$0xff]
      %v1875 = vld [vmem:[%s1873 + $0x8] sm:$0xff]
      %v1876 = vld [vmem:[%s1873 + $0x10] sm:$0xff]
      %v1877 = vld [vmem:[%s1873 + $0x18] sm:$0xff]
      %v1878 = vld [vmem:[%s1873 + $0x20] sm:$0xff]
      %v1879 = vld [vmem:[%s1873 + $0x28] sm:$0xff]
      %v1880 = vld [vmem:[%s1873 + $0x30] sm:$0xff]
      %v1881 = vld [vmem:[%s1873 + $0x38] sm:$0xff]
      %v1882 = vld [vmem:[%s1873 + $0x40] sm:$0xff]
      %v1883 = vld [vmem:[%s1873 + $0x48] sm:$0xff]
      %v1884 = vld [vmem:[%s1873 + $0x50] sm:$0xff]
      %v1885 = vld [vmem:[%s1873 + $0x58] sm:$0xff]
      %v1886 = vld [vmem:[%s1873 + $0x60] sm:$0xff]
      %v1887 = vld [vmem:[%s1873 + $0x68] sm:$0xff]
      %v1888 = vld [vmem:[%s1873 + $0x70] sm:$0xff]
      %v1889 = vld [vmem:[%s1873 + $0x78] sm:$0xff]
      %vm1891 = vcmask 1046528
      %v1892 = vrot.slane %v1538, 1
      %v1893 = vrot.slane %v1539, 1
      %v1894 = vsel %vm1891, %v1892, %v1893
      %v1895 = vrot.slane %v1540, 1
      %v1896 = vsel %vm1891, %v1893, %v1895
      %v1897 = vrot.slane %v1541, 1
      %v1898 = vsel %vm1891, %v1895, %v1897
      %v1899 = vrot.slane %v1542, 1
      %v1900 = vsel %vm1891, %v1897, %v1899
      %v1901 = vrot.slane %v1543, 1
      %v1902 = vsel %vm1891, %v1899, %v1901
      %v1903 = vrot.slane %v1544, 1
      %v1904 = vsel %vm1891, %v1901, %v1903
      %v1905 = vrot.slane %v1545, 1
      %v1906 = vsel %vm1891, %v1903, %v1905
      %v1907 = vrot.slane %v1546, 1
      %v1908 = vsel %vm1891, %v1905, %v1907
      %v1909 = vrot.slane %v1547, 1
      %v1910 = vsel %vm1891, %v1907, %v1909
      %v1911 = vrot.slane %v1548, 1
      %v1912 = vsel %vm1891, %v1909, %v1911
      %v1913 = vrot.slane %v1549, 1
      %v1914 = vsel %vm1891, %v1911, %v1913
      %v1915 = vrot.slane %v1550, 1
      %v1916 = vsel %vm1891, %v1913, %v1915
      %v1917 = vrot.slane %v1551, 1
      %v1918 = vsel %vm1891, %v1915, %v1917
      %v1919 = vrot.slane %v1552, 1
      %v1920 = vsel %vm1891, %v1917, %v1919
      %v1921 = vrot.slane %v1553, 1
      %v1922 = vsel %vm1891, %v1919, %v1921
      %v1923 = vrot.slane %v1554, 1
      %v1924 = vsel %vm1891, %v1921, %v1923
      %v1925 = vrot.slane %v1555, 1
      %v1926 = vsel %vm1891, %v1923, %v1925
      %v1927 = vrot.slane %v1556, 1
      %v1928 = vsel %vm1891, %v1925, %v1927
      %v1929 = vrot.slane %v1557, 1
      %v1930 = vsel %vm1891, %v1927, %v1929
      %v1931 = vrot.slane %v1558, 1
      %v1932 = vsel %vm1891, %v1929, %v1931
      %v1933 = vrot.slane %v1559, 1
      %v1934 = vsel %vm1891, %v1931, %v1933
      %v1935 = vrot.slane %v1560, 1
      %v1936 = vsel %vm1891, %v1933, %v1935
      %v1937 = vrot.slane %v1561, 1
      %v1938 = vsel %vm1891, %v1935, %v1937
      %v1939 = vrot.slane %v1562, 1
      %v1940 = vsel %vm1891, %v1937, %v1939
      %1965 = vmatpush.msra.mxu0 %v1889
      %1966 = vmatpush.msra.mxu0 %v1888
      %1967 = vmatpush.msra.mxu0 %v1887
      %1968 = vmatpush.msra.mxu0 %v1886
      %1969 = vmatpush.msra.mxu0 %v1885
      %1970 = vmatpush.msra.mxu0 %v1884
      %1971 = vmatpush.msra.mxu0 %v1883
      %1972 = vmatpush.msra.mxu0 %v1882
      %1973 = vmatpush.msra.mxu0 %v1881
      %1974 = vmatpush.msra.mxu0 %v1880
      %1975 = vmatpush.msra.mxu0 %v1879
      %1976 = vmatpush.msra.mxu0 %v1878
      %1977 = vmatpush.msra.mxu0 %v1877
      %1978 = vmatpush.msra.mxu0 %v1876
      %1979 = vmatpush.msra.mxu0 %v1875
      %1980 = vmatpush.msra.mxu0 %v1874
      %1981 = vmatmul.f32.gmra.mxu0 %v1894
      %v1982 = vpop.f32.mrf.mxu0
      %v1983 = vadd.f32 0.0, %v1982
      %1984 = vmatmul.f32.gmra.mxu0 %v1896
      %v1985 = vpop.f32.mrf.mxu0
      %v1986 = vadd.f32 0.0, %v1985
      %1987 = vmatmul.f32.gmra.mxu0 %v1898
      %v1988 = vpop.f32.mrf.mxu0
      %v1989 = vadd.f32 0.0, %v1988
      %1990 = vmatmul.f32.gmra.mxu0 %v1900
      %v1991 = vpop.f32.mrf.mxu0
      %v1992 = vadd.f32 0.0, %v1991
      %1993 = vmatmul.f32.gmra.mxu0 %v1902
      %v1994 = vpop.f32.mrf.mxu0
      %v1995 = vadd.f32 0.0, %v1994
      %1996 = vmatmul.f32.gmra.mxu0 %v1904
      %v1997 = vpop.f32.mrf.mxu0
      %v1998 = vadd.f32 0.0, %v1997
      %1999 = vmatmul.f32.gmra.mxu0 %v1906
      %v2000 = vpop.f32.mrf.mxu0
      %v2001 = vadd.f32 0.0, %v2000
      %2002 = vmatmul.f32.gmra.mxu0 %v1908
      %v2003 = vpop.f32.mrf.mxu0
      %v2004 = vadd.f32 0.0, %v2003
      %2005 = vmatmul.f32.gmra.mxu0 %v1910
      %v2006 = vpop.f32.mrf.mxu0
      %v2007 = vadd.f32 0.0, %v2006
      %2008 = vmatmul.f32.gmra.mxu0 %v1912
      %v2009 = vpop.f32.mrf.mxu0
      %v2010 = vadd.f32 0.0, %v2009
      %2011 = vmatmul.f32.gmra.mxu0 %v1914
      %v2012 = vpop.f32.mrf.mxu0
      %v2013 = vadd.f32 0.0, %v2012
      %2014 = vmatmul.f32.gmra.mxu0 %v1916
      %v2015 = vpop.f32.mrf.mxu0
      %v2016 = vadd.f32 0.0, %v2015
      %2017 = vmatmul.f32.gmra.mxu0 %v1918
      %v2018 = vpop.f32.mrf.mxu0
      %v2019 = vadd.f32 0.0, %v2018
      %2020 = vmatmul.f32.gmra.mxu0 %v1920
      %v2021 = vpop.f32.mrf.mxu0
      %v2022 = vadd.f32 0.0, %v2021
      %2023 = vmatmul.f32.gmra.mxu0 %v1922
      %v2024 = vpop.f32.mrf.mxu0
      %v2025 = vadd.f32 0.0, %v2024
      %2026 = vmatmul.f32.gmra.mxu0 %v1924
      %v2027 = vpop.f32.mrf.mxu0
      %v2028 = vadd.f32 0.0, %v2027
      %2029 = vmatmul.f32.gmra.mxu0 %v1926
      %v2030 = vpop.f32.mrf.mxu0
      %v2031 = vadd.f32 0.0, %v2030
      %2032 = vmatmul.f32.gmra.mxu0 %v1928
      %v2033 = vpop.f32.mrf.mxu0
      %v2034 = vadd.f32 0.0, %v2033
      %2035 = vmatmul.f32.gmra.mxu0 %v1930
      %v2036 = vpop.f32.mrf.mxu0
      %v2037 = vadd.f32 0.0, %v2036
      %2038 = vmatmul.f32.gmra.mxu0 %v1932
      %v2039 = vpop.f32.mrf.mxu0
      %v2040 = vadd.f32 0.0, %v2039
      %2041 = vmatmul.f32.gmra.mxu0 %v1934
      %v2042 = vpop.f32.mrf.mxu0
      %v2043 = vadd.f32 0.0, %v2042
      %2044 = vmatmul.f32.gmra.mxu0 %v1936
      %v2045 = vpop.f32.mrf.mxu0
      %v2046 = vadd.f32 0.0, %v2045
      %2047 = vmatmul.f32.gmra.mxu0 %v1938
      %v2048 = vpop.f32.mrf.mxu0
      %v2049 = vadd.f32 0.0, %v2048
      %2050 = vmatmul.f32.gmra.mxu0 %v1940
      %v2051 = vpop.f32.mrf.mxu0
      %v2052 = vadd.f32 0.0, %v2051
      %2053 = vdwg.mxu0
      %v2054 = vadd.f32 %v1802, %v1983
      %v2055 = vadd.f32 %v1805, %v1986
      %v2056 = vadd.f32 %v1808, %v1989
      %v2057 = vadd.f32 %v1811, %v1992
      %v2058 = vadd.f32 %v1814, %v1995
      %v2059 = vadd.f32 %v1817, %v1998
      %v2060 = vadd.f32 %v1820, %v2001
      %v2061 = vadd.f32 %v1823, %v2004
      %v2062 = vadd.f32 %v1826, %v2007
      %v2063 = vadd.f32 %v1829, %v2010
      %v2064 = vadd.f32 %v1832, %v2013
      %v2065 = vadd.f32 %v1835, %v2016
      %v2066 = vadd.f32 %v1838, %v2019
      %v2067 = vadd.f32 %v1841, %v2022
      %v2068 = vadd.f32 %v1844, %v2025
      %v2069 = vadd.f32 %v1847, %v2028
      %v2070 = vadd.f32 %v1850, %v2031
      %v2071 = vadd.f32 %v1853, %v2034
      %v2072 = vadd.f32 %v1856, %v2037
      %v2073 = vadd.f32 %v1859, %v2040
      %v2074 = vadd.f32 %v1862, %v2043
      %v2075 = vadd.f32 %v1865, %v2046
      %v2076 = vadd.f32 %v1868, %v2049
      %v2077 = vadd.f32 %v1871, %v2052
      %2078 = vst [vmem:[#allocation3] sm:$0xff] %v2054
      %2079 = vst [vmem:[#allocation3 + $0x8] sm:$0xff] %v2055
      %2080 = vst [vmem:[#allocation3 + $0x10] sm:$0xff] %v2056
      %2081 = vst [vmem:[#allocation3 + $0x18] sm:$0xff] %v2057
      %2082 = vst [vmem:[#allocation3 + $0x20] sm:$0xff] %v2058
      %2083 = vst [vmem:[#allocation3 + $0x28] sm:$0xff] %v2059
      %2084 = vst [vmem:[#allocation3 + $0x30] sm:$0xff] %v2060
      %2085 = vst [vmem:[#allocation3 + $0x38] sm:$0xff] %v2061
      %2086 = vst [vmem:[#allocation3 + $0x40] sm:$0xff] %v2062
      %2087 = vst [vmem:[#allocation3 + $0x48] sm:$0xff] %v2063
      %2088 = vst [vmem:[#allocation3 + $0x50] sm:$0xff] %v2064
      %2089 = vst [vmem:[#allocation3 + $0x58] sm:$0xff] %v2065
      %2090 = vst [vmem:[#allocation3 + $0x60] sm:$0xff] %v2066
      %2091 = vst [vmem:[#allocation3 + $0x68] sm:$0xff] %v2067
      %2092 = vst [vmem:[#allocation3 + $0x70] sm:$0xff] %v2068
      %2093 = vst [vmem:[#allocation3 + $0x78] sm:$0xff] %v2069
      %2094 = vst [vmem:[#allocation3 + $0x80] sm:$0xff] %v2070
      %2095 = vst [vmem:[#allocation3 + $0x88] sm:$0xff] %v2071
      %2096 = vst [vmem:[#allocation3 + $0x90] sm:$0xff] %v2072
      %2097 = vst [vmem:[#allocation3 + $0x98] sm:$0xff] %v2073
      %2098 = vst [vmem:[#allocation3 + $0xa0] sm:$0xff] %v2074
      %2099 = vst [vmem:[#allocation3 + $0xa8] sm:$0xff] %v2075
      %2100 = vst [vmem:[#allocation3 + $0xb0] sm:$0xff] %v2076
      %2101 = vst [vmem:[#allocation3 + $0xb8] sm:$0xff] %v2077
      %v2102 = vld [vmem:[#allocation2 + $0x18] sm:$0xff]
      %v2103 = vld [vmem:[#allocation2 + $0x20] sm:$0xff]
      %v2104 = vld [vmem:[#allocation2 + $0x28] sm:$0xff]
      %v2105 = vld [vmem:[#allocation2 + $0x30] sm:$0xff]
      %v2106 = vld [vmem:[#allocation2 + $0x38] sm:$0xff]
      %v2107 = vld [vmem:[#allocation2 + $0x40] sm:$0xff]
      %v2108 = vld [vmem:[#allocation2 + $0x48] sm:$0xff]
      %v2109 = vld [vmem:[#allocation2 + $0x50] sm:$0xff]
      %v2110 = vld [vmem:[#allocation2 + $0x58] sm:$0xff]
      %v2111 = vld [vmem:[#allocation2 + $0x60] sm:$0xff]
      %v2112 = vld [vmem:[#allocation2 + $0x68] sm:$0xff]
      %v2113 = vld [vmem:[#allocation2 + $0x70] sm:$0xff]
      %v2114 = vld [vmem:[#allocation2 + $0x78] sm:$0xff]
      %v2115 = vld [vmem:[#allocation2 + $0x80] sm:$0xff]
      %v2116 = vld [vmem:[#allocation2 + $0x88] sm:$0xff]
      %v2117 = vld [vmem:[#allocation2 + $0x90] sm:$0xff]
      %v2118 = vld [vmem:[#allocation2 + $0x98] sm:$0xff]
      %v2119 = vld [vmem:[#allocation2 + $0xa0] sm:$0xff]
      %v2120 = vld [vmem:[#allocation2 + $0xa8] sm:$0xff]
      %v2121 = vld [vmem:[#allocation2 + $0xb0] sm:$0xff]
      %v2122 = vld [vmem:[#allocation2 + $0xb8] sm:$0xff]
      %v2123 = vld [vmem:[#allocation2 + $0xc0] sm:$0xff]
      %v2124 = vld [vmem:[#allocation2 + $0xc8] sm:$0xff]
      %v2125 = vld [vmem:[#allocation2 + $0xd0] sm:$0xff]
      %v2126 = vld [vmem:[#allocation2 + $0xd8] sm:$0xff]
      %v2127 = vld [vmem:[#allocation2 + $0xe0] sm:$0xff]
      %s2128 = scalar_lea.vmem %s7, 384
      %v2129 = vld [vmem:[%s2128] sm:$0xff]
      %v2130 = vld [vmem:[%s2128 + $0x8] sm:$0xff]
      %v2131 = vld [vmem:[%s2128 + $0x10] sm:$0xff]
      %v2132 = vld [vmem:[%s2128 + $0x18] sm:$0xff]
      %v2133 = vld [vmem:[%s2128 + $0x20] sm:$0xff]
      %v2134 = vld [vmem:[%s2128 + $0x28] sm:$0xff]
      %v2135 = vld [vmem:[%s2128 + $0x30] sm:$0xff]
      %v2136 = vld [vmem:[%s2128 + $0x38] sm:$0xff]
      %v2137 = vld [vmem:[%s2128 + $0x40] sm:$0xff]
      %v2138 = vld [vmem:[%s2128 + $0x48] sm:$0xff]
      %v2139 = vld [vmem:[%s2128 + $0x50] sm:$0xff]
      %v2140 = vld [vmem:[%s2128 + $0x58] sm:$0xff]
      %v2141 = vld [vmem:[%s2128 + $0x60] sm:$0xff]
      %v2142 = vld [vmem:[%s2128 + $0x68] sm:$0xff]
      %v2143 = vld [vmem:[%s2128 + $0x70] sm:$0xff]
      %v2144 = vld [vmem:[%s2128 + $0x78] sm:$0xff]
      %s2145 = scalar_lea.vmem %s7, 512
      %v2146 = vld [vmem:[%s2145] sm:$0xff]
      %v2147 = vld [vmem:[%s2145 + $0x8] sm:$0xff]
      %v2148 = vld [vmem:[%s2145 + $0x10] sm:$0xff]
      %v2149 = vld [vmem:[%s2145 + $0x18] sm:$0xff]
      %v2150 = vld [vmem:[%s2145 + $0x20] sm:$0xff]
      %v2151 = vld [vmem:[%s2145 + $0x28] sm:$0xff]
      %v2152 = vld [vmem:[%s2145 + $0x30] sm:$0xff]
      %v2153 = vld [vmem:[%s2145 + $0x38] sm:$0xff]
      %v2154 = vld [vmem:[%s2145 + $0x40] sm:$0xff]
      %v2155 = vld [vmem:[%s2145 + $0x48] sm:$0xff]
      %v2156 = vld [vmem:[%s2145 + $0x50] sm:$0xff]
      %v2157 = vld [vmem:[%s2145 + $0x58] sm:$0xff]
      %v2158 = vld [vmem:[%s2145 + $0x60] sm:$0xff]
      %v2159 = vld [vmem:[%s2145 + $0x68] sm:$0xff]
      %v2160 = vld [vmem:[%s2145 + $0x70] sm:$0xff]
      %v2161 = vld [vmem:[%s2145 + $0x78] sm:$0xff]
      %2162 = vmatpush.msra.mxu0 %v2161
      %2163 = vmatpush.msra.mxu0 %v2160
      %2164 = vmatpush.msra.mxu0 %v2159
      %2165 = vmatpush.msra.mxu0 %v2158
      %2166 = vmatpush.msra.mxu0 %v2157
      %2167 = vmatpush.msra.mxu0 %v2156
      %2168 = vmatpush.msra.mxu0 %v2155
      %2169 = vmatpush.msra.mxu0 %v2154
      %2170 = vmatpush.msra.mxu0 %v2153
      %2171 = vmatpush.msra.mxu0 %v2152
      %2172 = vmatpush.msra.mxu0 %v2151
      %2173 = vmatpush.msra.mxu0 %v2150
      %2174 = vmatpush.msra.mxu0 %v2149
      %2175 = vmatpush.msra.mxu0 %v2148
      %2176 = vmatpush.msra.mxu0 %v2147
      %2177 = vmatpush.msra.mxu0 %v2146
      %2178 = vmatmul.f32.gmra.mxu0 %v2103
      %v2179 = vpop.f32.mrf.mxu0
      %v2180 = vadd.f32 0.0, %v2179
      %2181 = vmatmul.f32.gmra.mxu0 %v2104
      %v2182 = vpop.f32.mrf.mxu0
      %v2183 = vadd.f32 0.0, %v2182
      %2184 = vmatmul.f32.gmra.mxu0 %v2105
      %v2185 = vpop.f32.mrf.mxu0
      %v2186 = vadd.f32 0.0, %v2185
      %2187 = vmatmul.f32.gmra.mxu0 %v2106
      %v2188 = vpop.f32.mrf.mxu0
      %v2189 = vadd.f32 0.0, %v2188
      %2190 = vmatmul.f32.gmra.mxu0 %v2107
      %v2191 = vpop.f32.mrf.mxu0
      %v2192 = vadd.f32 0.0, %v2191
      %2193 = vmatmul.f32.gmra.mxu0 %v2108
      %v2194 = vpop.f32.mrf.mxu0
      %v2195 = vadd.f32 0.0, %v2194
      %2196 = vmatmul.f32.gmra.mxu0 %v2109
      %v2197 = vpop.f32.mrf.mxu0
      %v2198 = vadd.f32 0.0, %v2197
      %2199 = vmatmul.f32.gmra.mxu0 %v2110
      %v2200 = vpop.f32.mrf.mxu0
      %v2201 = vadd.f32 0.0, %v2200
      %2202 = vmatmul.f32.gmra.mxu0 %v2111
      %v2203 = vpop.f32.mrf.mxu0
      %v2204 = vadd.f32 0.0, %v2203
      %2205 = vmatmul.f32.gmra.mxu0 %v2112
      %v2206 = vpop.f32.mrf.mxu0
      %v2207 = vadd.f32 0.0, %v2206
      %2208 = vmatmul.f32.gmra.mxu0 %v2113
      %v2209 = vpop.f32.mrf.mxu0
      %v2210 = vadd.f32 0.0, %v2209
      %2211 = vmatmul.f32.gmra.mxu0 %v2114
      %v2212 = vpop.f32.mrf.mxu0
      %v2213 = vadd.f32 0.0, %v2212
      %2214 = vmatmul.f32.gmra.mxu0 %v2115
      %v2215 = vpop.f32.mrf.mxu0
      %v2216 = vadd.f32 0.0, %v2215
      %2217 = vmatmul.f32.gmra.mxu0 %v2116
      %v2218 = vpop.f32.mrf.mxu0
      %v2219 = vadd.f32 0.0, %v2218
      %2220 = vmatmul.f32.gmra.mxu0 %v2117
      %v2221 = vpop.f32.mrf.mxu0
      %v2222 = vadd.f32 0.0, %v2221
      %2223 = vmatmul.f32.gmra.mxu0 %v2118
      %v2224 = vpop.f32.mrf.mxu0
      %v2225 = vadd.f32 0.0, %v2224
      %2226 = vmatmul.f32.gmra.mxu0 %v2119
      %v2227 = vpop.f32.mrf.mxu0
      %v2228 = vadd.f32 0.0, %v2227
      %2229 = vmatmul.f32.gmra.mxu0 %v2120
      %v2230 = vpop.f32.mrf.mxu0
      %v2231 = vadd.f32 0.0, %v2230
      %2232 = vmatmul.f32.gmra.mxu0 %v2121
      %v2233 = vpop.f32.mrf.mxu0
      %v2234 = vadd.f32 0.0, %v2233
      %2235 = vmatmul.f32.gmra.mxu0 %v2122
      %v2236 = vpop.f32.mrf.mxu0
      %v2237 = vadd.f32 0.0, %v2236
      %2238 = vmatmul.f32.gmra.mxu0 %v2123
      %v2239 = vpop.f32.mrf.mxu0
      %v2240 = vadd.f32 0.0, %v2239
      %2241 = vmatmul.f32.gmra.mxu0 %v2124
      %v2242 = vpop.f32.mrf.mxu0
      %v2243 = vadd.f32 0.0, %v2242
      %2244 = vmatmul.f32.gmra.mxu0 %v2125
      %v2245 = vpop.f32.mrf.mxu0
      %v2246 = vadd.f32 0.0, %v2245
      %2247 = vmatmul.f32.gmra.mxu0 %v2126
      %v2248 = vpop.f32.mrf.mxu0
      %v2249 = vadd.f32 0.0, %v2248
      %2250 = vdwg.mxu0
      %v2276 = vrot.slane %v2102, 7
      %v2277 = vrot.slane %v2103, 7
      %v2278 = vsel %vm1710, %v2276, %v2277
      %v2279 = vrot.slane %v2104, 7
      %v2280 = vsel %vm1710, %v2277, %v2279
      %v2281 = vrot.slane %v2105, 7
      %v2282 = vsel %vm1710, %v2279, %v2281
      %v2283 = vrot.slane %v2106, 7
      %v2284 = vsel %vm1710, %v2281, %v2283
      %v2285 = vrot.slane %v2107, 7
      %v2286 = vsel %vm1710, %v2283, %v2285
      %v2287 = vrot.slane %v2108, 7
      %v2288 = vsel %vm1710, %v2285, %v2287
      %v2289 = vrot.slane %v2109, 7
      %v2290 = vsel %vm1710, %v2287, %v2289
      %v2291 = vrot.slane %v2110, 7
      %v2292 = vsel %vm1710, %v2289, %v2291
      %v2293 = vrot.slane %v2111, 7
      %v2294 = vsel %vm1710, %v2291, %v2293
      %v2295 = vrot.slane %v2112, 7
      %v2296 = vsel %vm1710, %v2293, %v2295
      %v2297 = vrot.slane %v2113, 7
      %v2298 = vsel %vm1710, %v2295, %v2297
      %v2299 = vrot.slane %v2114, 7
      %v2300 = vsel %vm1710, %v2297, %v2299
      %v2301 = vrot.slane %v2115, 7
      %v2302 = vsel %vm1710, %v2299, %v2301
      %v2303 = vrot.slane %v2116, 7
      %v2304 = vsel %vm1710, %v2301, %v2303
      %v2305 = vrot.slane %v2117, 7
      %v2306 = vsel %vm1710, %v2303, %v2305
      %v2307 = vrot.slane %v2118, 7
      %v2308 = vsel %vm1710, %v2305, %v2307
      %v2309 = vrot.slane %v2119, 7
      %v2310 = vsel %vm1710, %v2307, %v2309
      %v2311 = vrot.slane %v2120, 7
      %v2312 = vsel %vm1710, %v2309, %v2311
      %v2313 = vrot.slane %v2121, 7
      %v2314 = vsel %vm1710, %v2311, %v2313
      %v2315 = vrot.slane %v2122, 7
      %v2316 = vsel %vm1710, %v2313, %v2315
      %v2317 = vrot.slane %v2123, 7
      %v2318 = vsel %vm1710, %v2315, %v2317
      %v2319 = vrot.slane %v2124, 7
      %v2320 = vsel %vm1710, %v2317, %v2319
      %v2321 = vrot.slane %v2125, 7
      %v2322 = vsel %vm1710, %v2319, %v2321
      %v2323 = vrot.slane %v2126, 7
      %v2324 = vsel %vm1710, %v2321, %v2323
      %2349 = vmatpush.msra.mxu0 %v2144
      %2350 = vmatpush.msra.mxu0 %v2143
      %2351 = vmatpush.msra.mxu0 %v2142
      %2352 = vmatpush.msra.mxu0 %v2141
      %2353 = vmatpush.msra.mxu0 %v2140
      %2354 = vmatpush.msra.mxu0 %v2139
      %2355 = vmatpush.msra.mxu0 %v2138
      %2356 = vmatpush.msra.mxu0 %v2137
      %2357 = vmatpush.msra.mxu0 %v2136
      %2358 = vmatpush.msra.mxu0 %v2135
      %2359 = vmatpush.msra.mxu0 %v2134
      %2360 = vmatpush.msra.mxu0 %v2133
      %2361 = vmatpush.msra.mxu0 %v2132
      %2362 = vmatpush.msra.mxu0 %v2131
      %2363 = vmatpush.msra.mxu0 %v2130
      %2364 = vmatpush.msra.mxu0 %v2129
      %2365 = vmatmul.f32.gmra.mxu0 %v2278
      %v2366 = vpop.f32.mrf.mxu0
      %v2367 = vadd.f32 %v2180, %v2366
      %2368 = vmatmul.f32.gmra.mxu0 %v2280
      %v2369 = vpop.f32.mrf.mxu0
      %v2370 = vadd.f32 %v2183, %v2369
      %2371 = vmatmul.f32.gmra.mxu0 %v2282
      %v2372 = vpop.f32.mrf.mxu0
      %v2373 = vadd.f32 %v2186, %v2372
      %2374 = vmatmul.f32.gmra.mxu0 %v2284
      %v2375 = vpop.f32.mrf.mxu0
      %v2376 = vadd.f32 %v2189, %v2375
      %2377 = vmatmul.f32.gmra.mxu0 %v2286
      %v2378 = vpop.f32.mrf.mxu0
      %v2379 = vadd.f32 %v2192, %v2378
      %2380 = vmatmul.f32.gmra.mxu0 %v2288
      %v2381 = vpop.f32.mrf.mxu0
      %v2382 = vadd.f32 %v2195, %v2381
      %2383 = vmatmul.f32.gmra.mxu0 %v2290
      %v2384 = vpop.f32.mrf.mxu0
      %v2385 = vadd.f32 %v2198, %v2384
      %2386 = vmatmul.f32.gmra.mxu0 %v2292
      %v2387 = vpop.f32.mrf.mxu0
      %v2388 = vadd.f32 %v2201, %v2387
      %2389 = vmatmul.f32.gmra.mxu0 %v2294
      %v2390 = vpop.f32.mrf.mxu0
      %v2391 = vadd.f32 %v2204, %v2390
      %2392 = vmatmul.f32.gmra.mxu0 %v2296
      %v2393 = vpop.f32.mrf.mxu0
      %v2394 = vadd.f32 %v2207, %v2393
      %2395 = vmatmul.f32.gmra.mxu0 %v2298
      %v2396 = vpop.f32.mrf.mxu0
      %v2397 = vadd.f32 %v2210, %v2396
      %2398 = vmatmul.f32.gmra.mxu0 %v2300
      %v2399 = vpop.f32.mrf.mxu0
      %v2400 = vadd.f32 %v2213, %v2399
      %2401 = vmatmul.f32.gmra.mxu0 %v2302
      %v2402 = vpop.f32.mrf.mxu0
      %v2403 = vadd.f32 %v2216, %v2402
      %2404 = vmatmul.f32.gmra.mxu0 %v2304
      %v2405 = vpop.f32.mrf.mxu0
      %v2406 = vadd.f32 %v2219, %v2405
      %2407 = vmatmul.f32.gmra.mxu0 %v2306
      %v2408 = vpop.f32.mrf.mxu0
      %v2409 = vadd.f32 %v2222, %v2408
      %2410 = vmatmul.f32.gmra.mxu0 %v2308
      %v2411 = vpop.f32.mrf.mxu0
      %v2412 = vadd.f32 %v2225, %v2411
      %2413 = vmatmul.f32.gmra.mxu0 %v2310
      %v2414 = vpop.f32.mrf.mxu0
      %v2415 = vadd.f32 %v2228, %v2414
      %2416 = vmatmul.f32.gmra.mxu0 %v2312
      %v2417 = vpop.f32.mrf.mxu0
      %v2418 = vadd.f32 %v2231, %v2417
      %2419 = vmatmul.f32.gmra.mxu0 %v2314
      %v2420 = vpop.f32.mrf.mxu0
      %v2421 = vadd.f32 %v2234, %v2420
      %2422 = vmatmul.f32.gmra.mxu0 %v2316
      %v2423 = vpop.f32.mrf.mxu0
      %v2424 = vadd.f32 %v2237, %v2423
      %2425 = vmatmul.f32.gmra.mxu0 %v2318
      %v2426 = vpop.f32.mrf.mxu0
      %v2427 = vadd.f32 %v2240, %v2426
      %2428 = vmatmul.f32.gmra.mxu0 %v2320
      %v2429 = vpop.f32.mrf.mxu0
      %v2430 = vadd.f32 %v2243, %v2429
      %2431 = vmatmul.f32.gmra.mxu0 %v2322
      %v2432 = vpop.f32.mrf.mxu0
      %v2433 = vadd.f32 %v2246, %v2432
      %2434 = vmatmul.f32.gmra.mxu0 %v2324
      %v2435 = vpop.f32.mrf.mxu0
      %v2436 = vadd.f32 %v2249, %v2435
      %2437 = vdwg.mxu0
      %s2438 = scalar_lea.vmem %s7, 640
      %v2439 = vld [vmem:[%s2438] sm:$0xff]
      %v2440 = vld [vmem:[%s2438 + $0x8] sm:$0xff]
      %v2441 = vld [vmem:[%s2438 + $0x10] sm:$0xff]
      %v2442 = vld [vmem:[%s2438 + $0x18] sm:$0xff]
      %v2443 = vld [vmem:[%s2438 + $0x20] sm:$0xff]
      %v2444 = vld [vmem:[%s2438 + $0x28] sm:$0xff]
      %v2445 = vld [vmem:[%s2438 + $0x30] sm:$0xff]
      %v2446 = vld [vmem:[%s2438 + $0x38] sm:$0xff]
      %v2447 = vld [vmem:[%s2438 + $0x40] sm:$0xff]
      %v2448 = vld [vmem:[%s2438 + $0x48] sm:$0xff]
      %v2449 = vld [vmem:[%s2438 + $0x50] sm:$0xff]
      %v2450 = vld [vmem:[%s2438 + $0x58] sm:$0xff]
      %v2451 = vld [vmem:[%s2438 + $0x60] sm:$0xff]
      %v2452 = vld [vmem:[%s2438 + $0x68] sm:$0xff]
      %v2453 = vld [vmem:[%s2438 + $0x70] sm:$0xff]
      %v2454 = vld [vmem:[%s2438 + $0x78] sm:$0xff]
      %v2456 = vrot.slane %v2103, 1
      %v2457 = vrot.slane %v2104, 1
      %v2458 = vsel %vm1891, %v2456, %v2457
      %v2459 = vrot.slane %v2105, 1
      %v2460 = vsel %vm1891, %v2457, %v2459
      %v2461 = vrot.slane %v2106, 1
      %v2462 = vsel %vm1891, %v2459, %v2461
      %v2463 = vrot.slane %v2107, 1
      %v2464 = vsel %vm1891, %v2461, %v2463
      %v2465 = vrot.slane %v2108, 1
      %v2466 = vsel %vm1891, %v2463, %v2465
      %v2467 = vrot.slane %v2109, 1
      %v2468 = vsel %vm1891, %v2465, %v2467
      %v2469 = vrot.slane %v2110, 1
      %v2470 = vsel %vm1891, %v2467, %v2469
      %v2471 = vrot.slane %v2111, 1
      %v2472 = vsel %vm1891, %v2469, %v2471
      %v2473 = vrot.slane %v2112, 1
      %v2474 = vsel %vm1891, %v2471, %v2473
      %v2475 = vrot.slane %v2113, 1
      %v2476 = vsel %vm1891, %v2473, %v2475
      %v2477 = vrot.slane %v2114, 1
      %v2478 = vsel %vm1891, %v2475, %v2477
      %v2479 = vrot.slane %v2115, 1
      %v2480 = vsel %vm1891, %v2477, %v2479
      %v2481 = vrot.slane %v2116, 1
      %v2482 = vsel %vm1891, %v2479, %v2481
      %v2483 = vrot.slane %v2117, 1
      %v2484 = vsel %vm1891, %v2481, %v2483
      %v2485 = vrot.slane %v2118, 1
      %v2486 = vsel %vm1891, %v2483, %v2485
      %v2487 = vrot.slane %v2119, 1
      %v2488 = vsel %vm1891, %v2485, %v2487
      %v2489 = vrot.slane %v2120, 1
      %v2490 = vsel %vm1891, %v2487, %v2489
      %v2491 = vrot.slane %v2121, 1
      %v2492 = vsel %vm1891, %v2489, %v2491
      %v2493 = vrot.slane %v2122, 1
      %v2494 = vsel %vm1891, %v2491, %v2493
      %v2495 = vrot.slane %v2123, 1
      %v2496 = vsel %vm1891, %v2493, %v2495
      %v2497 = vrot.slane %v2124, 1
      %v2498 = vsel %vm1891, %v2495, %v2497
      %v2499 = vrot.slane %v2125, 1
      %v2500 = vsel %vm1891, %v2497, %v2499
      %v2501 = vrot.slane %v2126, 1
      %v2502 = vsel %vm1891, %v2499, %v2501
      %v2503 = vrot.slane %v2127, 1
      %v2504 = vsel %vm1891, %v2501, %v2503
      %2529 = vmatpush.msra.mxu0 %v2454
      %2530 = vmatpush.msra.mxu0 %v2453
      %2531 = vmatpush.msra.mxu0 %v2452
      %2532 = vmatpush.msra.mxu0 %v2451
      %2533 = vmatpush.msra.mxu0 %v2450
      %2534 = vmatpush.msra.mxu0 %v2449
      %2535 = vmatpush.msra.mxu0 %v2448
      %2536 = vmatpush.msra.mxu0 %v2447
      %2537 = vmatpush.msra.mxu0 %v2446
      %2538 = vmatpush.msra.mxu0 %v2445
      %2539 = vmatpush.msra.mxu0 %v2444
      %2540 = vmatpush.msra.mxu0 %v2443
      %2541 = vmatpush.msra.mxu0 %v2442
      %2542 = vmatpush.msra.mxu0 %v2441
      %2543 = vmatpush.msra.mxu0 %v2440
      %2544 = vmatpush.msra.mxu0 %v2439
      %2545 = vmatmul.f32.gmra.mxu0 %v2458
      %v2546 = vpop.f32.mrf.mxu0
      %v2547 = vadd.f32 0.0, %v2546
      %2548 = vmatmul.f32.gmra.mxu0 %v2460
      %v2549 = vpop.f32.mrf.mxu0
      %v2550 = vadd.f32 0.0, %v2549
      %2551 = vmatmul.f32.gmra.mxu0 %v2462
      %v2552 = vpop.f32.mrf.mxu0
      %v2553 = vadd.f32 0.0, %v2552
      %2554 = vmatmul.f32.gmra.mxu0 %v2464
      %v2555 = vpop.f32.mrf.mxu0
      %v2556 = vadd.f32 0.0, %v2555
      %2557 = vmatmul.f32.gmra.mxu0 %v2466
      %v2558 = vpop.f32.mrf.mxu0
      %v2559 = vadd.f32 0.0, %v2558
      %2560 = vmatmul.f32.gmra.mxu0 %v2468
      %v2561 = vpop.f32.mrf.mxu0
      %v2562 = vadd.f32 0.0, %v2561
      %2563 = vmatmul.f32.gmra.mxu0 %v2470
      %v2564 = vpop.f32.mrf.mxu0
      %v2565 = vadd.f32 0.0, %v2564
      %2566 = vmatmul.f32.gmra.mxu0 %v2472
      %v2567 = vpop.f32.mrf.mxu0
      %v2568 = vadd.f32 0.0, %v2567
      %2569 = vmatmul.f32.gmra.mxu0 %v2474
      %v2570 = vpop.f32.mrf.mxu0
      %v2571 = vadd.f32 0.0, %v2570
      %2572 = vmatmul.f32.gmra.mxu0 %v2476
      %v2573 = vpop.f32.mrf.mxu0
      %v2574 = vadd.f32 0.0, %v2573
      %2575 = vmatmul.f32.gmra.mxu0 %v2478
      %v2576 = vpop.f32.mrf.mxu0
      %v2577 = vadd.f32 0.0, %v2576
      %2578 = vmatmul.f32.gmra.mxu0 %v2480
      %v2579 = vpop.f32.mrf.mxu0
      %v2580 = vadd.f32 0.0, %v2579
      %2581 = vmatmul.f32.gmra.mxu0 %v2482
      %v2582 = vpop.f32.mrf.mxu0
      %v2583 = vadd.f32 0.0, %v2582
      %2584 = vmatmul.f32.gmra.mxu0 %v2484
      %v2585 = vpop.f32.mrf.mxu0
      %v2586 = vadd.f32 0.0, %v2585
      %2587 = vmatmul.f32.gmra.mxu0 %v2486
      %v2588 = vpop.f32.mrf.mxu0
      %v2589 = vadd.f32 0.0, %v2588
      %2590 = vmatmul.f32.gmra.mxu0 %v2488
      %v2591 = vpop.f32.mrf.mxu0
      %v2592 = vadd.f32 0.0, %v2591
      %2593 = vmatmul.f32.gmra.mxu0 %v2490
      %v2594 = vpop.f32.mrf.mxu0
      %v2595 = vadd.f32 0.0, %v2594
      %2596 = vmatmul.f32.gmra.mxu0 %v2492
      %v2597 = vpop.f32.mrf.mxu0
      %v2598 = vadd.f32 0.0, %v2597
      %2599 = vmatmul.f32.gmra.mxu0 %v2494
      %v2600 = vpop.f32.mrf.mxu0
      %v2601 = vadd.f32 0.0, %v2600
      %2602 = vmatmul.f32.gmra.mxu0 %v2496
      %v2603 = vpop.f32.mrf.mxu0
      %v2604 = vadd.f32 0.0, %v2603
      %2605 = vmatmul.f32.gmra.mxu0 %v2498
      %v2606 = vpop.f32.mrf.mxu0
      %v2607 = vadd.f32 0.0, %v2606
      %2608 = vmatmul.f32.gmra.mxu0 %v2500
      %v2609 = vpop.f32.mrf.mxu0
      %v2610 = vadd.f32 0.0, %v2609
      %2611 = vmatmul.f32.gmra.mxu0 %v2502
      %v2612 = vpop.f32.mrf.mxu0
      %v2613 = vadd.f32 0.0, %v2612
      %2614 = vmatmul.f32.gmra.mxu0 %v2504
      %v2615 = vpop.f32.mrf.mxu0
      %v2616 = vadd.f32 0.0, %v2615
      %2617 = vdwg.mxu0
      %v2618 = vadd.f32 %v2367, %v2547
      %v2619 = vadd.f32 %v2370, %v2550
      %v2620 = vadd.f32 %v2373, %v2553
      %v2621 = vadd.f32 %v2376, %v2556
      %v2622 = vadd.f32 %v2379, %v2559
      %v2623 = vadd.f32 %v2382, %v2562
      %v2624 = vadd.f32 %v2385, %v2565
      %v2625 = vadd.f32 %v2388, %v2568
      %v2626 = vadd.f32 %v2391, %v2571
      %v2627 = vadd.f32 %v2394, %v2574
      %v2628 = vadd.f32 %v2397, %v2577
      %v2629 = vadd.f32 %v2400, %v2580
      %v2630 = vadd.f32 %v2403, %v2583
      %v2631 = vadd.f32 %v2406, %v2586
      %v2632 = vadd.f32 %v2409, %v2589
      %v2633 = vadd.f32 %v2412, %v2592
      %v2634 = vadd.f32 %v2415, %v2595
      %v2635 = vadd.f32 %v2418, %v2598
      %v2636 = vadd.f32 %v2421, %v2601
      %v2637 = vadd.f32 %v2424, %v2604
      %v2638 = vadd.f32 %v2427, %v2607
      %v2639 = vadd.f32 %v2430, %v2610
      %v2640 = vadd.f32 %v2433, %v2613
      %v2641 = vadd.f32 %v2436, %v2616
      %v2642 = vld [vmem:[#allocation3] sm:$0xff]
      %v2643 = vld [vmem:[#allocation3 + $0x8] sm:$0xff]
      %v2644 = vld [vmem:[#allocation3 + $0x10] sm:$0xff]
      %v2645 = vld [vmem:[#allocation3 + $0x18] sm:$0xff]
      %v2646 = vld [vmem:[#allocation3 + $0x20] sm:$0xff]
      %v2647 = vld [vmem:[#allocation3 + $0x28] sm:$0xff]
      %v2648 = vld [vmem:[#allocation3 + $0x30] sm:$0xff]
      %v2649 = vld [vmem:[#allocation3 + $0x38] sm:$0xff]
      %v2650 = vld [vmem:[#allocation3 + $0x40] sm:$0xff]
      %v2651 = vld [vmem:[#allocation3 + $0x48] sm:$0xff]
      %v2652 = vld [vmem:[#allocation3 + $0x50] sm:$0xff]
      %v2653 = vld [vmem:[#allocation3 + $0x58] sm:$0xff]
      %v2654 = vld [vmem:[#allocation3 + $0x60] sm:$0xff]
      %v2655 = vld [vmem:[#allocation3 + $0x68] sm:$0xff]
      %v2656 = vld [vmem:[#allocation3 + $0x70] sm:$0xff]
      %v2657 = vld [vmem:[#allocation3 + $0x78] sm:$0xff]
      %v2658 = vld [vmem:[#allocation3 + $0x80] sm:$0xff]
      %v2659 = vld [vmem:[#allocation3 + $0x88] sm:$0xff]
      %v2660 = vld [vmem:[#allocation3 + $0x90] sm:$0xff]
      %v2661 = vld [vmem:[#allocation3 + $0x98] sm:$0xff]
      %v2662 = vld [vmem:[#allocation3 + $0xa0] sm:$0xff]
      %v2663 = vld [vmem:[#allocation3 + $0xa8] sm:$0xff]
      %v2664 = vld [vmem:[#allocation3 + $0xb0] sm:$0xff]
      %v2665 = vld [vmem:[#allocation3 + $0xb8] sm:$0xff]
      %v2666 = vadd.f32 %v2642, %v2618
      %v2667 = vadd.f32 %v2643, %v2619
      %v2668 = vadd.f32 %v2644, %v2620
      %v2669 = vadd.f32 %v2645, %v2621
      %v2670 = vadd.f32 %v2646, %v2622
      %v2671 = vadd.f32 %v2647, %v2623
      %v2672 = vadd.f32 %v2648, %v2624
      %v2673 = vadd.f32 %v2649, %v2625
      %v2674 = vadd.f32 %v2650, %v2626
      %v2675 = vadd.f32 %v2651, %v2627
      %v2676 = vadd.f32 %v2652, %v2628
      %v2677 = vadd.f32 %v2653, %v2629
      %v2678 = vadd.f32 %v2654, %v2630
      %v2679 = vadd.f32 %v2655, %v2631
      %v2680 = vadd.f32 %v2656, %v2632
      %v2681 = vadd.f32 %v2657, %v2633
      %v2682 = vadd.f32 %v2658, %v2634
      %v2683 = vadd.f32 %v2659, %v2635
      %v2684 = vadd.f32 %v2660, %v2636
      %v2685 = vadd.f32 %v2661, %v2637
      %v2686 = vadd.f32 %v2662, %v2638
      %v2687 = vadd.f32 %v2663, %v2639
      %v2688 = vadd.f32 %v2664, %v2640
      %v2689 = vadd.f32 %v2665, %v2641
      %2690 = vst [vmem:[#allocation3] sm:$0xff] %v2666
      %2691 = vst [vmem:[#allocation3 + $0x8] sm:$0xff] %v2667
      %2692 = vst [vmem:[#allocation3 + $0x10] sm:$0xff] %v2668
      %2693 = vst [vmem:[#allocation3 + $0x18] sm:$0xff] %v2669
      %2694 = vst [vmem:[#allocation3 + $0x20] sm:$0xff] %v2670
      %2695 = vst [vmem:[#allocation3 + $0x28] sm:$0xff] %v2671
      %2696 = vst [vmem:[#allocation3 + $0x30] sm:$0xff] %v2672
      %2697 = vst [vmem:[#allocation3 + $0x38] sm:$0xff] %v2673
      %2698 = vst [vmem:[#allocation3 + $0x40] sm:$0xff] %v2674
      %2699 = vst [vmem:[#allocation3 + $0x48] sm:$0xff] %v2675
      %2700 = vst [vmem:[#allocation3 + $0x50] sm:$0xff] %v2676
      %2701 = vst [vmem:[#allocation3 + $0x58] sm:$0xff] %v2677
      %2702 = vst [vmem:[#allocation3 + $0x60] sm:$0xff] %v2678
      %2703 = vst [vmem:[#allocation3 + $0x68] sm:$0xff] %v2679
      %2704 = vst [vmem:[#allocation3 + $0x70] sm:$0xff] %v2680
      %2705 = vst [vmem:[#allocation3 + $0x78] sm:$0xff] %v2681
      %2706 = vst [vmem:[#allocation3 + $0x80] sm:$0xff] %v2682
      %2707 = vst [vmem:[#allocation3 + $0x88] sm:$0xff] %v2683
      %2708 = vst [vmem:[#allocation3 + $0x90] sm:$0xff] %v2684
      %2709 = vst [vmem:[#allocation3 + $0x98] sm:$0xff] %v2685
      %2710 = vst [vmem:[#allocation3 + $0xa0] sm:$0xff] %v2686
      %2711 = vst [vmem:[#allocation3 + $0xa8] sm:$0xff] %v2687
      %2712 = vst [vmem:[#allocation3 + $0xb0] sm:$0xff] %v2688
      %2713 = vst [vmem:[#allocation3 + $0xb8] sm:$0xff] %v2689
      %v2714 = vld [vmem:[#allocation2 + $0x30] sm:$0xff]
      %v2715 = vld [vmem:[#allocation2 + $0x38] sm:$0xff]
      %v2716 = vld [vmem:[#allocation2 + $0x40] sm:$0xff]
      %v2717 = vld [vmem:[#allocation2 + $0x48] sm:$0xff]
      %v2718 = vld [vmem:[#allocation2 + $0x50] sm:$0xff]
      %v2719 = vld [vmem:[#allocation2 + $0x58] sm:$0xff]
      %v2720 = vld [vmem:[#allocation2 + $0x60] sm:$0xff]
      %v2721 = vld [vmem:[#allocation2 + $0x68] sm:$0xff]
      %v2722 = vld [vmem:[#allocation2 + $0x70] sm:$0xff]
      %v2723 = vld [vmem:[#allocation2 + $0x78] sm:$0xff]
      %v2724 = vld [vmem:[#allocation2 + $0x80] sm:$0xff]
      %v2725 = vld [vmem:[#allocation2 + $0x88] sm:$0xff]
      %v2726 = vld [vmem:[#allocation2 + $0x90] sm:$0xff]
      %v2727 = vld [vmem:[#allocation2 + $0x98] sm:$0xff]
      %v2728 = vld [vmem:[#allocation2 + $0xa0] sm:$0xff]
      %v2729 = vld [vmem:[#allocation2 + $0xa8] sm:$0xff]
      %v2730 = vld [vmem:[#allocation2 + $0xb0] sm:$0xff]
      %v2731 = vld [vmem:[#allocation2 + $0xb8] sm:$0xff]
      %v2732 = vld [vmem:[#allocation2 + $0xc0] sm:$0xff]
      %v2733 = vld [vmem:[#allocation2 + $0xc8] sm:$0xff]
      %v2734 = vld [vmem:[#allocation2 + $0xd0] sm:$0xff]
      %v2735 = vld [vmem:[#allocation2 + $0xd8] sm:$0xff]
      %v2736 = vld [vmem:[#allocation2 + $0xe0] sm:$0xff]
      %v2737 = vld [vmem:[#allocation2 + $0xe8] sm:$0xff]
      %v2738 = vld [vmem:[#allocation2 + $0xf0] sm:$0xff]
      %v2739 = vld [vmem:[#allocation2 + $0xf8] sm:$0xff]
      %s2740 = scalar_lea.vmem %s7, 768
      %v2741 = vld [vmem:[%s2740] sm:$0xff]
      %v2742 = vld [vmem:[%s2740 + $0x8] sm:$0xff]
      %v2743 = vld [vmem:[%s2740 + $0x10] sm:$0xff]
      %v2744 = vld [vmem:[%s2740 + $0x18] sm:$0xff]
      %v2745 = vld [vmem:[%s2740 + $0x20] sm:$0xff]
      %v2746 = vld [vmem:[%s2740 + $0x28] sm:$0xff]
      %v2747 = vld [vmem:[%s2740 + $0x30] sm:$0xff]
      %v2748 = vld [vmem:[%s2740 + $0x38] sm:$0xff]
      %v2749 = vld [vmem:[%s2740 + $0x40] sm:$0xff]
      %v2750 = vld [vmem:[%s2740 + $0x48] sm:$0xff]
      %v2751 = vld [vmem:[%s2740 + $0x50] sm:$0xff]
      %v2752 = vld [vmem:[%s2740 + $0x58] sm:$0xff]
      %v2753 = vld [vmem:[%s2740 + $0x60] sm:$0xff]
      %v2754 = vld [vmem:[%s2740 + $0x68] sm:$0xff]
      %v2755 = vld [vmem:[%s2740 + $0x70] sm:$0xff]
      %v2756 = vld [vmem:[%s2740 + $0x78] sm:$0xff]
      %s2757 = scalar_lea.vmem %s7, 896
      %v2758 = vld [vmem:[%s2757] sm:$0xff]
      %v2759 = vld [vmem:[%s2757 + $0x8] sm:$0xff]
      %v2760 = vld [vmem:[%s2757 + $0x10] sm:$0xff]
      %v2761 = vld [vmem:[%s2757 + $0x18] sm:$0xff]
      %v2762 = vld [vmem:[%s2757 + $0x20] sm:$0xff]
      %v2763 = vld [vmem:[%s2757 + $0x28] sm:$0xff]
      %v2764 = vld [vmem:[%s2757 + $0x30] sm:$0xff]
      %v2765 = vld [vmem:[%s2757 + $0x38] sm:$0xff]
      %v2766 = vld [vmem:[%s2757 + $0x40] sm:$0xff]
      %v2767 = vld [vmem:[%s2757 + $0x48] sm:$0xff]
      %v2768 = vld [vmem:[%s2757 + $0x50] sm:$0xff]
      %v2769 = vld [vmem:[%s2757 + $0x58] sm:$0xff]
      %v2770 = vld [vmem:[%s2757 + $0x60] sm:$0xff]
      %v2771 = vld [vmem:[%s2757 + $0x68] sm:$0xff]
      %v2772 = vld [vmem:[%s2757 + $0x70] sm:$0xff]
      %v2773 = vld [vmem:[%s2757 + $0x78] sm:$0xff]
      %2774 = vmatpush.msra.mxu0 %v2773
      %2775 = vmatpush.msra.mxu0 %v2772
      %2776 = vmatpush.msra.mxu0 %v2771
      %2777 = vmatpush.msra.mxu0 %v2770
      %2778 = vmatpush.msra.mxu0 %v2769
      %2779 = vmatpush.msra.mxu0 %v2768
      %2780 = vmatpush.msra.mxu0 %v2767
      %2781 = vmatpush.msra.mxu0 %v2766
      %2782 = vmatpush.msra.mxu0 %v2765
      %2783 = vmatpush.msra.mxu0 %v2764
      %2784 = vmatpush.msra.mxu0 %v2763
      %2785 = vmatpush.msra.mxu0 %v2762
      %2786 = vmatpush.msra.mxu0 %v2761
      %2787 = vmatpush.msra.mxu0 %v2760
      %2788 = vmatpush.msra.mxu0 %v2759
      %2789 = vmatpush.msra.mxu0 %v2758
      %2790 = vmatmul.f32.gmra.mxu0 %v2715
      %v2791 = vpop.f32.mrf.mxu0
      %v2792 = vadd.f32 0.0, %v2791
      %2793 = vmatmul.f32.gmra.mxu0 %v2716
      %v2794 = vpop.f32.mrf.mxu0
      %v2795 = vadd.f32 0.0, %v2794
      %2796 = vmatmul.f32.gmra.mxu0 %v2717
      %v2797 = vpop.f32.mrf.mxu0
      %v2798 = vadd.f32 0.0, %v2797
      %2799 = vmatmul.f32.gmra.mxu0 %v2718
      %v2800 = vpop.f32.mrf.mxu0
      %v2801 = vadd.f32 0.0, %v2800
      %2802 = vmatmul.f32.gmra.mxu0 %v2719
      %v2803 = vpop.f32.mrf.mxu0
      %v2804 = vadd.f32 0.0, %v2803
      %2805 = vmatmul.f32.gmra.mxu0 %v2720
      %v2806 = vpop.f32.mrf.mxu0
      %v2807 = vadd.f32 0.0, %v2806
      %2808 = vmatmul.f32.gmra.mxu0 %v2721
      %v2809 = vpop.f32.mrf.mxu0
      %v2810 = vadd.f32 0.0, %v2809
      %2811 = vmatmul.f32.gmra.mxu0 %v2722
      %v2812 = vpop.f32.mrf.mxu0
      %v2813 = vadd.f32 0.0, %v2812
      %2814 = vmatmul.f32.gmra.mxu0 %v2723
      %v2815 = vpop.f32.mrf.mxu0
      %v2816 = vadd.f32 0.0, %v2815
      %2817 = vmatmul.f32.gmra.mxu0 %v2724
      %v2818 = vpop.f32.mrf.mxu0
      %v2819 = vadd.f32 0.0, %v2818
      %2820 = vmatmul.f32.gmra.mxu0 %v2725
      %v2821 = vpop.f32.mrf.mxu0
      %v2822 = vadd.f32 0.0, %v2821
      %2823 = vmatmul.f32.gmra.mxu0 %v2726
      %v2824 = vpop.f32.mrf.mxu0
      %v2825 = vadd.f32 0.0, %v2824
      %2826 = vmatmul.f32.gmra.mxu0 %v2727
      %v2827 = vpop.f32.mrf.mxu0
      %v2828 = vadd.f32 0.0, %v2827
      %2829 = vmatmul.f32.gmra.mxu0 %v2728
      %v2830 = vpop.f32.mrf.mxu0
      %v2831 = vadd.f32 0.0, %v2830
      %2832 = vmatmul.f32.gmra.mxu0 %v2729
      %v2833 = vpop.f32.mrf.mxu0
      %v2834 = vadd.f32 0.0, %v2833
      %2835 = vmatmul.f32.gmra.mxu0 %v2730
      %v2836 = vpop.f32.mrf.mxu0
      %v2837 = vadd.f32 0.0, %v2836
      %2838 = vmatmul.f32.gmra.mxu0 %v2731
      %v2839 = vpop.f32.mrf.mxu0
      %v2840 = vadd.f32 0.0, %v2839
      %2841 = vmatmul.f32.gmra.mxu0 %v2732
      %v2842 = vpop.f32.mrf.mxu0
      %v2843 = vadd.f32 0.0, %v2842
      %2844 = vmatmul.f32.gmra.mxu0 %v2733
      %v2845 = vpop.f32.mrf.mxu0
      %v2846 = vadd.f32 0.0, %v2845
      %2847 = vmatmul.f32.gmra.mxu0 %v2734
      %v2848 = vpop.f32.mrf.mxu0
      %v2849 = vadd.f32 0.0, %v2848
      %2850 = vmatmul.f32.gmra.mxu0 %v2735
      %v2851 = vpop.f32.mrf.mxu0
      %v2852 = vadd.f32 0.0, %v2851
      %2853 = vmatmul.f32.gmra.mxu0 %v2736
      %v2854 = vpop.f32.mrf.mxu0
      %v2855 = vadd.f32 0.0, %v2854
      %2856 = vmatmul.f32.gmra.mxu0 %v2737
      %v2857 = vpop.f32.mrf.mxu0
      %v2858 = vadd.f32 0.0, %v2857
      %2859 = vmatmul.f32.gmra.mxu0 %v2738
      %v2860 = vpop.f32.mrf.mxu0
      %v2861 = vadd.f32 0.0, %v2860
      %2862 = vdwg.mxu0
      %v2888 = vrot.slane %v2714, 7
      %v2889 = vrot.slane %v2715, 7
      %v2890 = vsel %vm1710, %v2888, %v2889
      %v2891 = vrot.slane %v2716, 7
      %v2892 = vsel %vm1710, %v2889, %v2891
      %v2893 = vrot.slane %v2717, 7
      %v2894 = vsel %vm1710, %v2891, %v2893
      %v2895 = vrot.slane %v2718, 7
      %v2896 = vsel %vm1710, %v2893, %v2895
      %v2897 = vrot.slane %v2719, 7
      %v2898 = vsel %vm1710, %v2895, %v2897
      %v2899 = vrot.slane %v2720, 7
      %v2900 = vsel %vm1710, %v2897, %v2899
      %v2901 = vrot.slane %v2721, 7
      %v2902 = vsel %vm1710, %v2899, %v2901
      %v2903 = vrot.slane %v2722, 7
      %v2904 = vsel %vm1710, %v2901, %v2903
      %v2905 = vrot.slane %v2723, 7
      %v2906 = vsel %vm1710, %v2903, %v2905
      %v2907 = vrot.slane %v2724, 7
      %v2908 = vsel %vm1710, %v2905, %v2907
      %v2909 = vrot.slane %v2725, 7
      %v2910 = vsel %vm1710, %v2907, %v2909
      %v2911 = vrot.slane %v2726, 7
      %v2912 = vsel %vm1710, %v2909, %v2911
      %v2913 = vrot.slane %v2727, 7
      %v2914 = vsel %vm1710, %v2911, %v2913
      %v2915 = vrot.slane %v2728, 7
      %v2916 = vsel %vm1710, %v2913, %v2915
      %v2917 = vrot.slane %v2729, 7
      %v2918 = vsel %vm1710, %v2915, %v2917
      %v2919 = vrot.slane %v2730, 7
      %v2920 = vsel %vm1710, %v2917, %v2919
      %v2921 = vrot.slane %v2731, 7
      %v2922 = vsel %vm1710, %v2919, %v2921
      %v2923 = vrot.slane %v2732, 7
      %v2924 = vsel %vm1710, %v2921, %v2923
      %v2925 = vrot.slane %v2733, 7
      %v2926 = vsel %vm1710, %v2923, %v2925
      %v2927 = vrot.slane %v2734, 7
      %v2928 = vsel %vm1710, %v2925, %v2927
      %v2929 = vrot.slane %v2735, 7
      %v2930 = vsel %vm1710, %v2927, %v2929
      %v2931 = vrot.slane %v2736, 7
      %v2932 = vsel %vm1710, %v2929, %v2931
      %v2933 = vrot.slane %v2737, 7
      %v2934 = vsel %vm1710, %v2931, %v2933
      %v2935 = vrot.slane %v2738, 7
      %v2936 = vsel %vm1710, %v2933, %v2935
      %2961 = vmatpush.msra.mxu0 %v2756
      %2962 = vmatpush.msra.mxu0 %v2755
      %2963 = vmatpush.msra.mxu0 %v2754
      %2964 = vmatpush.msra.mxu0 %v2753
      %2965 = vmatpush.msra.mxu0 %v2752
      %2966 = vmatpush.msra.mxu0 %v2751
      %2967 = vmatpush.msra.mxu0 %v2750
      %2968 = vmatpush.msra.mxu0 %v2749
      %2969 = vmatpush.msra.mxu0 %v2748
      %2970 = vmatpush.msra.mxu0 %v2747
      %2971 = vmatpush.msra.mxu0 %v2746
      %2972 = vmatpush.msra.mxu0 %v2745
      %2973 = vmatpush.msra.mxu0 %v2744
      %2974 = vmatpush.msra.mxu0 %v2743
      %2975 = vmatpush.msra.mxu0 %v2742
      %2976 = vmatpush.msra.mxu0 %v2741
      %2977 = vmatmul.f32.gmra.mxu0 %v2890
      %v2978 = vpop.f32.mrf.mxu0
      %v2979 = vadd.f32 %v2792, %v2978
      %2980 = vmatmul.f32.gmra.mxu0 %v2892
      %v2981 = vpop.f32.mrf.mxu0
      %v2982 = vadd.f32 %v2795, %v2981
      %2983 = vmatmul.f32.gmra.mxu0 %v2894
      %v2984 = vpop.f32.mrf.mxu0
      %v2985 = vadd.f32 %v2798, %v2984
      %2986 = vmatmul.f32.gmra.mxu0 %v2896
      %v2987 = vpop.f32.mrf.mxu0
      %v2988 = vadd.f32 %v2801, %v2987
      %2989 = vmatmul.f32.gmra.mxu0 %v2898
      %v2990 = vpop.f32.mrf.mxu0
      %v2991 = vadd.f32 %v2804, %v2990
      %2992 = vmatmul.f32.gmra.mxu0 %v2900
      %v2993 = vpop.f32.mrf.mxu0
      %v2994 = vadd.f32 %v2807, %v2993
      %2995 = vmatmul.f32.gmra.mxu0 %v2902
      %v2996 = vpop.f32.mrf.mxu0
      %v2997 = vadd.f32 %v2810, %v2996
      %2998 = vmatmul.f32.gmra.mxu0 %v2904
      %v2999 = vpop.f32.mrf.mxu0
      %v3000 = vadd.f32 %v2813, %v2999
      %3001 = vmatmul.f32.gmra.mxu0 %v2906
      %v3002 = vpop.f32.mrf.mxu0
      %v3003 = vadd.f32 %v2816, %v3002
      %3004 = vmatmul.f32.gmra.mxu0 %v2908
      %v3005 = vpop.f32.mrf.mxu0
      %v3006 = vadd.f32 %v2819, %v3005
      %3007 = vmatmul.f32.gmra.mxu0 %v2910
      %v3008 = vpop.f32.mrf.mxu0
      %v3009 = vadd.f32 %v2822, %v3008
      %3010 = vmatmul.f32.gmra.mxu0 %v2912
      %v3011 = vpop.f32.mrf.mxu0
      %v3012 = vadd.f32 %v2825, %v3011
      %3013 = vmatmul.f32.gmra.mxu0 %v2914
      %v3014 = vpop.f32.mrf.mxu0
      %v3015 = vadd.f32 %v2828, %v3014
      %3016 = vmatmul.f32.gmra.mxu0 %v2916
      %v3017 = vpop.f32.mrf.mxu0
      %v3018 = vadd.f32 %v2831, %v3017
      %3019 = vmatmul.f32.gmra.mxu0 %v2918
      %v3020 = vpop.f32.mrf.mxu0
      %v3021 = vadd.f32 %v2834, %v3020
      %3022 = vmatmul.f32.gmra.mxu0 %v2920
      %v3023 = vpop.f32.mrf.mxu0
      %v3024 = vadd.f32 %v2837, %v3023
      %3025 = vmatmul.f32.gmra.mxu0 %v2922
      %v3026 = vpop.f32.mrf.mxu0
      %v3027 = vadd.f32 %v2840, %v3026
      %3028 = vmatmul.f32.gmra.mxu0 %v2924
      %v3029 = vpop.f32.mrf.mxu0
      %v3030 = vadd.f32 %v2843, %v3029
      %3031 = vmatmul.f32.gmra.mxu0 %v2926
      %v3032 = vpop.f32.mrf.mxu0
      %v3033 = vadd.f32 %v2846, %v3032
      %3034 = vmatmul.f32.gmra.mxu0 %v2928
      %v3035 = vpop.f32.mrf.mxu0
      %v3036 = vadd.f32 %v2849, %v3035
      %3037 = vmatmul.f32.gmra.mxu0 %v2930
      %v3038 = vpop.f32.mrf.mxu0
      %v3039 = vadd.f32 %v2852, %v3038
      %3040 = vmatmul.f32.gmra.mxu0 %v2932
      %v3041 = vpop.f32.mrf.mxu0
      %v3042 = vadd.f32 %v2855, %v3041
      %3043 = vmatmul.f32.gmra.mxu0 %v2934
      %v3044 = vpop.f32.mrf.mxu0
      %v3045 = vadd.f32 %v2858, %v3044
      %3046 = vmatmul.f32.gmra.mxu0 %v2936
      %v3047 = vpop.f32.mrf.mxu0
      %v3048 = vadd.f32 %v2861, %v3047
      %3049 = vdwg.mxu0
      %s3050 = scalar_lea.vmem %s7, 1024
      %v3051 = vld [vmem:[%s3050] sm:$0xff]
      %v3052 = vld [vmem:[%s3050 + $0x8] sm:$0xff]
      %v3053 = vld [vmem:[%s3050 + $0x10] sm:$0xff]
      %v3054 = vld [vmem:[%s3050 + $0x18] sm:$0xff]
      %v3055 = vld [vmem:[%s3050 + $0x20] sm:$0xff]
      %v3056 = vld [vmem:[%s3050 + $0x28] sm:$0xff]
      %v3057 = vld [vmem:[%s3050 + $0x30] sm:$0xff]
      %v3058 = vld [vmem:[%s3050 + $0x38] sm:$0xff]
      %v3059 = vld [vmem:[%s3050 + $0x40] sm:$0xff]
      %v3060 = vld [vmem:[%s3050 + $0x48] sm:$0xff]
      %v3061 = vld [vmem:[%s3050 + $0x50] sm:$0xff]
      %v3062 = vld [vmem:[%s3050 + $0x58] sm:$0xff]
      %v3063 = vld [vmem:[%s3050 + $0x60] sm:$0xff]
      %v3064 = vld [vmem:[%s3050 + $0x68] sm:$0xff]
      %v3065 = vld [vmem:[%s3050 + $0x70] sm:$0xff]
      %v3066 = vld [vmem:[%s3050 + $0x78] sm:$0xff]
      %v3068 = vrot.slane %v2715, 1
      %v3069 = vrot.slane %v2716, 1
      %v3070 = vsel %vm1891, %v3068, %v3069
      %v3071 = vrot.slane %v2717, 1
      %v3072 = vsel %vm1891, %v3069, %v3071
      %v3073 = vrot.slane %v2718, 1
      %v3074 = vsel %vm1891, %v3071, %v3073
      %v3075 = vrot.slane %v2719, 1
      %v3076 = vsel %vm1891, %v3073, %v3075
      %v3077 = vrot.slane %v2720, 1
      %v3078 = vsel %vm1891, %v3075, %v3077
      %v3079 = vrot.slane %v2721, 1
      %v3080 = vsel %vm1891, %v3077, %v3079
      %v3081 = vrot.slane %v2722, 1
      %v3082 = vsel %vm1891, %v3079, %v3081
      %v3083 = vrot.slane %v2723, 1
      %v3084 = vsel %vm1891, %v3081, %v3083
      %v3085 = vrot.slane %v2724, 1
      %v3086 = vsel %vm1891, %v3083, %v3085
      %v3087 = vrot.slane %v2725, 1
      %v3088 = vsel %vm1891, %v3085, %v3087
      %v3089 = vrot.slane %v2726, 1
      %v3090 = vsel %vm1891, %v3087, %v3089
      %v3091 = vrot.slane %v2727, 1
      %v3092 = vsel %vm1891, %v3089, %v3091
      %v3093 = vrot.slane %v2728, 1
      %v3094 = vsel %vm1891, %v3091, %v3093
      %v3095 = vrot.slane %v2729, 1
      %v3096 = vsel %vm1891, %v3093, %v3095
      %v3097 = vrot.slane %v2730, 1
      %v3098 = vsel %vm1891, %v3095, %v3097
      %v3099 = vrot.slane %v2731, 1
      %v3100 = vsel %vm1891, %v3097, %v3099
      %v3101 = vrot.slane %v2732, 1
      %v3102 = vsel %vm1891, %v3099, %v3101
      %v3103 = vrot.slane %v2733, 1
      %v3104 = vsel %vm1891, %v3101, %v3103
      %v3105 = vrot.slane %v2734, 1
      %v3106 = vsel %vm1891, %v3103, %v3105
      %v3107 = vrot.slane %v2735, 1
      %v3108 = vsel %vm1891, %v3105, %v3107
      %v3109 = vrot.slane %v2736, 1
      %v3110 = vsel %vm1891, %v3107, %v3109
      %v3111 = vrot.slane %v2737, 1
      %v3112 = vsel %vm1891, %v3109, %v3111
      %v3113 = vrot.slane %v2738, 1
      %v3114 = vsel %vm1891, %v3111, %v3113
      %v3115 = vrot.slane %v2739, 1
      %v3116 = vsel %vm1891, %v3113, %v3115
      %3141 = vmatpush.msra.mxu0 %v3066
      %3142 = vmatpush.msra.mxu0 %v3065
      %3143 = vmatpush.msra.mxu0 %v3064
      %3144 = vmatpush.msra.mxu0 %v3063
      %3145 = vmatpush.msra.mxu0 %v3062
      %3146 = vmatpush.msra.mxu0 %v3061
      %3147 = vmatpush.msra.mxu0 %v3060
      %3148 = vmatpush.msra.mxu0 %v3059
      %3149 = vmatpush.msra.mxu0 %v3058
      %3150 = vmatpush.msra.mxu0 %v3057
      %3151 = vmatpush.msra.mxu0 %v3056
      %3152 = vmatpush.msra.mxu0 %v3055
      %3153 = vmatpush.msra.mxu0 %v3054
      %3154 = vmatpush.msra.mxu0 %v3053
      %3155 = vmatpush.msra.mxu0 %v3052
      %3156 = vmatpush.msra.mxu0 %v3051
      %3157 = vmatmul.f32.gmra.mxu0 %v3070
      %v3158 = vpop.f32.mrf.mxu0
      %v3159 = vadd.f32 0.0, %v3158
      %3160 = vmatmul.f32.gmra.mxu0 %v3072
      %v3161 = vpop.f32.mrf.mxu0
      %v3162 = vadd.f32 0.0, %v3161
      %3163 = vmatmul.f32.gmra.mxu0 %v3074
      %v3164 = vpop.f32.mrf.mxu0
      %v3165 = vadd.f32 0.0, %v3164
      %3166 = vmatmul.f32.gmra.mxu0 %v3076
      %v3167 = vpop.f32.mrf.mxu0
      %v3168 = vadd.f32 0.0, %v3167
      %3169 = vmatmul.f32.gmra.mxu0 %v3078
      %v3170 = vpop.f32.mrf.mxu0
      %v3171 = vadd.f32 0.0, %v3170
      %3172 = vmatmul.f32.gmra.mxu0 %v3080
      %v3173 = vpop.f32.mrf.mxu0
      %v3174 = vadd.f32 0.0, %v3173
      %3175 = vmatmul.f32.gmra.mxu0 %v3082
      %v3176 = vpop.f32.mrf.mxu0
      %v3177 = vadd.f32 0.0, %v3176
      %3178 = vmatmul.f32.gmra.mxu0 %v3084
      %v3179 = vpop.f32.mrf.mxu0
      %v3180 = vadd.f32 0.0, %v3179
      %3181 = vmatmul.f32.gmra.mxu0 %v3086
      %v3182 = vpop.f32.mrf.mxu0
      %v3183 = vadd.f32 0.0, %v3182
      %3184 = vmatmul.f32.gmra.mxu0 %v3088
      %v3185 = vpop.f32.mrf.mxu0
      %v3186 = vadd.f32 0.0, %v3185
      %3187 = vmatmul.f32.gmra.mxu0 %v3090
      %v3188 = vpop.f32.mrf.mxu0
      %v3189 = vadd.f32 0.0, %v3188
      %3190 = vmatmul.f32.gmra.mxu0 %v3092
      %v3191 = vpop.f32.mrf.mxu0
      %v3192 = vadd.f32 0.0, %v3191
      %3193 = vmatmul.f32.gmra.mxu0 %v3094
      %v3194 = vpop.f32.mrf.mxu0
      %v3195 = vadd.f32 0.0, %v3194
      %3196 = vmatmul.f32.gmra.mxu0 %v3096
      %v3197 = vpop.f32.mrf.mxu0
      %v3198 = vadd.f32 0.0, %v3197
      %3199 = vmatmul.f32.gmra.mxu0 %v3098
      %v3200 = vpop.f32.mrf.mxu0
      %v3201 = vadd.f32 0.0, %v3200
      %3202 = vmatmul.f32.gmra.mxu0 %v3100
      %v3203 = vpop.f32.mrf.mxu0
      %v3204 = vadd.f32 0.0, %v3203
      %3205 = vmatmul.f32.gmra.mxu0 %v3102
      %v3206 = vpop.f32.mrf.mxu0
      %v3207 = vadd.f32 0.0, %v3206
      %3208 = vmatmul.f32.gmra.mxu0 %v3104
      %v3209 = vpop.f32.mrf.mxu0
      %v3210 = vadd.f32 0.0, %v3209
      %3211 = vmatmul.f32.gmra.mxu0 %v3106
      %v3212 = vpop.f32.mrf.mxu0
      %v3213 = vadd.f32 0.0, %v3212
      %3214 = vmatmul.f32.gmra.mxu0 %v3108
      %v3215 = vpop.f32.mrf.mxu0
      %v3216 = vadd.f32 0.0, %v3215
      %3217 = vmatmul.f32.gmra.mxu0 %v3110
      %v3218 = vpop.f32.mrf.mxu0
      %v3219 = vadd.f32 0.0, %v3218
      %3220 = vmatmul.f32.gmra.mxu0 %v3112
      %v3221 = vpop.f32.mrf.mxu0
      %v3222 = vadd.f32 0.0, %v3221
      %3223 = vmatmul.f32.gmra.mxu0 %v3114
      %v3224 = vpop.f32.mrf.mxu0
      %v3225 = vadd.f32 0.0, %v3224
      %3226 = vmatmul.f32.gmra.mxu0 %v3116
      %v3227 = vpop.f32.mrf.mxu0
      %v3228 = vadd.f32 0.0, %v3227
      %3229 = vdwg.mxu0
      %v3230 = vadd.f32 %v2979, %v3159
      %v3231 = vadd.f32 %v2982, %v3162
      %v3232 = vadd.f32 %v2985, %v3165
      %v3233 = vadd.f32 %v2988, %v3168
      %v3234 = vadd.f32 %v2991, %v3171
      %v3235 = vadd.f32 %v2994, %v3174
      %v3236 = vadd.f32 %v2997, %v3177
      %v3237 = vadd.f32 %v3000, %v3180
      %v3238 = vadd.f32 %v3003, %v3183
      %v3239 = vadd.f32 %v3006, %v3186
      %v3240 = vadd.f32 %v3009, %v3189
      %v3241 = vadd.f32 %v3012, %v3192
      %v3242 = vadd.f32 %v3015, %v3195
      %v3243 = vadd.f32 %v3018, %v3198
      %v3244 = vadd.f32 %v3021, %v3201
      %v3245 = vadd.f32 %v3024, %v3204
      %v3246 = vadd.f32 %v3027, %v3207
      %v3247 = vadd.f32 %v3030, %v3210
      %v3248 = vadd.f32 %v3033, %v3213
      %v3249 = vadd.f32 %v3036, %v3216
      %v3250 = vadd.f32 %v3039, %v3219
      %v3251 = vadd.f32 %v3042, %v3222
      %v3252 = vadd.f32 %v3045, %v3225
      %v3253 = vadd.f32 %v3048, %v3228
      %v3254 = vld [vmem:[#allocation3] sm:$0xff]
      %v3255 = vld [vmem:[#allocation3 + $0x8] sm:$0xff]
      %v3256 = vld [vmem:[#allocation3 + $0x10] sm:$0xff]
      %v3257 = vld [vmem:[#allocation3 + $0x18] sm:$0xff]
      %v3258 = vld [vmem:[#allocation3 + $0x20] sm:$0xff]
      %v3259 = vld [vmem:[#allocation3 + $0x28] sm:$0xff]
      %v3260 = vld [vmem:[#allocation3 + $0x30] sm:$0xff]
      %v3261 = vld [vmem:[#allocation3 + $0x38] sm:$0xff]
      %v3262 = vld [vmem:[#allocation3 + $0x40] sm:$0xff]
      %v3263 = vld [vmem:[#allocation3 + $0x48] sm:$0xff]
      %v3264 = vld [vmem:[#allocation3 + $0x50] sm:$0xff]
      %v3265 = vld [vmem:[#allocation3 + $0x58] sm:$0xff]
      %v3266 = vld [vmem:[#allocation3 + $0x60] sm:$0xff]
      %v3267 = vld [vmem:[#allocation3 + $0x68] sm:$0xff]
      %v3268 = vld [vmem:[#allocation3 + $0x70] sm:$0xff]
      %v3269 = vld [vmem:[#allocation3 + $0x78] sm:$0xff]
      %v3270 = vld [vmem:[#allocation3 + $0x80] sm:$0xff]
      %v3271 = vld [vmem:[#allocation3 + $0x88] sm:$0xff]
      %v3272 = vld [vmem:[#allocation3 + $0x90] sm:$0xff]
      %v3273 = vld [vmem:[#allocation3 + $0x98] sm:$0xff]
      %v3274 = vld [vmem:[#allocation3 + $0xa0] sm:$0xff]
      %v3275 = vld [vmem:[#allocation3 + $0xa8] sm:$0xff]
      %v3276 = vld [vmem:[#allocation3 + $0xb0] sm:$0xff]
      %v3277 = vld [vmem:[#allocation3 + $0xb8] sm:$0xff]
      %v3278 = vadd.f32 %v3254, %v3230
      %v3279 = vadd.f32 %v3255, %v3231
      %v3280 = vadd.f32 %v3256, %v3232
      %v3281 = vadd.f32 %v3257, %v3233
      %v3282 = vadd.f32 %v3258, %v3234
      %v3283 = vadd.f32 %v3259, %v3235
      %v3284 = vadd.f32 %v3260, %v3236
      %v3285 = vadd.f32 %v3261, %v3237
      %v3286 = vadd.f32 %v3262, %v3238
      %v3287 = vadd.f32 %v3263, %v3239
      %v3288 = vadd.f32 %v3264, %v3240
      %v3289 = vadd.f32 %v3265, %v3241
      %v3290 = vadd.f32 %v3266, %v3242
      %v3291 = vadd.f32 %v3267, %v3243
      %v3292 = vadd.f32 %v3268, %v3244
      %v3293 = vadd.f32 %v3269, %v3245
      %v3294 = vadd.f32 %v3270, %v3246
      %v3295 = vadd.f32 %v3271, %v3247
      %v3296 = vadd.f32 %v3272, %v3248
      %v3297 = vadd.f32 %v3273, %v3249
      %v3298 = vadd.f32 %v3274, %v3250
      %v3299 = vadd.f32 %v3275, %v3251
      %v3300 = vadd.f32 %v3276, %v3252
      %v3301 = vadd.f32 %v3277, %v3253
      %v3302 = vld [vmem:[%s8] sm:$0x1]
      %v3304 = vperm.slane %v3302, 0
      %v3306 = vadd.f32 %v3278, %v3304
      %v3307 = vadd.f32 %v3279, %v3304
      %v3308 = vadd.f32 %v3280, %v3304
      %v3309 = vadd.f32 %v3281, %v3304
      %v3310 = vadd.f32 %v3282, %v3304
      %v3311 = vadd.f32 %v3283, %v3304
      %v3312 = vadd.f32 %v3284, %v3304
      %v3313 = vadd.f32 %v3285, %v3304
      %v3314 = vadd.f32 %v3286, %v3304
      %v3315 = vadd.f32 %v3287, %v3304
      %v3316 = vadd.f32 %v3288, %v3304
      %v3317 = vadd.f32 %v3289, %v3304
      %v3318 = vadd.f32 %v3290, %v3304
      %v3319 = vadd.f32 %v3291, %v3304
      %v3320 = vadd.f32 %v3292, %v3304
      %v3321 = vadd.f32 %v3293, %v3304
      %v3322 = vadd.f32 %v3294, %v3304
      %v3323 = vadd.f32 %v3295, %v3304
      %v3324 = vadd.f32 %v3296, %v3304
      %v3325 = vadd.f32 %v3297, %v3304
      %v3326 = vadd.f32 %v3298, %v3304
      %v3327 = vadd.f32 %v3299, %v3304
      %v3328 = vadd.f32 %v3300, %v3304
      %v3329 = vadd.f32 %v3301, %v3304
      %3330 = vst [vmem:[%s662] sm:$0xff] %v3306
      %3331 = vst [vmem:[%s662 + $0x8] sm:$0xff] %v3307
      %3332 = vst [vmem:[%s662 + $0x10] sm:$0xff] %v3308
      %3333 = vst [vmem:[%s662 + $0x18] sm:$0xff] %v3309
      %3334 = vst [vmem:[%s662 + $0x20] sm:$0xff] %v3310
      %3335 = vst [vmem:[%s662 + $0x28] sm:$0xff] %v3311
      %3336 = vst [vmem:[%s662 + $0x30] sm:$0xff] %v3312
      %3337 = vst [vmem:[%s662 + $0x38] sm:$0xff] %v3313
      %3338 = vst [vmem:[%s662 + $0x40] sm:$0xff] %v3314
      %3339 = vst [vmem:[%s662 + $0x48] sm:$0xff] %v3315
      %3340 = vst [vmem:[%s662 + $0x50] sm:$0xff] %v3316
      %3341 = vst [vmem:[%s662 + $0x58] sm:$0xff] %v3317
      %3342 = vst [vmem:[%s662 + $0x60] sm:$0xff] %v3318
      %3343 = vst [vmem:[%s662 + $0x68] sm:$0xff] %v3319
      %3344 = vst [vmem:[%s662 + $0x70] sm:$0xff] %v3320
      %3345 = vst [vmem:[%s662 + $0x78] sm:$0xff] %v3321
      %3346 = vst [vmem:[%s662 + $0x80] sm:$0xff] %v3322
      %3347 = vst [vmem:[%s662 + $0x88] sm:$0xff] %v3323
      %3348 = vst [vmem:[%s662 + $0x90] sm:$0xff] %v3324
      %3349 = vst [vmem:[%s662 + $0x98] sm:$0xff] %v3325
      %3350 = vst [vmem:[%s662 + $0xa0] sm:$0xff] %v3326
      %3351 = vst [vmem:[%s662 + $0xa8] sm:$0xff] %v3327
      %3352 = vst [vmem:[%s662 + $0xb0] sm:$0xff] %v3328
      %3353 = vst [vmem:[%s662 + $0xb8] sm:$0xff] %v3329
      %s3354 = smul.u32 24, %s25
      %p3355 = scmp.lt.s32.totalorder %s24, 1
      %s3356 = scalar_select %p3355, %s24, 1
      %p3357 = scmp.lt.s32.totalorder %s3354, 47
      %s3358 = scalar_select %p3357, %s3354, 47
      %s3359 = smul.addr %s3356, 48
      %s3360 = sadd.s32 %s3358, %s3359
      %s3361 = smul.addr %s3360, 8
      %s3362 = scalar_lea.vmem %s9, %s3361
      // Predicated region
      $region57: #{top_down_block.1} parent=55 // pred_check
        %p3363 = pneg %p315
      $region58: #{top_down_block.1} parent=55 // pred_check_branch
        %3365 = sbr.rel (%p3363) target = $region60
      $region59: #{top_down_block.1} parent=55 // pred_region
        %s3366 = smul.u32 24, %s25
      $region60: #{top_down_block.1} parent=55 // pred_fallthru
        _
    $region56: #{top_down_block.1} parent=5 // pred_fallthru
      _
    %p3367 = scmp.le.s32.totalorder 2, %s15
    // Predicated region
    $region61: #{top_down_block.1} parent=5 // pred_check
      %p3368 = pneg %p3367
    $region62: #{top_down_block.1} parent=5 // pred_check_branch
      %3370 = sbr.rel (%p3368) target = $region64
    $region63: #{top_down_block.1} parent=5 // pred_region
      %s3371 = ssub.s32 %s15, 2
      // Predicated region
      $region65: #{top_down_block.1} parent=63 // pred_check
        %p3372 = pneg %p321
      $region66: #{top_down_block.1} parent=63 // pred_check_branch
        %3374 = sbr.rel (%p3372) target = $region68
      $region67: #{top_down_block.1} parent=63 // pred_region
        %s3375 = smul.u32 24, %s27
        %p3376 = scmp.lt.s32.totalorder %s26, 1
        %s3377 = scalar_select %p3376, %s26, 1
        %p3378 = scmp.lt.s32.totalorder %s3375, 47
        %s3379 = scalar_select %p3378, %s3375, 47
        %s3380 = smul.addr %s3377, 48
        %s3381 = sadd.s32 %s3379, %s3380
        %s3382 = smul.addr %s3381, 8
        %s3383 = scalar_lea.vmem %s9, %s3382
      $region68: #{top_down_block.1} parent=63 // pred_fallthru
        _
    $region64: #{top_down_block.1} parent=5 // pred_fallthru
      _
  $region6: #{top_down_block.1} parent=0 // loop_footer
    %s19 = sadd.s32 1, %s15
  $region7: #{top_down_block.1} parent=0 // loop_footer_branch
    %14 = sbr.rel target = $region3
  $region8: #{top_down_block.1} parent=0 // loop_exit
    _

</llo_original>
